<compile_context>
chip_gen: v6e
topology: v6e:2x2x1
jax: 0.10.0
libtpu: 0.0.40
codegen_flags: <defaults>
</compile_context>

<pallas_src>
import math

import numpy as np

import jax
import jax.numpy as jnp
from jax.experimental import pallas as pl
from jax.experimental.pallas import tpu as pltpu


def _make_channel_tables(num_pos_feats, sine_type="lin_sine", factor=1.0):
    """Per-output-channel constants.

    For channel c the output is sin(coeff_x[c]*x + coeff_y[c]*y + offset[c]),
    where exactly one of coeff_x / coeff_y is nonzero and offset is 0 for the
    'sin' half and pi/2 for the 'cos' half (cos(t) == sin(t + pi/2)).
    Channel ordering matches the PyTorch module:
      cat([sin(b*f*pi*[x, y]) for b in bases] + [cos(b*f*pi*[x, y]) for b]).
    """
    depth = num_pos_feats // 2
    if sine_type == "lin_sine":
        bases = [i + 1 for i in range(depth)]
    elif sine_type == "exp_sine":
        bases = [2 ** i for i in range(depth)]
    else:
        raise ValueError(sine_type)
    C = 4 * depth  # == 2 * num_pos_feats
    coeff_x = np.zeros((1, 1, C), np.float32)
    coeff_y = np.zeros((1, 1, C), np.float32)
    offset = np.zeros((1, 1, C), np.float32)
    for half_off, phase_off in ((0, 0.0), (2 * depth, math.pi / 2)):
        for bi, b in enumerate(bases):
            w = b * factor * math.pi
            for xi in (0, 1):  # 0 -> x channel, 1 -> y channel (pos = [x, y])
                c = half_off + 2 * bi + xi
                if xi == 0:
                    coeff_x[0, 0, c] = w
                else:
                    coeff_y[0, 0, c] = w
                offset[0, 0, c] = phase_off
    return coeff_x, coeff_y, offset


def _choose_block_h(H, W, C, target_block_bytes=4 << 20):
    """Largest H-tile TH such that TH divides H, TH is a multiple of 8 (or
    equals H), and one (1, TH, W, C) f32 output block stays under ~target
    bytes (so two pipeline buffers fit comfortably in scoped VMEM on every
    TPU generation, including v7x's 64 MiB)."""
    row_bytes = W * C * 4
    if H * row_bytes <= target_block_bytes:
        return H
    best = None
    for th in range(8, H, 8):
        if H % th == 0 and th * row_bytes <= target_block_bytes:
            best = th
    return best if best is not None else H


def _pos_embed_kernel(mask_full_ref, mask_rows_ref, rowl_ref, colu_ref,
                      cx_ref, cy_ref, off_ref, out_ref):
    # mask_full_ref: (1, H, W)  int8, full image for this batch element
    # mask_rows_ref: (1, TH, W) int8, rows of the current H tile
    # rowl_ref     : (TH, H) f32, rows [i*TH, (i+1)*TH) of the lower-tri ones
    # colu_ref     : (W, W)  f32, upper-tri ones (constant across the grid)
    # cx/cy/off_ref: (1, 1, C) f32 per-channel tables (constant)
    # out_ref      : (1, TH, W, C) f32 output tile (NHWC)
    eps = 1e-6
    nm_full = 1.0 - mask_full_ref[0].astype(jnp.float32)   # (H, W) not_mask
    nm_rows = 1.0 - mask_rows_ref[0].astype(jnp.float32)   # (TH, W)

    # Cumulative sums on the MXU via triangular ones matmuls.
    y_tile = jnp.dot(rowl_ref[...], nm_full,
                     preferred_element_type=jnp.float32)    # cumsum over H, (TH, W)
    x_tile = jnp.dot(nm_rows, colu_ref[...],
                     preferred_element_type=jnp.float32)    # cumsum over W, (TH, W)

    # Normalization: reciprocal of the tiny denominators, then multiply
    # (avoids a full (TH, W) divide).
    y_tot = jnp.sum(nm_full, axis=0, keepdims=True)          # (1, W)  == y_embed[-1, :]
    W = x_tile.shape[1]
    x_tot = x_tile[:, W - 1:W]                               # (TH, 1) == x_embed[:, -1]
    inv_y = 1.0 / (y_tot + eps)
    inv_x = 1.0 / (x_tot + eps)
    y_n = (y_tile - 0.5) * inv_y
    x_n = (x_tile - 0.5) * inv_x

    # Single fused sin pass over (TH, W, C); cos channels use the pi/2 offset.
    phase = (x_n[:, :, None] * cx_ref[...]
             + y_n[:, :, None] * cy_ref[...]
             + off_ref[...])
    out_ref[0] = jnp.sin(phase)


def position_embedding_sine(mask, *, num_pos_feats=64, temperature=10000,
                            normalize=False, scale=None, sine_type="lin_sine",
                            avoid_aliasing=False, max_spatial_resolution=None,
                            block_h=None, channels_last=False):
    """mask: (B, H, W) bool (True = padded pixel).

    Returns (B, 2*num_pos_feats, H, W) float32 (NCHW) to match the PyTorch
    module, or (B, H, W, 2*num_pos_feats) if channels_last=True.
    temperature / normalize / scale are accepted but unused, exactly like the
    PyTorch forward as written.
    """
    depth = num_pos_feats // 2
    if avoid_aliasing and max_spatial_resolution is None:
        raise ValueError(
            "Please specify the maximal spatial resolution of the feature map")
    factor = (max_spatial_resolution / depth) if avoid_aliasing else 1.0

    coeff_x, coeff_y, offset = _make_channel_tables(num_pos_feats, sine_type,
                                                    factor)
    C = coeff_x.shape[-1]
    B, H, W = mask.shape

    TH = block_h if block_h is not None else _choose_block_h(H, W, C)
    assert H % TH == 0 and (TH % 8 == 0 or TH == H)
    grid_h = H // TH

    mask_i8 = mask.astype(jnp.int8)
    row_l = jnp.asarray(np.tril(np.ones((H, H), np.float32)))
    col_u = jnp.asarray(np.triu(np.ones((W, W), np.float32)))

    out_nhwc = pl.pallas_call(
        _pos_embed_kernel,
        out_shape=jax.ShapeDtypeStruct((B, H, W, C), jnp.float32),
        grid_spec=pltpu.PrefetchScalarGridSpec(
            num_scalar_prefetch=0,
            grid=(B, grid_h),
            in_specs=[
                pl.BlockSpec((1, H, W), lambda b, i: (b, 0, 0)),    # full mask
                pl.BlockSpec((1, TH, W), lambda b, i: (b, i, 0)),   # tile rows
                pl.BlockSpec((TH, H), lambda b, i: (i, 0)),         # lower-tri rows
                pl.BlockSpec((W, W), lambda b, i: (0, 0)),          # upper-tri
                pl.BlockSpec((1, 1, C), lambda b, i: (0, 0, 0)),    # coeff_x
                pl.BlockSpec((1, 1, C), lambda b, i: (0, 0, 0)),    # coeff_y
                pl.BlockSpec((1, 1, C), lambda b, i: (0, 0, 0)),    # offset
            ],
            out_specs=pl.BlockSpec((1, TH, W, C), lambda b, i: (b, i, 0, 0)),
        ),
        compiler_params=pltpu.CompilerParams(
            dimension_semantics=("parallel", "parallel")),
    )(mask_i8, mask_i8, row_l, col_u,
      jnp.asarray(coeff_x), jnp.asarray(coeff_y), jnp.asarray(offset))

    if channels_last:
        return out_nhwc
    # Match PyTorch: .permute(0, 3, 1, 2) -> NCHW.
    return jnp.transpose(out_nhwc, (0, 3, 1, 2))


def _reference(mask, *, num_pos_feats=64, sine_type="lin_sine", factor=1.0):
    """Pure-JAX re-implementation of the PyTorch forward for validation."""
    not_mask = (~mask).astype(jnp.float32)
    y = jnp.cumsum(not_mask, axis=1)
    x = jnp.cumsum(not_mask, axis=2)
    eps = 1e-6
    y = (y - 0.5) / (y[:, -1:, :] + eps)
    x = (x - 0.5) / (x[:, :, -1:] + eps)
    pos = jnp.stack([x, y], axis=-1)
    depth = num_pos_feats // 2
    bases = ([i + 1 for i in range(depth)] if sine_type == "lin_sine"
             else [2 ** i for i in range(depth)])
    out = jnp.concatenate(
        [jnp.sin(b * factor * math.pi * pos) for b in bases]
        + [jnp.cos(b * factor * math.pi * pos) for b in bases], axis=-1)
    return jnp.transpose(out, (0, 3, 1, 2))


if __name__ == "__main__":
    key = jax.random.PRNGKey(0)
    B, H, W = 2, 16, 16
    num_pos_feats = 64   # module default -> 128 output channels

    # mask: True = padded pixel (ignored), False = valid pixel
    mask = jax.random.bernoulli(key, p=0.2, shape=(B, H, W))

    out = position_embedding_sine(mask, num_pos_feats=num_pos_feats)
    out = jax.block_until_ready(out)

    ref = _reference(mask, num_pos_feats=num_pos_feats)
    assert out.shape == (B, 2 * num_pos_feats, H, W), out.shape
    assert out.dtype == jnp.float32
    assert not bool(jnp.isnan(out).any())
    # Tolerance covers the cos(t)=sin(t+pi/2) substitution and the
    # reciprocal-then-multiply normalization (ulp-level phase differences
    # scaled by coefficients up to depth*pi).
    np.testing.assert_allclose(np.asarray(out), np.asarray(ref),
                               rtol=1e-5, atol=5e-5)
    print("KERNEL_OK")
</pallas_src>

<mosaic_0001>
module attributes {stable_mosaic.version = 11 : i64} {
  func.func @_pos_embed_kernel(%arg0: i32, %arg1: i32, %arg2: memref<1x16x16xi8, #tpu.memory_space<vmem>>, %arg3: memref<1x16x16xi8, #tpu.memory_space<vmem>>, %arg4: memref<16x16xf32, #tpu.memory_space<vmem>>, %arg5: memref<16x16xf32, #tpu.memory_space<vmem>>, %arg6: memref<1x1x128xf32, #tpu.memory_space<vmem>>, %arg7: memref<1x1x128xf32, #tpu.memory_space<vmem>>, %arg8: memref<1x1x128xf32, #tpu.memory_space<vmem>>, %arg9: memref<1x16x16x128xf32, #tpu.memory_space<vmem>>) attributes {dimension_semantics = [#tpu.dimension_semantics<parallel>, #tpu.dimension_semantics<parallel>], iteration_bounds = array<i64: 2, 1>, scalar_prefetch = 0 : i64, scratch_operands = 0 : i64, tpu.core_type = #tpu.core_type<tc>, window_params = [{transform_indices = @transform_0, window_bounds = array<i64: 1, 16, 16>}, {transform_indices = @transform_1, window_bounds = array<i64: 1, 16, 16>}, {transform_indices = @transform_2, window_bounds = array<i64: 16, 16>}, {pipeline_mode = #tpu.pipeline_mode<synchronous>, transform_indices = @transform_3, window_bounds = array<i64: 16, 16>}, {pipeline_mode = #tpu.pipeline_mode<synchronous>, transform_indices = @transform_4, window_bounds = array<i64: 1, 1, 128>}, {pipeline_mode = #tpu.pipeline_mode<synchronous>, transform_indices = @transform_5, window_bounds = array<i64: 1, 1, 128>}, {pipeline_mode = #tpu.pipeline_mode<synchronous>, transform_indices = @transform_6, window_bounds = array<i64: 1, 1, 128>}, {transform_indices = @transform_7, window_bounds = array<i64: 1, 16, 16, 128>}]} {
    %c0 = arith.constant 0 : index
    %c0_0 = arith.constant 0 : index
    %c0_1 = arith.constant 0 : index
    %0 = vector.load %arg2[%c0, %c0_0, %c0_1] : memref<1x16x16xi8, #tpu.memory_space<vmem>>, vector<1x16x16xi8>
    %1 = vector.shape_cast %0 : vector<1x16x16xi8> to vector<16x16xi8>
    %2 = arith.sitofp %1 : vector<16x16xi8> to vector<16x16xf32>
    %cst = arith.constant 1.000000e+00 : f32
    %3 = vector.broadcast %cst : f32 to vector<16x16xf32>
    %4 = arith.subf %3, %2 : vector<16x16xf32>
    %c0_2 = arith.constant 0 : index
    %c0_3 = arith.constant 0 : index
    %c0_4 = arith.constant 0 : index
    %5 = vector.load %arg3[%c0_2, %c0_3, %c0_4] : memref<1x16x16xi8, #tpu.memory_space<vmem>>, vector<1x16x16xi8>
    %6 = vector.shape_cast %5 : vector<1x16x16xi8> to vector<16x16xi8>
    %7 = arith.sitofp %6 : vector<16x16xi8> to vector<16x16xf32>
    %cst_5 = arith.constant 1.000000e+00 : f32
    %8 = vector.broadcast %cst_5 : f32 to vector<16x16xf32>
    %9 = arith.subf %8, %7 : vector<16x16xf32>
    %c0_6 = arith.constant 0 : index
    %c0_7 = arith.constant 0 : index
    %10 = vector.load %arg4[%c0_6, %c0_7] : memref<16x16xf32, #tpu.memory_space<vmem>>, vector<16x16xf32>
    %cst_8 = arith.constant dense<0.000000e+00> : vector<16x16xf32>
    %11 = tpu.matmul %10, %4, %cst_8 {dimension_numbers = #tpu.dot_dimension_numbers<[1], [0], [0], [1], [0, 0, 1, 1], [], []>} : vector<16x16xf32>, vector<16x16xf32>, vector<16x16xf32> -> vector<16x16xf32>
    %c0_9 = arith.constant 0 : index
    %c0_10 = arith.constant 0 : index
    %12 = vector.load %arg5[%c0_9, %c0_10] : memref<16x16xf32, #tpu.memory_space<vmem>>, vector<16x16xf32>
    %cst_11 = arith.constant dense<0.000000e+00> : vector<16x16xf32>
    %13 = tpu.matmul %9, %12, %cst_11 {dimension_numbers = #tpu.dot_dimension_numbers<[1], [0], [0], [1], [0, 0, 1, 1], [], []>} : vector<16x16xf32>, vector<16x16xf32>, vector<16x16xf32> -> vector<16x16xf32>
    %cst_12 = arith.constant dense<0.000000e+00> : vector<16xf32>
    %14 = vector.multi_reduction <add>, %4, %cst_12 [0] : vector<16x16xf32> to vector<16xf32>
    %15 = vector.shape_cast %14 : vector<16xf32> to vector<1x16xf32>
    %16 = vector.extract_strided_slice %13 {offsets = [0, 15], sizes = [16, 1], strides = [1, 1]} : vector<16x16xf32> to vector<16x1xf32>
    %cst_13 = arith.constant 9.99999997E-7 : f32
    %17 = vector.broadcast %cst_13 : f32 to vector<1x16xf32>
    %18 = arith.addf %15, %17 : vector<1x16xf32>
    %cst_14 = arith.constant 1.000000e+00 : f32
    %19 = vector.broadcast %cst_14 : f32 to vector<1x16xf32>
    %20 = arith.divf %19, %18 : vector<1x16xf32>
    %cst_15 = arith.constant 9.99999997E-7 : f32
    %21 = vector.broadcast %cst_15 : f32 to vector<16x1xf32>
    %22 = arith.addf %16, %21 : vector<16x1xf32>
    %cst_16 = arith.constant 1.000000e+00 : f32
    %23 = vector.broadcast %cst_16 : f32 to vector<16x1xf32>
    %24 = arith.divf %23, %22 : vector<16x1xf32>
    %cst_17 = arith.constant 5.000000e-01 : f32
    %25 = vector.broadcast %cst_17 : f32 to vector<16x16xf32>
    %26 = arith.subf %11, %25 : vector<16x16xf32>
    %27 = vector.broadcast %20 : vector<1x16xf32> to vector<16x16xf32>
    %28 = arith.mulf %26, %27 : vector<16x16xf32>
    %cst_18 = arith.constant 5.000000e-01 : f32
    %29 = vector.broadcast %cst_18 : f32 to vector<16x16xf32>
    %30 = arith.subf %13, %29 : vector<16x16xf32>
    %31 = vector.broadcast %24 : vector<16x1xf32> to vector<16x16xf32>
    %32 = arith.mulf %30, %31 : vector<16x16xf32>
    %33 = vector.shape_cast %32 : vector<16x16xf32> to vector<16x16x1xf32>
    %c0_19 = arith.constant 0 : index
    %c0_20 = arith.constant 0 : index
    %c0_21 = arith.constant 0 : index
    %34 = vector.load %arg6[%c0_19, %c0_20, %c0_21] : memref<1x1x128xf32, #tpu.memory_space<vmem>>, vector<1x1x128xf32>
    %35 = vector.broadcast %33 : vector<16x16x1xf32> to vector<16x16x128xf32>
    %36 = vector.broadcast %34 : vector<1x1x128xf32> to vector<16x16x128xf32>
    %37 = arith.mulf %35, %36 : vector<16x16x128xf32>
    %38 = vector.shape_cast %28 : vector<16x16xf32> to vector<16x16x1xf32>
    %c0_22 = arith.constant 0 : index
    %c0_23 = arith.constant 0 : index
    %c0_24 = arith.constant 0 : index
    %39 = vector.load %arg7[%c0_22, %c0_23, %c0_24] : memref<1x1x128xf32, #tpu.memory_space<vmem>>, vector<1x1x128xf32>
    %40 = vector.broadcast %38 : vector<16x16x1xf32> to vector<16x16x128xf32>
    %41 = vector.broadcast %39 : vector<1x1x128xf32> to vector<16x16x128xf32>
    %42 = arith.mulf %40, %41 : vector<16x16x128xf32>
    %43 = arith.addf %37, %42 : vector<16x16x128xf32>
    %c0_25 = arith.constant 0 : index
    %c0_26 = arith.constant 0 : index
    %c0_27 = arith.constant 0 : index
    %44 = vector.load %arg8[%c0_25, %c0_26, %c0_27] : memref<1x1x128xf32, #tpu.memory_space<vmem>>, vector<1x1x128xf32>
    %45 = vector.broadcast %44 : vector<1x1x128xf32> to vector<16x16x128xf32>
    %46 = arith.addf %43, %45 : vector<16x16x128xf32>
    %47 = math.sin %46 : vector<16x16x128xf32>
    %c0_28 = arith.constant 0 : index
    %c0_29 = arith.constant 0 : index
    %c0_30 = arith.constant 0 : index
    %c0_31 = arith.constant 0 : index
    %48 = vector.load %arg9[%c0_28, %c0_29, %c0_30, %c0_31] : memref<1x16x16x128xf32, #tpu.memory_space<vmem>>, vector<1x16x16x128xf32>
    %49 = vector.shape_cast %48 : vector<1x16x16x128xf32> to vector<16x16x128xf32>
    %50 = vector.shape_cast %47 : vector<16x16x128xf32> to vector<1x16x16x128xf32>
    tpu.vector_store %arg9[%c0_28, %c0_29, %c0_30, %c0_31], %50 {strides = array<i32>} : memref<1x16x16x128xf32, #tpu.memory_space<vmem>>, vector<1x16x16x128xf32>,
    return
  }
  func.func @transform_0(%arg0: i32, %arg1: i32) -> (i32, i32, i32) {
    %c0_i32 = arith.constant 0 : i32
    %c0_i32_0 = arith.constant 0 : i32
    %c0_i32_1 = arith.constant 0 : i32
    return %arg0, %c0_i32, %c0_i32_0 : i32, i32, i32
  }
  func.func @transform_1(%arg0: i32, %arg1: i32) -> (i32, i32, i32) {
    %c0_i32 = arith.constant 0 : i32
    %c0_i32_0 = arith.constant 0 : i32
    return %arg0, %arg1, %c0_i32 : i32, i32, i32
  }
  func.func @transform_2(%arg0: i32, %arg1: i32) -> (i32, i32) {
    %c0_i32 = arith.constant 0 : i32
    %c0_i32_0 = arith.constant 0 : i32
    return %arg1, %c0_i32 : i32, i32
  }
  func.func @transform_3(%arg0: i32, %arg1: i32) -> (i32, i32) {
    %c0_i32 = arith.constant 0 : i32
    %c0_i32_0 = arith.constant 0 : i32
    %c0_i32_1 = arith.constant 0 : i32
    return %c0_i32, %c0_i32_0 : i32, i32
  }
  func.func @transform_4(%arg0: i32, %arg1: i32) -> (i32, i32, i32) {
    %c0_i32 = arith.constant 0 : i32
    %c0_i32_0 = arith.constant 0 : i32
    %c0_i32_1 = arith.constant 0 : i32
    %c0_i32_2 = arith.constant 0 : i32
    return %c0_i32, %c0_i32_0, %c0_i32_1 : i32, i32, i32
  }
  func.func @transform_5(%arg0: i32, %arg1: i32) -> (i32, i32, i32) {
    %c0_i32 = arith.constant 0 : i32
    %c0_i32_0 = arith.constant 0 : i32
    %c0_i32_1 = arith.constant 0 : i32
    %c0_i32_2 = arith.constant 0 : i32
    return %c0_i32, %c0_i32_0, %c0_i32_1 : i32, i32, i32
  }
  func.func @transform_6(%arg0: i32, %arg1: i32) -> (i32, i32, i32) {
    %c0_i32 = arith.constant 0 : i32
    %c0_i32_0 = arith.constant 0 : i32
    %c0_i32_1 = arith.constant 0 : i32
    %c0_i32_2 = arith.constant 0 : i32
    return %c0_i32, %c0_i32_0, %c0_i32_1 : i32, i32, i32
  }
  func.func @transform_7(%arg0: i32, %arg1: i32) -> (i32, i32, i32, i32) {
    %c0_i32 = arith.constant 0 : i32
    %c0_i32_0 = arith.constant 0 : i32
    %c0_i32_1 = arith.constant 0 : i32
    return %arg0, %arg1, %c0_i32, %c0_i32_0 : i32, i32, i32, i32
  }
}

</mosaic_0001>

<llo_original>
// kernel: tpu_custom_call.1
$region0: #{tpu_custom_call.1}
  #allocation0 [shape = 'u32[]', space=smem, size = 0x4, offset = 0x4, fixed_abs, tag = 'smem constant byte address 0x4 - core index']
  #allocation1 [shape = 'u32[144,128]{1,0:T(1,128)}', space=vmem, size = 0x12000, scoped, tag = 'internal scratch']
  %s0 = inlined_call_operand.hbm [shape: s8[2,16,16], index: 0, kind: input, shape index: {}]
  %s1 = inlined_call_operand.hbm [shape: s8[2,16,16], index: 1, kind: input, shape index: {}]
  %s2 = inlined_call_operand.hbm [shape: f32[16,16], index: 2, kind: input, shape index: {}]
  %s3 = inlined_call_operand.hbm [shape: f32[16,16], index: 3, kind: input, shape index: {}]
  %s4 = inlined_call_operand.vmem [shape: f32[1,1,128], index: 4, kind: input, shape index: {}]
  %s5 = inlined_call_operand.vmem [shape: f32[1,1,128], index: 5, kind: input, shape index: {}]
  %s6 = inlined_call_operand.vmem [shape: f32[1,1,128], index: 6, kind: input, shape index: {}]
  %s7 = inlined_call_operand.hbm [shape: f32[2,16,16,128], index: 7, kind: output, shape index: {}]
  %s8 = sld [smem:[#allocation0]]
  $region77: #{tpu_custom_call.1} parent=0
    _
  %s10 = ssub.s32 1, %s8
  %s11 = scalar_select 0, %s10, %s8
  $region1: #{tpu_custom_call.1} parent=0
    #allocation2 [shape = 'u8[4096]{0}', space=vmem, size = 0x1000, scoped, tag = 'input window, operand 0']
    #allocation3 [shape = 's32[2]{0}', space=sflag, size = 0x8, scoped, tag = 'scoped memory for tpu_custom_call.1']
    #allocation4 [shape = 's32[2]{0}', space=sflag, size = 0x8, scoped, tag = 'scoped memory for tpu_custom_call.1']
    #allocation5 [shape = 'u8[4096]{0}', space=vmem, size = 0x1000, scoped, tag = 'input window, operand 1']
    #allocation6 [shape = 's32[2]{0}', space=sflag, size = 0x8, scoped, tag = 'scoped memory for tpu_custom_call.1']
    #allocation7 [shape = 'u8[8192]{0}', space=vmem, size = 0x2000, scoped, tag = 'input window, operand 2, single buffered']
    #allocation8 [shape = 'u8[8192]{0}', space=vmem, size = 0x2000, scoped, tag = 'input window, operand 3, single buffered']
    #allocation9 [shape = 's32[1]{0}', space=sflag, size = 0x4, scoped, tag = 'scoped memory for tpu_custom_call.1']
    #allocation10 [shape = 'u8[262144]{0}', space=vmem, size = 0x40000, scoped, tag = 'output window, operand 0']
    %12 = vsyncpa [#allocation3], 0
    %s13 = scalar_lea.sflag [#allocation3], 1
    %14 = vsyncpa %s13, 0
    %15 = vsyncpa [#allocation6], 0
    %s16 = scalar_lea.sflag [#allocation6], 1
    %17 = vsyncpa %s16, 0
    %18 = vsyncpa [#allocation9], 0
    %19 = vsyncpa [#allocation4], 0
    %s20 = scalar_lea.sflag [#allocation4], 1
    %21 = vsyncpa %s20, 0
    loop: start=0, step=1, limit=4
    $region2: #{tpu_custom_call.1} parent=1 // loop_pre_header
      _
    $region3: #{tpu_custom_call.1} parent=1 // loop_header
      %s23 = sphi 0, %s27
      %p24 = scmp.ge.s32.totalorder %s23, 4
      %s30 = sphi 0, %s42
      %s31 = sphi 0, %s38
      %s32 = sphi 0, %s30
      %s33 = sphi 0, %s31
      %s34 = sphi 0, %s32
      %s35 = sphi 0, %s33
      %s45 = sphi 0, %s47
      %s48 = sphi 0, %s45
      %s49 = sphi 0, %s48
      %s65 = sphi 0, %s49
      %s73 = sphi 0, %s75
      %s76 = sphi 0, %s73
      %s77 = sphi 0, %s76
      %s93 = sphi 0, %s77
      %s99 = sphi 0, %s101
      %s102 = sphi 0, %s99
      %s103 = sphi 0, %s102
      %s119 = sphi 0, %s103
      %s123 = sphi 0, %s123
      %s125 = sphi 0, %s123
      %s126 = sphi 0, %s125
      %s140 = sphi 0, %s126
      %s144 = sphi 0, %s144
      %s146 = sphi 0, %s144
      %s147 = sphi 0, %s146
      %s161 = sphi 0, %s147
      %s165 = sphi 0, %s165
      %s167 = sphi 0, %s165
      %s168 = sphi 0, %s167
      %s182 = sphi 0, %s168
      %s186 = sphi 0, %s186
      %s188 = sphi 0, %s186
      %s189 = sphi 0, %s188
      %s203 = sphi 0, %s189
      %s211 = sphi 0, %s213
      %s214 = sphi 0, %s211
      %s215 = sphi 0, %s214
      %s231 = sphi 0, %s215
    $region4: #{tpu_custom_call.1} parent=1 // loop_header_branch
      %26 = sbr.rel (%p24) target = $region8
    $region5: #{tpu_custom_call.1} parent=1 // loop_body
      %s28 = ssub.s32 %s23, 1
      %s29 = ssub.s32 %s23, 2
      %s36 = sadd.s32 1, %s31
      %p37 = scmp.ge.s32.totalorder %s36, 1
      %s38 = scalar_select %p37, 0, %s36
      %s39 = sadd.s32 1, %s30
      %s40 = scalar_select %p37, %s39, %s30
      %p41 = scmp.ge.s32.totalorder %s40, 2
      %s42 = scalar_select %p41, 0, %s40
      %s43 = ssub.s32 %s30, %s42
      %p44 = scmp.eq.s32.totalorder %s43, 0
      %s46 = sadd.s32 %s45, 1
      %s47 = scalar_select %p44, %s45, %s46
      %p50 = pneg %p44
      %p51 = scmp.eq.s32.totalorder %s23, 1
      %p52 = por %p50, %p51
      %p53 = scmp.ne.s32.totalorder %s45, %s48
      %p54 = scmp.eq.s32.totalorder %s23, 0
      %p55 = por %p53, %p54
      %p56 = scmp.ne.s32.totalorder %s45, %s48
      %p57 = scmp.eq.s32.totalorder %s28, 1
      %p58 = por %p56, %p57
      %p59 = scmp.ne.s32.totalorder %s48, %s49
      %p60 = scmp.eq.s32.totalorder %s28, 0
      %p61 = por %p59, %p60
      %p62 = scmp.ne.s32.totalorder %s48, %s49
      %p63 = scmp.eq.s32.totalorder %s29, 1
      %p64 = por %p62, %p63
      %p66 = scmp.ne.s32.totalorder %s49, %s65
      %p67 = scmp.eq.s32.totalorder %s29, 0
      %p68 = por %p66, %p67
      %s69 = ssub.s32 %s30, %s42
      %s70 = ssub.s32 %s31, %s38
      %s71 = sor.u32 %s69, %s70
      %p72 = scmp.eq.s32.totalorder %s71, 0
      %s74 = sadd.s32 %s73, 1
      %s75 = scalar_select %p72, %s73, %s74
      %p78 = pneg %p72
      %p79 = scmp.eq.s32.totalorder %s23, 1
      %p80 = por %p78, %p79
      %p81 = scmp.ne.s32.totalorder %s73, %s76
      %p82 = scmp.eq.s32.totalorder %s23, 0
      %p83 = por %p81, %p82
      %p84 = scmp.ne.s32.totalorder %s73, %s76
      %p85 = scmp.eq.s32.totalorder %s28, 1
      %p86 = por %p84, %p85
      %p87 = scmp.ne.s32.totalorder %s76, %s77
      %p88 = scmp.eq.s32.totalorder %s28, 0
      %p89 = por %p87, %p88
      %p90 = scmp.ne.s32.totalorder %s76, %s77
      %p91 = scmp.eq.s32.totalorder %s29, 1
      %p92 = por %p90, %p91
      %p94 = scmp.ne.s32.totalorder %s77, %s93
      %p95 = scmp.eq.s32.totalorder %s29, 0
      %p96 = por %p94, %p95
      %s97 = ssub.s32 %s31, %s38
      %p98 = scmp.eq.s32.totalorder %s97, 0
      %s100 = sadd.s32 %s99, 1
      %s101 = scalar_select %p98, %s99, %s100
      %p104 = pneg %p98
      %p105 = scmp.eq.s32.totalorder %s23, 1
      %p106 = por %p104, %p105
      %p107 = scmp.ne.s32.totalorder %s99, %s102
      %p108 = scmp.eq.s32.totalorder %s23, 0
      %p109 = por %p107, %p108
      %p110 = scmp.ne.s32.totalorder %s99, %s102
      %p111 = scmp.eq.s32.totalorder %s28, 1
      %p112 = por %p110, %p111
      %p113 = scmp.ne.s32.totalorder %s102, %s103
      %p114 = scmp.eq.s32.totalorder %s28, 0
      %p115 = por %p113, %p114
      %p116 = scmp.ne.s32.totalorder %s102, %s103
      %p117 = scmp.eq.s32.totalorder %s29, 1
      %p118 = por %p116, %p117
      %p120 = scmp.ne.s32.totalorder %s103, %s119
      %p121 = scmp.eq.s32.totalorder %s29, 0
      %p122 = por %p120, %p121
      %s124 = sadd.s32 %s123, 1
      %p127 = scmp.eq.s32.totalorder %s23, 1
      %p128 = scmp.ne.s32.totalorder %s123, %s125
      %p129 = scmp.eq.s32.totalorder %s23, 0
      %p130 = por %p128, %p129
      %p131 = scmp.ne.s32.totalorder %s123, %s125
      %p132 = scmp.eq.s32.totalorder %s28, 1
      %p133 = por %p131, %p132
      %p134 = scmp.ne.s32.totalorder %s125, %s126
      %p135 = scmp.eq.s32.totalorder %s28, 0
      %p136 = por %p134, %p135
      %p137 = scmp.ne.s32.totalorder %s125, %s126
      %p138 = scmp.eq.s32.totalorder %s29, 1
      %p139 = por %p137, %p138
      %p141 = scmp.ne.s32.totalorder %s126, %s140
      %p142 = scmp.eq.s32.totalorder %s29, 0
      %p143 = por %p141, %p142
      %s145 = sadd.s32 %s144, 1
      %p148 = scmp.eq.s32.totalorder %s23, 1
      %p149 = scmp.ne.s32.totalorder %s144, %s146
      %p150 = scmp.eq.s32.totalorder %s23, 0
      %p151 = por %p149, %p150
      %p152 = scmp.ne.s32.totalorder %s144, %s146
      %p153 = scmp.eq.s32.totalorder %s28, 1
      %p154 = por %p152, %p153
      %p155 = scmp.ne.s32.totalorder %s146, %s147
      %p156 = scmp.eq.s32.totalorder %s28, 0
      %p157 = por %p155, %p156
      %p158 = scmp.ne.s32.totalorder %s146, %s147
      %p159 = scmp.eq.s32.totalorder %s29, 1
      %p160 = por %p158, %p159
      %p162 = scmp.ne.s32.totalorder %s147, %s161
      %p163 = scmp.eq.s32.totalorder %s29, 0
      %p164 = por %p162, %p163
      %s166 = sadd.s32 %s165, 1
      %p169 = scmp.eq.s32.totalorder %s23, 1
      %p170 = scmp.ne.s32.totalorder %s165, %s167
      %p171 = scmp.eq.s32.totalorder %s23, 0
      %p172 = por %p170, %p171
      %p173 = scmp.ne.s32.totalorder %s165, %s167
      %p174 = scmp.eq.s32.totalorder %s28, 1
      %p175 = por %p173, %p174
      %p176 = scmp.ne.s32.totalorder %s167, %s168
      %p177 = scmp.eq.s32.totalorder %s28, 0
      %p178 = por %p176, %p177
      %p179 = scmp.ne.s32.totalorder %s167, %s168
      %p180 = scmp.eq.s32.totalorder %s29, 1
      %p181 = por %p179, %p180
      %p183 = scmp.ne.s32.totalorder %s168, %s182
      %p184 = scmp.eq.s32.totalorder %s29, 0
      %p185 = por %p183, %p184
      %s187 = sadd.s32 %s186, 1
      %p190 = scmp.eq.s32.totalorder %s23, 1
      %p191 = scmp.ne.s32.totalorder %s186, %s188
      %p192 = scmp.eq.s32.totalorder %s23, 0
      %p193 = por %p191, %p192
      %p194 = scmp.ne.s32.totalorder %s186, %s188
      %p195 = scmp.eq.s32.totalorder %s28, 1
      %p196 = por %p194, %p195
      %p197 = scmp.ne.s32.totalorder %s188, %s189
      %p198 = scmp.eq.s32.totalorder %s28, 0
      %p199 = por %p197, %p198
      %p200 = scmp.ne.s32.totalorder %s188, %s189
      %p201 = scmp.eq.s32.totalorder %s29, 1
      %p202 = por %p200, %p201
      %p204 = scmp.ne.s32.totalorder %s189, %s203
      %p205 = scmp.eq.s32.totalorder %s29, 0
      %p206 = por %p204, %p205
      %s207 = ssub.s32 %s30, %s42
      %s208 = ssub.s32 %s31, %s38
      %s209 = sor.u32 %s207, %s208
      %p210 = scmp.eq.s32.totalorder %s209, 0
      %s212 = sadd.s32 %s211, 1
      %s213 = scalar_select %p210, %s211, %s212
      %p216 = pneg %p210
      %p217 = scmp.eq.s32.totalorder %s23, 1
      %p218 = por %p216, %p217
      %p219 = scmp.ne.s32.totalorder %s211, %s214
      %p220 = scmp.eq.s32.totalorder %s23, 0
      %p221 = por %p219, %p220
      %p222 = scmp.ne.s32.totalorder %s211, %s214
      %p223 = scmp.eq.s32.totalorder %s28, 1
      %p224 = por %p222, %p223
      %p225 = scmp.ne.s32.totalorder %s214, %s215
      %p226 = scmp.eq.s32.totalorder %s28, 0
      %p227 = por %p225, %p226
      %p228 = scmp.ne.s32.totalorder %s214, %s215
      %p229 = scmp.eq.s32.totalorder %s29, 1
      %p230 = por %p228, %p229
      %p232 = scmp.ne.s32.totalorder %s215, %s231
      %p233 = scmp.eq.s32.totalorder %s29, 0
      %p234 = por %p232, %p233
      %p235 = scmp.le.s32.totalorder 1, %s23
      %p236 = scmp.lt.s32.totalorder %s23, 3
      %p237 = pnand %p235, %p236
      %p238 = pneg %p237
      // Predicated region
      $region9: #{tpu_custom_call.1} parent=5 // pred_check
        _
      $region10: #{tpu_custom_call.1} parent=5 // pred_check_branch
        %240 = sbr.rel (%p237) target = $region12
      $region11: #{tpu_custom_call.1} parent=5 // pred_region
        %s241 = ssub.s32 %s23, 1
        // Predicated region
        $region13: #{tpu_custom_call.1} parent=11 // pred_check
          %p242 = pneg %p115
        $region14: #{tpu_custom_call.1} parent=11 // pred_check_branch
          %244 = sbr.rel (%p242) target = $region16
        $region15: #{tpu_custom_call.1} parent=11 // pred_region
          %s245 = smul.u32 2, %s33
          %s247 = ssub.s32 256, 256
          %248 = vsyncadd [#allocation6], %s247
          %s249 = smul.addr %s245, 128
          %s250 = scalar_lea.hbm %s2, %s249
          %s251 = sshll.u32 [#allocation7], 4
          %s252 = int_to_ptr.vmem [resolvable:$true] %s251
          %257 = dma.hbm_to_vmem [thread:$0]  %s250, 256, %s252, [#allocation6], 128, 128, 8
        $region16: #{tpu_custom_call.1} parent=11 // pred_fallthru
          _
        // Predicated region
        $region17: #{tpu_custom_call.1} parent=11 // pred_check
          %p258 = pneg %p136
        $region18: #{tpu_custom_call.1} parent=11 // pred_check_branch
          %260 = sbr.rel (%p258) target = $region20
        $region19: #{tpu_custom_call.1} parent=11 // pred_region
          %s262 = ssub.s32 256, 256
          %263 = vsyncadd [#allocation9], %s262
          %s264 = sshll.u32 [#allocation8], 4
          %s265 = int_to_ptr.vmem [resolvable:$true] %s264
          %270 = dma.hbm_to_vmem [thread:$0]  %s3, 256, %s265, [#allocation9], 128, 128, 8
        $region20: #{tpu_custom_call.1} parent=11 // pred_fallthru
          _
        // Predicated region
        $region21: #{tpu_custom_call.1} parent=11 // pred_check
          %p271 = pneg %p157
        $region22: #{tpu_custom_call.1} parent=11 // pred_check_branch
          %273 = sbr.rel (%p271) target = $region24
        $region23: #{tpu_custom_call.1} parent=11 // pred_region
          _
        $region24: #{tpu_custom_call.1} parent=11 // pred_fallthru
          _
        // Predicated region
        $region25: #{tpu_custom_call.1} parent=11 // pred_check
          %p274 = pneg %p178
        $region26: #{tpu_custom_call.1} parent=11 // pred_check_branch
          %276 = sbr.rel (%p274) target = $region28
        $region27: #{tpu_custom_call.1} parent=11 // pred_region
          _
        $region28: #{tpu_custom_call.1} parent=11 // pred_fallthru
          _
        // Predicated region
        $region29: #{tpu_custom_call.1} parent=11 // pred_check
          %p277 = pneg %p199
        $region30: #{tpu_custom_call.1} parent=11 // pred_check_branch
          %279 = sbr.rel (%p277) target = $region32
        $region31: #{tpu_custom_call.1} parent=11 // pred_region
          _
        $region32: #{tpu_custom_call.1} parent=11 // pred_fallthru
          _
      $region12: #{tpu_custom_call.1} parent=5 // pred_fallthru
        _
      %p280 = scmp.lt.s32.totalorder %s23, 2
      // Predicated region
      $region33: #{tpu_custom_call.1} parent=5 // pred_check
        %p281 = pneg %p280
      $region34: #{tpu_custom_call.1} parent=5 // pred_check_branch
        %283 = sbr.rel (%p281) target = $region36
      $region35: #{tpu_custom_call.1} parent=5 // pred_region
        // Predicated region
        $region37: #{tpu_custom_call.1} parent=35 // pred_check
          %p284 = pneg %p55
        $region38: #{tpu_custom_call.1} parent=35 // pred_check_branch
          %286 = sbr.rel (%p284) target = $region40
        $region39: #{tpu_custom_call.1} parent=35 // pred_region
          %s287 = sand.u32 %s45, 1
          %s288 = scalar_lea.sflag [#allocation3], %s287
          %s289 = sand.u32 %s45, 1
          %s290 = smul.addr %s289, 4
          %s291 = scalar_lea.vmem [#allocation2], %s290
          %s293 = ssub.s32 64, 64
          %294 = vsyncadd %s288, %s293
          %s295 = smul.addr %s30, 2
          %s296 = smul.addr %s295, 32
          %s297 = scalar_lea.hbm %s0, %s296
          %s298 = sshll.u32 %s291, 4
          %s299 = int_to_ptr.vmem [resolvable:$true] %s298
          %304 = dma.hbm_to_vmem [thread:$0]  %s297, 64, %s299, %s288, 32, 32, 2
        $region40: #{tpu_custom_call.1} parent=35 // pred_fallthru
          _
        // Predicated region
        $region41: #{tpu_custom_call.1} parent=35 // pred_check
          %p305 = pneg %p83
        $region42: #{tpu_custom_call.1} parent=35 // pred_check_branch
          %307 = sbr.rel (%p305) target = $region44
        $region43: #{tpu_custom_call.1} parent=35 // pred_region
          %s308 = sand.u32 %s23, 1
          %s309 = scalar_lea.sflag [#allocation6], %s308
          %s310 = sand.u32 %s73, 1
          %s311 = smul.addr %s310, 4
          %s312 = scalar_lea.vmem [#allocation5], %s311
          %s313 = smul.u32 2, %s31
          %s315 = ssub.s32 64, 64
          %316 = vsyncadd %s309, %s315
          %s317 = smul.addr %s30, 2
          %s318 = sadd.s32 %s313, %s317
          %s319 = smul.addr %s318, 32
          %s320 = scalar_lea.hbm %s1, %s319
          %s321 = sshll.u32 %s312, 4
          %s322 = int_to_ptr.vmem [resolvable:$true] %s321
          %327 = dma.hbm_to_vmem [thread:$0]  %s320, 64, %s322, %s309, 32, 32, 2
        $region44: #{tpu_custom_call.1} parent=35 // pred_fallthru
          _
      $region36: #{tpu_custom_call.1} parent=5 // pred_fallthru
        _
      %p328 = scmp.le.s32.totalorder 1, %s23
      %p329 = scmp.lt.s32.totalorder %s23, 3
      %p330 = pnand %p328, %p329
      %p331 = pneg %p330
      // Predicated region
      $region45: #{tpu_custom_call.1} parent=5 // pred_check
        _
      $region46: #{tpu_custom_call.1} parent=5 // pred_check_branch
        %333 = sbr.rel (%p330) target = $region48
      $region47: #{tpu_custom_call.1} parent=5 // pred_region
        %s334 = ssub.s32 %s23, 1
        %s335 = sand.u32 %s48, 1
        %s336 = scalar_lea.sflag [#allocation3], %s335
        %s337 = sand.u32 %s48, 1
        %s338 = smul.addr %s337, 4
        %s339 = scalar_lea.vmem [#allocation2], %s338
        // Predicated region
        $region49: #{tpu_custom_call.1} parent=47 // pred_check
          %p340 = pneg %p61
        $region50: #{tpu_custom_call.1} parent=47 // pred_check_branch
          %342 = sbr.rel (%p340) target = $region52
        $region51: #{tpu_custom_call.1} parent=47 // pred_region
          %343 = dma.done %s336, 64
        $region52: #{tpu_custom_call.1} parent=47 // pred_fallthru
          _
        %s344 = sand.u32 %s28, 1
        %s345 = scalar_lea.sflag [#allocation6], %s344
        %s346 = sand.u32 %s76, 1
        %s347 = smul.addr %s346, 4
        %s348 = scalar_lea.vmem [#allocation5], %s347
        // Predicated region
        $region53: #{tpu_custom_call.1} parent=47 // pred_check
          %p349 = pneg %p89
        $region54: #{tpu_custom_call.1} parent=47 // pred_check_branch
          %351 = sbr.rel (%p349) target = $region56
        $region55: #{tpu_custom_call.1} parent=47 // pred_region
          %352 = dma.done %s345, 64
        $region56: #{tpu_custom_call.1} parent=47 // pred_fallthru
          _
        // Predicated region
        $region57: #{tpu_custom_call.1} parent=47 // pred_check
          %p353 = pneg %p115
        $region58: #{tpu_custom_call.1} parent=47 // pred_check_branch
          %355 = sbr.rel (%p353) target = $region60
        $region59: #{tpu_custom_call.1} parent=47 // pred_region
          %356 = dma.done [#allocation6], 256
        $region60: #{tpu_custom_call.1} parent=47 // pred_fallthru
          _
        // Predicated region
        $region61: #{tpu_custom_call.1} parent=47 // pred_check
          %p357 = pneg %p136
        $region62: #{tpu_custom_call.1} parent=47 // pred_check_branch
          %359 = sbr.rel (%p357) target = $region64
        $region63: #{tpu_custom_call.1} parent=47 // pred_region
          %360 = dma.done [#allocation9], 256
        $region64: #{tpu_custom_call.1} parent=47 // pred_fallthru
          _
        %s361 = sand.u32 %s48, 1
        %s362 = scalar_lea.sflag [#allocation3], %s361
        %s363 = sand.u32 %s48, 1
        %s364 = smul.addr %s363, 4
        %s365 = scalar_lea.vmem [#allocation2], %s364
        %p366 = pneg %p61
        %p367 = pneg %p58
        %s368 = sand.u32 %s28, 1
        %s369 = scalar_lea.sflag [#allocation6], %s368
        %s370 = sand.u32 %s76, 1
        %s371 = smul.addr %s370, 4
        %s372 = scalar_lea.vmem [#allocation5], %s371
        %p373 = pneg %p89
        %p374 = pneg %p86
        %p375 = pneg %p115
        %p376 = pneg %p112
        %p377 = pneg %p136
        %p378 = pneg %p133
        %p379 = pneg %p157
        %p380 = pneg %p154
        %p381 = pneg %p178
        %p382 = pneg %p175
        %p383 = pneg %p199
        %p384 = pneg %p196
        %p385 = pneg %p227
        %p386 = pneg %p224
        %s387 = sand.u32 %s214, 1
        %s388 = scalar_lea.sflag [#allocation4], %s387
        %s389 = sand.u32 %s214, 1
        %s390 = smul.addr %s389, 256
        %s391 = scalar_lea.vmem [#allocation10], %s390
        %s392 = smul.u32 2, %s33
        %s393 = smul.u32 2, %s33
        %s394 = smul.u32 16, %s33
        %v395 = vld [vmem:[%s339] sm:$0x3]
        %v396 = vld [vmem:[%s339 + $0x2] sm:$0x3]
        %v397 = vunpack.c.0.s8 %v395
        %v398 = vunpack.c.0.s8 %v396
        %v399 = vcvt.s32.f32 %v397
        %v400 = vcvt.s32.f32 %v398
        %v401 = vsub.f32 1.0, %v399
        %v402 = vsub.f32 1.0, %v400
        %v403 = vld [vmem:[%s348] sm:$0x3]
        %v404 = vld [vmem:[%s348 + $0x2] sm:$0x3]
        %v405 = vunpack.c.0.s8 %v403
        %v406 = vunpack.c.0.s8 %v404
        %v407 = vcvt.s32.f32 %v405
        %v408 = vcvt.s32.f32 %v406
        %v409 = vsub.f32 1.0, %v407
        %v410 = vsub.f32 1.0, %v408
        %v411 = vld [vmem:[#allocation7] sm:$0xff]
        %v412 = vld [vmem:[#allocation7 + $0x8] sm:$0xff]
        %vm413 = vcmask 130048
        %v415 = vsel %vm413, %v411, 0
        %v418 = vsel %vm413, %v412, 0
        %420 = vmatprep.subr.mxu0 0.0
        %421 = vmatpush1.msra.mxu0 0.0
        %422 = vmatprep.subr.mxu0 0.0
        %423 = vmatpush1.msra.mxu0 0.0
        %424 = vmatprep.subr.mxu0 0.0
        %425 = vmatpush1.msra.mxu0 0.0
        %426 = vmatprep.subr.mxu0 0.0
        %427 = vmatpush1.msra.mxu0 0.0
        %428 = vmatprep.subr.mxu0 0.0
        %429 = vmatpush1.msra.mxu0 0.0
        %430 = vmatprep.subr.mxu0 0.0
        %431 = vmatpush1.msra.mxu0 0.0
        %432 = vmatprep.subr.mxu0 0.0
        %433 = vmatpush1.msra.mxu0 0.0
        %434 = vmatprep.subr.mxu0 0.0
        %435 = vmatpush1.msra.mxu0 0.0
        %436 = vmatprep.subr.mxu0 0.0
        %437 = vmatpush1.msra.mxu0 0.0
        %438 = vmatprep.subr.mxu0 0.0
        %439 = vmatpush1.msra.mxu0 0.0
        %440 = vmatprep.subr.mxu0 0.0
        %441 = vmatpush1.msra.mxu0 0.0
        %442 = vmatprep.subr.mxu0 0.0
        %443 = vmatpush1.msra.mxu0 0.0
        %444 = vmatprep.subr.mxu0 0.0
        %445 = vmatpush1.msra.mxu0 0.0
        %446 = vmatprep.subr.mxu0 0.0
        %447 = vmatpush1.msra.mxu0 0.0
        %448 = vmatprep.subr.mxu0 0.0
        %449 = vmatpush1.msra.mxu0 %v402
        %450 = vmatprep.subr.mxu0 0.0
        %451 = vmatpush1.msra.mxu0 %v401
        %452 = vmatprep.subr.mxu0 0.0
        %453 = vmatpush2.msra.mxu0 0.0
        %454 = vmatprep.subr.mxu0 0.0
        %455 = vmatpush2.msra.mxu0 0.0
        %456 = vmatprep.subr.mxu0 0.0
        %457 = vmatpush2.msra.mxu0 0.0
        %458 = vmatprep.subr.mxu0 0.0
        %459 = vmatpush2.msra.mxu0 0.0
        %460 = vmatprep.subr.mxu0 0.0
        %461 = vmatpush2.msra.mxu0 0.0
        %462 = vmatprep.subr.mxu0 0.0
        %463 = vmatpush2.msra.mxu0 0.0
        %464 = vmatprep.subr.mxu0 0.0
        %465 = vmatpush2.msra.mxu0 0.0
        %466 = vmatprep.subr.mxu0 0.0
        %467 = vmatpush2.msra.mxu0 0.0
        %468 = vmatprep.subr.mxu0 0.0
        %469 = vmatpush2.msra.mxu0 0.0
        %470 = vmatprep.subr.mxu0 0.0
        %471 = vmatpush2.msra.mxu0 0.0
        %472 = vmatprep.subr.mxu0 0.0
        %473 = vmatpush2.msra.mxu0 0.0
        %474 = vmatprep.subr.mxu0 0.0
        %475 = vmatpush2.msra.mxu0 0.0
        %476 = vmatprep.subr.mxu0 0.0
        %477 = vmatpush2.msra.mxu0 0.0
        %478 = vmatprep.subr.mxu0 0.0
        %479 = vmatpush2.msra.mxu0 0.0
        %480 = vmatprep.subr.mxu0 0.0
        %481 = vmatpush2.msra.mxu0 0.0
        %482 = vmatprep.subr.mxu0 0.0
        %483 = vmatpush2.msra.mxu0 0.0
        %484 = vmatprep.mubr.f32.mxu0 0.0
        %485 = vmatmul.mubr.f32.gmra.mxu0 %v415
        %v486 = vpop.f32.mrf.mxu0
        %v487 = vadd.f32 0.0, %v486
        %v488 = vpop.f32.mrf.mxu0
        %489 = vmatprep.mubr.f32.mxu0 0.0
        %490 = vmatmul.mubr.f32.gmra.mxu0 %v418
        %v491 = vpop.f32.mrf.mxu0
        %v492 = vadd.f32 0.0, %v491
        %v493 = vpop.f32.mrf.mxu0
        %494 = vdwg.mxu0
        %v495 = vld [vmem:[#allocation8] sm:$0xff]
        %v496 = vld [vmem:[#allocation8 + $0x8] sm:$0xff]
        %v498 = vsel %vm413, %v409, 0
        %v501 = vsel %vm413, %v410, 0
        %503 = vmatprep.subr.mxu0 0.0
        %504 = vmatpush1.msra.mxu0 0.0
        %505 = vmatprep.subr.mxu0 0.0
        %506 = vmatpush1.msra.mxu0 0.0
        %507 = vmatprep.subr.mxu0 0.0
        %508 = vmatpush1.msra.mxu0 0.0
        %509 = vmatprep.subr.mxu0 0.0
        %510 = vmatpush1.msra.mxu0 0.0
        %511 = vmatprep.subr.mxu0 0.0
        %512 = vmatpush1.msra.mxu0 0.0
        %513 = vmatprep.subr.mxu0 0.0
        %514 = vmatpush1.msra.mxu0 0.0
        %515 = vmatprep.subr.mxu0 0.0
        %516 = vmatpush1.msra.mxu0 0.0
        %517 = vmatprep.subr.mxu0 0.0
        %518 = vmatpush1.msra.mxu0 0.0
        %519 = vmatprep.subr.mxu0 0.0
        %520 = vmatpush1.msra.mxu0 0.0
        %521 = vmatprep.subr.mxu0 0.0
        %522 = vmatpush1.msra.mxu0 0.0
        %523 = vmatprep.subr.mxu0 0.0
        %524 = vmatpush1.msra.mxu0 0.0
        %525 = vmatprep.subr.mxu0 0.0
        %526 = vmatpush1.msra.mxu0 0.0
        %527 = vmatprep.subr.mxu0 0.0
        %528 = vmatpush1.msra.mxu0 0.0
        %529 = vmatprep.subr.mxu0 0.0
        %530 = vmatpush1.msra.mxu0 0.0
        %531 = vmatprep.subr.mxu0 0.0
        %532 = vmatpush1.msra.mxu0 %v496
        %533 = vmatprep.subr.mxu0 0.0
        %534 = vmatpush1.msra.mxu0 %v495
        %535 = vmatprep.subr.mxu0 0.0
        %536 = vmatpush2.msra.mxu0 0.0
        %537 = vmatprep.subr.mxu0 0.0
        %538 = vmatpush2.msra.mxu0 0.0
        %539 = vmatprep.subr.mxu0 0.0
        %540 = vmatpush2.msra.mxu0 0.0
        %541 = vmatprep.subr.mxu0 0.0
        %542 = vmatpush2.msra.mxu0 0.0
        %543 = vmatprep.subr.mxu0 0.0
        %544 = vmatpush2.msra.mxu0 0.0
        %545 = vmatprep.subr.mxu0 0.0
        %546 = vmatpush2.msra.mxu0 0.0
        %547 = vmatprep.subr.mxu0 0.0
        %548 = vmatpush2.msra.mxu0 0.0
        %549 = vmatprep.subr.mxu0 0.0
        %550 = vmatpush2.msra.mxu0 0.0
        %551 = vmatprep.subr.mxu0 0.0
        %552 = vmatpush2.msra.mxu0 0.0
        %553 = vmatprep.subr.mxu0 0.0
        %554 = vmatpush2.msra.mxu0 0.0
        %555 = vmatprep.subr.mxu0 0.0
        %556 = vmatpush2.msra.mxu0 0.0
        %557 = vmatprep.subr.mxu0 0.0
        %558 = vmatpush2.msra.mxu0 0.0
        %559 = vmatprep.subr.mxu0 0.0
        %560 = vmatpush2.msra.mxu0 0.0
        %561 = vmatprep.subr.mxu0 0.0
        %562 = vmatpush2.msra.mxu0 0.0
        %563 = vmatprep.subr.mxu0 0.0
        %564 = vmatpush2.msra.mxu0 0.0
        %565 = vmatprep.subr.mxu0 0.0
        %566 = vmatpush2.msra.mxu0 0.0
        %567 = vmatprep.mubr.f32.mxu0 0.0
        %568 = vmatmul.mubr.f32.gmra.mxu0 %v498
        %v569 = vpop.f32.mrf.mxu0
        %v570 = vadd.f32 0.0, %v569
        %v571 = vpop.f32.mrf.mxu0
        %572 = vmatprep.mubr.f32.mxu0 0.0
        %573 = vmatmul.mubr.f32.gmra.mxu0 %v501
        %v574 = vpop.f32.mrf.mxu0
        %v575 = vadd.f32 0.0, %v574
        %v576 = vpop.f32.mrf.mxu0
        %577 = vdwg.mxu0
        %v578 = vsel %vm413, %v401, 0.0
        %v579 = vsel %vm413, %v402, 0.0
        %v580 = vadd.f32 %v578, %v579
        %v581 = vrot.slane %v580, 4
        %v582 = vadd.f32 %v580, %v581
        %v583 = vrot.slane %v582, 2
        %v584 = vadd.f32 %v582, %v583
        %v585 = vrot.slane %v584, 1
        %v586 = vadd.f32 %v584, %v585
        %v587 = vadd.f32 %v586, 1e-06
        %v588 = vrcp.pop %v587
        %v589 = vmul.f32 1.0, %v588
        %v590 = vadd.f32 %v570, 1e-06
        %v591 = vadd.f32 %v575, 1e-06
        %v592 = vrcp.pop %v590
        %v593 = vmul.f32 1.0, %v592
        %v594 = vrcp.pop %v591
        %v595 = vmul.f32 1.0, %v594
        %v596 = vsub.f32 %v487, 0.5
        %v597 = vsub.f32 %v492, 0.5
        %v598 = vmul.f32 %v596, %v589
        %v599 = vmul.f32 %v597, %v589
        %v600 = vsub.f32 %v570, 0.5
        %v601 = vsub.f32 %v575, 0.5
        %603 = vset.pattern.permute.xlu0 15
        %604 = vperm.xlu0 %603, %v593
        %v605 = vpop.permute.xlu0 %604
        %608 = vset.pattern.permute.xlu0 15
        %609 = vperm.xlu0 %608, %v595
        %v610 = vpop.permute.xlu0 %609
        %v612 = vmul.f32 %v600, %v605
        %v613 = vmul.f32 %v601, %v610
        %v614 = vlaneseq
        %v615 = vshrl.u32 %v614, 7
        %v616 = vsub.s32 0, %v615
        %v617 = vrot.slane %v612, %v616
        %619 = vbcast.lane.b32.xlu0 %v617, 256
        %v620 = vpop.permute.xlu0 %619
        %s622 = sor.u32 256, 8
        %623 = vbcast.lane.b32.xlu0 %v617, %s622
        %v624 = vpop.permute.xlu0 %623
        %v625 = vlaneseq
        %v626 = vshrl.u32 %v625, 7
        %v627 = vsub.s32 1, %v626
        %v628 = vrot.slane %v612, %v627
        %630 = vbcast.lane.b32.xlu0 %v628, 256
        %v631 = vpop.permute.xlu0 %630
        %s633 = sor.u32 256, 8
        %634 = vbcast.lane.b32.xlu0 %v628, %s633
        %v635 = vpop.permute.xlu0 %634
        %v636 = vlaneseq
        %v637 = vshrl.u32 %v636, 7
        %v638 = vsub.s32 2, %v637
        %v639 = vrot.slane %v612, %v638
        %641 = vbcast.lane.b32.xlu0 %v639, 256
        %v642 = vpop.permute.xlu0 %641
        %s644 = sor.u32 256, 8
        %645 = vbcast.lane.b32.xlu0 %v639, %s644
        %v646 = vpop.permute.xlu0 %645
        %v647 = vlaneseq
        %v648 = vshrl.u32 %v647, 7
        %v649 = vsub.s32 3, %v648
        %v650 = vrot.slane %v612, %v649
        %652 = vbcast.lane.b32.xlu0 %v650, 256
        %v653 = vpop.permute.xlu0 %652
        %s655 = sor.u32 256, 8
        %656 = vbcast.lane.b32.xlu0 %v650, %s655
        %v657 = vpop.permute.xlu0 %656
        %v658 = vlaneseq
        %v659 = vshrl.u32 %v658, 7
        %v660 = vsub.s32 4, %v659
        %v661 = vrot.slane %v612, %v660
        %663 = vbcast.lane.b32.xlu0 %v661, 256
        %v664 = vpop.permute.xlu0 %663
        %s666 = sor.u32 256, 8
        %667 = vbcast.lane.b32.xlu0 %v661, %s666
        %v668 = vpop.permute.xlu0 %667
        %v669 = vlaneseq
        %v670 = vshrl.u32 %v669, 7
        %v671 = vsub.s32 5, %v670
        %v672 = vrot.slane %v612, %v671
        %674 = vbcast.lane.b32.xlu0 %v672, 256
        %v675 = vpop.permute.xlu0 %674
        %s677 = sor.u32 256, 8
        %678 = vbcast.lane.b32.xlu0 %v672, %s677
        %v679 = vpop.permute.xlu0 %678
        %v680 = vlaneseq
        %v681 = vshrl.u32 %v680, 7
        %v682 = vsub.s32 6, %v681
        %v683 = vrot.slane %v612, %v682
        %685 = vbcast.lane.b32.xlu0 %v683, 256
        %v686 = vpop.permute.xlu0 %685
        %s688 = sor.u32 256, 8
        %689 = vbcast.lane.b32.xlu0 %v683, %s688
        %v690 = vpop.permute.xlu0 %689
        %v691 = vlaneseq
        %v692 = vshrl.u32 %v691, 7
        %v693 = vsub.s32 7, %v692
        %v694 = vrot.slane %v612, %v693
        %696 = vbcast.lane.b32.xlu0 %v694, 256
        %v697 = vpop.permute.xlu0 %696
        %s699 = sor.u32 256, 8
        %700 = vbcast.lane.b32.xlu0 %v694, %s699
        %v701 = vpop.permute.xlu0 %700
        %v702 = vlaneseq
        %v703 = vshrl.u32 %v702, 7
        %v704 = vsub.s32 0, %v703
        %v705 = vrot.slane %v613, %v704
        %707 = vbcast.lane.b32.xlu0 %v705, 256
        %v708 = vpop.permute.xlu0 %707
        %s710 = sor.u32 256, 8
        %711 = vbcast.lane.b32.xlu0 %v705, %s710
        %v712 = vpop.permute.xlu0 %711
        %v713 = vlaneseq
        %v714 = vshrl.u32 %v713, 7
        %v715 = vsub.s32 1, %v714
        %v716 = vrot.slane %v613, %v715
        %718 = vbcast.lane.b32.xlu0 %v716, 256
        %v719 = vpop.permute.xlu0 %718
        %s721 = sor.u32 256, 8
        %722 = vbcast.lane.b32.xlu0 %v716, %s721
        %v723 = vpop.permute.xlu0 %722
        %v724 = vlaneseq
        %v725 = vshrl.u32 %v724, 7
        %v726 = vsub.s32 2, %v725
        %v727 = vrot.slane %v613, %v726
        %729 = vbcast.lane.b32.xlu0 %v727, 256
        %v730 = vpop.permute.xlu0 %729
        %s732 = sor.u32 256, 8
        %733 = vbcast.lane.b32.xlu0 %v727, %s732
        %v734 = vpop.permute.xlu0 %733
        %v735 = vlaneseq
        %v736 = vshrl.u32 %v735, 7
        %v737 = vsub.s32 3, %v736
        %v738 = vrot.slane %v613, %v737
        %740 = vbcast.lane.b32.xlu0 %v738, 256
        %v741 = vpop.permute.xlu0 %740
        %s743 = sor.u32 256, 8
        %744 = vbcast.lane.b32.xlu0 %v738, %s743
        %v745 = vpop.permute.xlu0 %744
        %v746 = vlaneseq
        %v747 = vshrl.u32 %v746, 7
        %v748 = vsub.s32 4, %v747
        %v749 = vrot.slane %v613, %v748
        %751 = vbcast.lane.b32.xlu0 %v749, 256
        %v752 = vpop.permute.xlu0 %751
        %s754 = sor.u32 256, 8
        %755 = vbcast.lane.b32.xlu0 %v749, %s754
        %v756 = vpop.permute.xlu0 %755
        %v757 = vlaneseq
        %v758 = vshrl.u32 %v757, 7
        %v759 = vsub.s32 5, %v758
        %v760 = vrot.slane %v613, %v759
        %762 = vbcast.lane.b32.xlu0 %v760, 256
        %v763 = vpop.permute.xlu0 %762
        %s765 = sor.u32 256, 8
        %766 = vbcast.lane.b32.xlu0 %v760, %s765
        %v767 = vpop.permute.xlu0 %766
        %v768 = vlaneseq
        %v769 = vshrl.u32 %v768, 7
        %v770 = vsub.s32 6, %v769
        %v771 = vrot.slane %v613, %v770
        %773 = vbcast.lane.b32.xlu0 %v771, 256
        %v774 = vpop.permute.xlu0 %773
        %s776 = sor.u32 256, 8
        %777 = vbcast.lane.b32.xlu0 %v771, %s776
        %v778 = vpop.permute.xlu0 %777
        %v779 = vlaneseq
        %v780 = vshrl.u32 %v779, 7
        %v781 = vsub.s32 7, %v780
        %v782 = vrot.slane %v613, %v781
        %784 = vbcast.lane.b32.xlu0 %v782, 256
        %v785 = vpop.permute.xlu0 %784
        %s787 = sor.u32 256, 8
        %788 = vbcast.lane.b32.xlu0 %v782, %s787
        %v789 = vpop.permute.xlu0 %788
        %v790 = vld [vmem:[%s4] sm:$0x1]
        %v792 = vlaneseq
        %v793 = vshrl.u32 %v792, 7
        %v794 = vsub.s32 0, %v793
        %v795 = vrot.slane %v790, %v794
        %v797 = vmul.f32 %v620, %v795
        %v798 = vmul.f32 %v624, %v795
        %v799 = vmul.f32 %v631, %v795
        %v800 = vmul.f32 %v635, %v795
        %v801 = vmul.f32 %v642, %v795
        %v802 = vmul.f32 %v646, %v795
        %v803 = vmul.f32 %v653, %v795
        %v804 = vmul.f32 %v657, %v795
        %v805 = vmul.f32 %v664, %v795
        %v806 = vmul.f32 %v668, %v795
        %v807 = vmul.f32 %v675, %v795
        %v808 = vmul.f32 %v679, %v795
        %v809 = vmul.f32 %v686, %v795
        %v810 = vmul.f32 %v690, %v795
        %v811 = vmul.f32 %v697, %v795
        %v812 = vmul.f32 %v701, %v795
        %v813 = vmul.f32 %v708, %v795
        %v814 = vmul.f32 %v712, %v795
        %v815 = vmul.f32 %v719, %v795
        %v816 = vmul.f32 %v723, %v795
        %v817 = vmul.f32 %v730, %v795
        %v818 = vmul.f32 %v734, %v795
        %v819 = vmul.f32 %v741, %v795
        %v820 = vmul.f32 %v745, %v795
        %v821 = vmul.f32 %v752, %v795
        %v822 = vmul.f32 %v756, %v795
        %v823 = vmul.f32 %v763, %v795
        %v824 = vmul.f32 %v767, %v795
        %v825 = vmul.f32 %v774, %v795
        %v826 = vmul.f32 %v778, %v795
        %v827 = vmul.f32 %v785, %v795
        %v828 = vmul.f32 %v789, %v795
        %v829 = vlaneseq
        %v830 = vshrl.u32 %v829, 7
        %v831 = vsub.s32 0, %v830
        %v832 = vrot.slane %v598, %v831
        %834 = vbcast.lane.b32.xlu0 %v832, 256
        %v835 = vpop.permute.xlu0 %834
        %s837 = sor.u32 256, 8
        %838 = vbcast.lane.b32.xlu0 %v832, %s837
        %v839 = vpop.permute.xlu0 %838
        %v840 = vlaneseq
        %v841 = vshrl.u32 %v840, 7
        %v842 = vsub.s32 1, %v841
        %v843 = vrot.slane %v598, %v842
        %845 = vbcast.lane.b32.xlu0 %v843, 256
        %v846 = vpop.permute.xlu0 %845
        %s848 = sor.u32 256, 8
        %849 = vbcast.lane.b32.xlu0 %v843, %s848
        %v850 = vpop.permute.xlu0 %849
        %v851 = vlaneseq
        %v852 = vshrl.u32 %v851, 7
        %v853 = vsub.s32 2, %v852
        %v854 = vrot.slane %v598, %v853
        %856 = vbcast.lane.b32.xlu0 %v854, 256
        %v857 = vpop.permute.xlu0 %856
        %s859 = sor.u32 256, 8
        %860 = vbcast.lane.b32.xlu0 %v854, %s859
        %v861 = vpop.permute.xlu0 %860
        %v862 = vlaneseq
        %v863 = vshrl.u32 %v862, 7
        %v864 = vsub.s32 3, %v863
        %v865 = vrot.slane %v598, %v864
        %867 = vbcast.lane.b32.xlu0 %v865, 256
        %v868 = vpop.permute.xlu0 %867
        %s870 = sor.u32 256, 8
        %871 = vbcast.lane.b32.xlu0 %v865, %s870
        %v872 = vpop.permute.xlu0 %871
        %v873 = vlaneseq
        %v874 = vshrl.u32 %v873, 7
        %v875 = vsub.s32 4, %v874
        %v876 = vrot.slane %v598, %v875
        %878 = vbcast.lane.b32.xlu0 %v876, 256
        %v879 = vpop.permute.xlu0 %878
        %s881 = sor.u32 256, 8
        %882 = vbcast.lane.b32.xlu0 %v876, %s881
        %v883 = vpop.permute.xlu0 %882
        %v884 = vlaneseq
        %v885 = vshrl.u32 %v884, 7
        %v886 = vsub.s32 5, %v885
        %v887 = vrot.slane %v598, %v886
        %889 = vbcast.lane.b32.xlu0 %v887, 256
        %v890 = vpop.permute.xlu0 %889
        %s892 = sor.u32 256, 8
        %893 = vbcast.lane.b32.xlu0 %v887, %s892
        %v894 = vpop.permute.xlu0 %893
        %v895 = vlaneseq
        %v896 = vshrl.u32 %v895, 7
        %v897 = vsub.s32 6, %v896
        %v898 = vrot.slane %v598, %v897
        %900 = vbcast.lane.b32.xlu0 %v898, 256
        %v901 = vpop.permute.xlu0 %900
        %s903 = sor.u32 256, 8
        %904 = vbcast.lane.b32.xlu0 %v898, %s903
        %v905 = vpop.permute.xlu0 %904
        %v906 = vlaneseq
        %v907 = vshrl.u32 %v906, 7
        %v908 = vsub.s32 7, %v907
        %v909 = vrot.slane %v598, %v908
        %911 = vbcast.lane.b32.xlu0 %v909, 256
        %v912 = vpop.permute.xlu0 %911
        %s914 = sor.u32 256, 8
        %915 = vbcast.lane.b32.xlu0 %v909, %s914
        %v916 = vpop.permute.xlu0 %915
        %v917 = vlaneseq
        %v918 = vshrl.u32 %v917, 7
        %v919 = vsub.s32 0, %v918
        %v920 = vrot.slane %v599, %v919
        %922 = vbcast.lane.b32.xlu0 %v920, 256
        %v923 = vpop.permute.xlu0 %922
        %s925 = sor.u32 256, 8
        %926 = vbcast.lane.b32.xlu0 %v920, %s925
        %v927 = vpop.permute.xlu0 %926
        %v928 = vlaneseq
        %v929 = vshrl.u32 %v928, 7
        %v930 = vsub.s32 1, %v929
        %v931 = vrot.slane %v599, %v930
        %933 = vbcast.lane.b32.xlu0 %v931, 256
        %v934 = vpop.permute.xlu0 %933
        %s936 = sor.u32 256, 8
        %937 = vbcast.lane.b32.xlu0 %v931, %s936
        %v938 = vpop.permute.xlu0 %937
        %v939 = vlaneseq
        %v940 = vshrl.u32 %v939, 7
        %v941 = vsub.s32 2, %v940
        %v942 = vrot.slane %v599, %v941
        %944 = vbcast.lane.b32.xlu0 %v942, 256
        %v945 = vpop.permute.xlu0 %944
        %s947 = sor.u32 256, 8
        %948 = vbcast.lane.b32.xlu0 %v942, %s947
        %v949 = vpop.permute.xlu0 %948
        %v950 = vlaneseq
        %v951 = vshrl.u32 %v950, 7
        %v952 = vsub.s32 3, %v951
        %v953 = vrot.slane %v599, %v952
        %955 = vbcast.lane.b32.xlu0 %v953, 256
        %v956 = vpop.permute.xlu0 %955
        %s958 = sor.u32 256, 8
        %959 = vbcast.lane.b32.xlu0 %v953, %s958
        %v960 = vpop.permute.xlu0 %959
        %v961 = vlaneseq
        %v962 = vshrl.u32 %v961, 7
        %v963 = vsub.s32 4, %v962
        %v964 = vrot.slane %v599, %v963
        %966 = vbcast.lane.b32.xlu0 %v964, 256
        %v967 = vpop.permute.xlu0 %966
        %s969 = sor.u32 256, 8
        %970 = vbcast.lane.b32.xlu0 %v964, %s969
        %v971 = vpop.permute.xlu0 %970
        %v972 = vlaneseq
        %v973 = vshrl.u32 %v972, 7
        %v974 = vsub.s32 5, %v973
        %v975 = vrot.slane %v599, %v974
        %977 = vbcast.lane.b32.xlu0 %v975, 256
        %v978 = vpop.permute.xlu0 %977
        %s980 = sor.u32 256, 8
        %981 = vbcast.lane.b32.xlu0 %v975, %s980
        %v982 = vpop.permute.xlu0 %981
        %v983 = vlaneseq
        %v984 = vshrl.u32 %v983, 7
        %v985 = vsub.s32 6, %v984
        %v986 = vrot.slane %v599, %v985
        %988 = vbcast.lane.b32.xlu0 %v986, 256
        %v989 = vpop.permute.xlu0 %988
        %s991 = sor.u32 256, 8
        %992 = vbcast.lane.b32.xlu0 %v986, %s991
        %v993 = vpop.permute.xlu0 %992
        %v994 = vlaneseq
        %v995 = vshrl.u32 %v994, 7
        %v996 = vsub.s32 7, %v995
        %v997 = vrot.slane %v599, %v996
        %999 = vbcast.lane.b32.xlu0 %v997, 256
        %v1000 = vpop.permute.xlu0 %999
        %s1002 = sor.u32 256, 8
        %1003 = vbcast.lane.b32.xlu0 %v997, %s1002
        %v1004 = vpop.permute.xlu0 %1003
        %v1005 = vld [vmem:[%s5] sm:$0x1]
        %v1007 = vlaneseq
        %v1008 = vshrl.u32 %v1007, 7
        %v1009 = vsub.s32 0, %v1008
        %v1010 = vrot.slane %v1005, %v1009
        %v1012 = vmul.f32 %v835, %v1010
        %v1013 = vmul.f32 %v839, %v1010
        %v1014 = vmul.f32 %v846, %v1010
        %v1015 = vmul.f32 %v850, %v1010
        %v1016 = vmul.f32 %v857, %v1010
        %v1017 = vmul.f32 %v861, %v1010
        %v1018 = vmul.f32 %v868, %v1010
        %v1019 = vmul.f32 %v872, %v1010
        %v1020 = vmul.f32 %v879, %v1010
        %v1021 = vmul.f32 %v883, %v1010
        %v1022 = vmul.f32 %v890, %v1010
        %v1023 = vmul.f32 %v894, %v1010
        %v1024 = vmul.f32 %v901, %v1010
        %v1025 = vmul.f32 %v905, %v1010
        %v1026 = vmul.f32 %v912, %v1010
        %v1027 = vmul.f32 %v916, %v1010
        %v1028 = vmul.f32 %v923, %v1010
        %v1029 = vmul.f32 %v927, %v1010
        %v1030 = vmul.f32 %v934, %v1010
        %v1031 = vmul.f32 %v938, %v1010
        %v1032 = vmul.f32 %v945, %v1010
        %v1033 = vmul.f32 %v949, %v1010
        %v1034 = vmul.f32 %v956, %v1010
        %v1035 = vmul.f32 %v960, %v1010
        %v1036 = vmul.f32 %v967, %v1010
        %v1037 = vmul.f32 %v971, %v1010
        %v1038 = vmul.f32 %v978, %v1010
        %v1039 = vmul.f32 %v982, %v1010
        %v1040 = vmul.f32 %v989, %v1010
        %v1041 = vmul.f32 %v993, %v1010
        %v1042 = vmul.f32 %v1000, %v1010
        %v1043 = vmul.f32 %v1004, %v1010
        %v1044 = vadd.f32 %v797, %v1012
        %v1045 = vadd.f32 %v798, %v1013
        %v1046 = vadd.f32 %v799, %v1014
        %v1047 = vadd.f32 %v800, %v1015
        %v1048 = vadd.f32 %v801, %v1016
        %v1049 = vadd.f32 %v802, %v1017
        %v1050 = vadd.f32 %v803, %v1018
        %v1051 = vadd.f32 %v804, %v1019
        %v1052 = vadd.f32 %v805, %v1020
        %v1053 = vadd.f32 %v806, %v1021
        %v1054 = vadd.f32 %v807, %v1022
        %v1055 = vadd.f32 %v808, %v1023
        %v1056 = vadd.f32 %v809, %v1024
        %v1057 = vadd.f32 %v810, %v1025
        %v1058 = vadd.f32 %v811, %v1026
        %v1059 = vadd.f32 %v812, %v1027
        %v1060 = vadd.f32 %v813, %v1028
        %v1061 = vadd.f32 %v814, %v1029
        %v1062 = vadd.f32 %v815, %v1030
        %v1063 = vadd.f32 %v816, %v1031
        %v1064 = vadd.f32 %v817, %v1032
        %v1065 = vadd.f32 %v818, %v1033
        %v1066 = vadd.f32 %v819, %v1034
        %v1067 = vadd.f32 %v820, %v1035
        %v1068 = vadd.f32 %v821, %v1036
        %v1069 = vadd.f32 %v822, %v1037
        %v1070 = vadd.f32 %v823, %v1038
        %v1071 = vadd.f32 %v824, %v1039
        %v1072 = vadd.f32 %v825, %v1040
        %v1073 = vadd.f32 %v826, %v1041
        %v1074 = vadd.f32 %v827, %v1042
        %v1075 = vadd.f32 %v828, %v1043
        %v1076 = vld [vmem:[%s6] sm:$0x1]
        %v1078 = vlaneseq
        %v1079 = vshrl.u32 %v1078, 7
        %v1080 = vsub.s32 0, %v1079
        %v1081 = vrot.slane %v1076, %v1080
        %v1083 = vadd.f32 %v1044, %v1081
        %v1084 = vadd.f32 %v1045, %v1081
        %v1085 = vadd.f32 %v1046, %v1081
        %v1086 = vadd.f32 %v1047, %v1081
        %v1087 = vadd.f32 %v1048, %v1081
        %v1088 = vadd.f32 %v1049, %v1081
        %v1089 = vadd.f32 %v1050, %v1081
        %v1090 = vadd.f32 %v1051, %v1081
        %v1091 = vadd.f32 %v1052, %v1081
        %v1092 = vadd.f32 %v1053, %v1081
        %v1093 = vadd.f32 %v1054, %v1081
        %v1094 = vadd.f32 %v1055, %v1081
        %v1095 = vadd.f32 %v1056, %v1081
        %v1096 = vadd.f32 %v1057, %v1081
        %v1097 = vadd.f32 %v1058, %v1081
        %v1098 = vadd.f32 %v1059, %v1081
        %v1099 = vadd.f32 %v1060, %v1081
        %v1100 = vadd.f32 %v1061, %v1081
        %v1101 = vadd.f32 %v1062, %v1081
        %v1102 = vadd.f32 %v1063, %v1081
        %v1103 = vadd.f32 %v1064, %v1081
        %v1104 = vadd.f32 %v1065, %v1081
        %v1105 = vadd.f32 %v1066, %v1081
        %v1106 = vadd.f32 %v1067, %v1081
        %v1107 = vadd.f32 %v1068, %v1081
        %v1108 = vadd.f32 %v1069, %v1081
        %v1109 = vadd.f32 %v1070, %v1081
        %v1110 = vadd.f32 %v1071, %v1081
        %v1111 = vadd.f32 %v1072, %v1081
        %v1112 = vadd.f32 %v1073, %v1081
        %v1113 = vadd.f32 %v1074, %v1081
        %v1114 = vadd.f32 %v1075, %v1081
        %v1115 = vand.u32 2147483647, %v1083
        %vm1116 = vcmp.le.f32.partialorder %v1115, 0.7853982
        %vm1117 = vcmp.lt.s32.totalorder %v1083, 0
        %v1118 = vand.u32 %v1083, 2139095040
        %v1119 = vshrl.u32 %v1118, 23
        %v1120 = vsub.s32 %v1119, 127
        %v1121 = vand.u32 2147483647, %v1083
        %v1122 = vand.u32 %v1121, 8388607
        %v1123 = vor.u32 %v1122, 8388608
        %v1124 = vsub.s32 0, %v1123
        %v1125 = vadd.s32 %v1120, 1
        %vm1126 = vcmp.gt.s32.totalorder %v1125, 0
        %v1127 = vsel %vm1126, %v1125, 0
        %v1128 = vshrl.u32 %v1127, 5
        %v1129 = vand.u32 %v1127, 31
        %v1130 = vsub.s32 32, %v1129
        %v1131 = vshrl.u32 683565275, %v1130
        %v1132 = vshll.u32 683565275, %v1129
        %v1133 = vshrl.u32 2475754826, %v1130
        %v1134 = vor.u32 %v1132, %v1133
        %v1135 = vshll.u32 2475754826, %v1129
        %v1136 = vshrl.u32 2131351028, %v1130
        %v1137 = vor.u32 %v1135, %v1136
        %v1138 = vshll.u32 2131351028, %v1129
        %v1139 = vshrl.u32 2102212464, %v1130
        %v1140 = vor.u32 %v1138, %v1139
        %v1141 = vshll.u32 2102212464, %v1129
        %v1142 = vshrl.u32 920167782, %v1130
        %v1143 = vor.u32 %v1141, %v1142
        %v1144 = vshll.u32 920167782, %v1129
        %v1145 = vshrl.u32 1326507024, %v1130
        %v1146 = vor.u32 %v1144, %v1145
        %vm1147 = vcmp.lt.s32.totalorder %v1128, 1
        %vm1148 = vcmp.lt.s32.totalorder %v1128, 2
        %vm1149 = vcmp.lt.s32.totalorder %v1128, 3
        %vm1150 = vcmp.lt.s32.totalorder %v1128, 4
        %v1151 = vsel %vm1147, %v1131, %v1134
        %v1152 = vsel %vm1150, %v1140, 2102212464
        %v1153 = vsel %vm1149, %v1137, %v1152
        %v1154 = vsel %vm1148, %v1151, %v1153
        %v1155 = vsel %vm1147, %v1134, %v1137
        %v1156 = vsel %vm1150, %v1143, 920167782
        %v1157 = vsel %vm1149, %v1140, %v1156
        %v1158 = vsel %vm1148, %v1155, %v1157
        %v1159 = vsel %vm1147, %v1137, %v1140
        %v1160 = vsel %vm1150, %v1146, 1326507024
        %v1161 = vsel %vm1149, %v1143, %v1160
        %v1162 = vsel %vm1148, %v1159, %v1161
        %v1163 = vshll.u32 %v1123, 8
        %v1164 = vmul.u32.u64.compose %v1163, %v1162
        %v1165 = vextract.low.u32 %v1164
        %v1166 = vextract.high.u32 %v1164
        %v1167 = vmul.u32.u64.compose %v1163, %v1158
        %v1168 = vextract.low.u32 %v1167
        %v1169 = vextract.high.u32 %v1167
        %v1170 = vmul.u32 %v1163, %v1154
        %v1171 = vadd.s32 %v1166, %v1168
        %vm1172 = vc.u32 %v1166, %v1168
        %v1173 = vadd.s32 %v1169, 1
        %v1174 = vsel %vm1172, %v1173, %v1169
        %v1175 = vadd.s32 %v1170, %v1174
        %v1176 = vadd.s32 %v1175, 536870912
        %v1177 = vshrl.u32 %v1176, 30
        %v1178 = vshll.u32 %v1177, 30
        %v1179 = vsub.s32 %v1175, %v1178
        %vm1180 = vcmp.lt.s32.totalorder %v1179, 0
        %v1181 = vsub.s32 0, %v1179
        %v1182 = vsel %vm1180, %v1181, %v1179
        %v1183 = vclz %v1182
        %v1184 = vsub.s32 %v1183, 2
        %vm1185 = vcmp.gt.s32.totalorder 0, %v1184
        %v1186 = vsel %vm1185, 0, %v1184
        %v1187 = vsub.s32 32, %v1186
        %v1188 = vshll.u32 %v1179, %v1186
        %v1189 = vshrl.u32 %v1171, %v1187
        %v1190 = vor.u32 %v1188, %v1189
        %v1191 = vsub.s32 4294967266, %v1186
        %v1192 = vadd.s32 %v1191, 127
        %v1193 = vshll.u32 %v1192, 23
        %v1194 = vor.u32 4788187, %v1193
        %v1195 = vand.u32 2147483647, %v1194
        %v1197 = vcvt.s32.f32 %v1190
        %v1198 = vmul.f32 %v1197, %v1195
        %v1199 = vxor.u32 %v1198, 2147483648
        %v1200 = vsel %vm1117, %v1199, %v1198
        %v1201 = vsub.s32 4, %v1177
        %v1202 = vsel %vm1117, %v1201, %v1177
        %v1203 = vsel %vm1116, %v1083, %v1200
        %v1204 = vsel %vm1116, 0, %v1202
        %v1205 = vcosq.f32.pop %v1203
        %v1206 = vsinq.f32.pop %v1203
        %vm1207 = vweird.f32 %v1083
        %v1208 = vadd.s32 %v1204, 3
        %v1209 = vand.u32 %v1208, 3
        %vm1210 = vcmp.lt.s32.totalorder %v1209, 2
        %vm1211 = vcmp.eq.s32.totalorder %v1209, 0
        %v1212 = vxor.u32 %v1206, 2147483648
        %v1213 = vsel %vm1211, %v1205, %v1212
        %vm1214 = vcmp.eq.s32.totalorder %v1209, 2
        %v1215 = vxor.u32 %v1205, 2147483648
        %v1216 = vsel %vm1214, %v1215, %v1206
        %v1217 = vsel %vm1210, %v1213, %v1216
        %v1218 = vsel %vm1207, nan, %v1217
        %v1219 = vand.u32 2147483647, %v1084
        %vm1220 = vcmp.le.f32.partialorder %v1219, 0.7853982
        %vm1221 = vcmp.lt.s32.totalorder %v1084, 0
        %v1222 = vand.u32 %v1084, 2139095040
        %v1223 = vshrl.u32 %v1222, 23
        %v1224 = vsub.s32 %v1223, 127
        %v1225 = vand.u32 2147483647, %v1084
        %v1226 = vand.u32 %v1225, 8388607
        %v1227 = vor.u32 %v1226, 8388608
        %v1228 = vsub.s32 0, %v1227
        %v1229 = vadd.s32 %v1224, 1
        %vm1230 = vcmp.gt.s32.totalorder %v1229, 0
        %v1231 = vsel %vm1230, %v1229, 0
        %v1232 = vshrl.u32 %v1231, 5
        %v1233 = vand.u32 %v1231, 31
        %v1234 = vsub.s32 32, %v1233
        %v1235 = vshrl.u32 683565275, %v1234
        %v1236 = vshll.u32 683565275, %v1233
        %v1237 = vshrl.u32 2475754826, %v1234
        %v1238 = vor.u32 %v1236, %v1237
        %v1239 = vshll.u32 2475754826, %v1233
        %v1240 = vshrl.u32 2131351028, %v1234
        %v1241 = vor.u32 %v1239, %v1240
        %v1242 = vshll.u32 2131351028, %v1233
        %v1243 = vshrl.u32 2102212464, %v1234
        %v1244 = vor.u32 %v1242, %v1243
        %v1245 = vshll.u32 2102212464, %v1233
        %v1246 = vshrl.u32 920167782, %v1234
        %v1247 = vor.u32 %v1245, %v1246
        %v1248 = vshll.u32 920167782, %v1233
        %v1249 = vshrl.u32 1326507024, %v1234
        %v1250 = vor.u32 %v1248, %v1249
        %vm1251 = vcmp.lt.s32.totalorder %v1232, 1
        %vm1252 = vcmp.lt.s32.totalorder %v1232, 2
        %vm1253 = vcmp.lt.s32.totalorder %v1232, 3
        %vm1254 = vcmp.lt.s32.totalorder %v1232, 4
        %v1255 = vsel %vm1251, %v1235, %v1238
        %v1256 = vsel %vm1254, %v1244, 2102212464
        %v1257 = vsel %vm1253, %v1241, %v1256
        %v1258 = vsel %vm1252, %v1255, %v1257
        %v1259 = vsel %vm1251, %v1238, %v1241
        %v1260 = vsel %vm1254, %v1247, 920167782
        %v1261 = vsel %vm1253, %v1244, %v1260
        %v1262 = vsel %vm1252, %v1259, %v1261
        %v1263 = vsel %vm1251, %v1241, %v1244
        %v1264 = vsel %vm1254, %v1250, 1326507024
        %v1265 = vsel %vm1253, %v1247, %v1264
        %v1266 = vsel %vm1252, %v1263, %v1265
        %v1267 = vshll.u32 %v1227, 8
        %v1268 = vmul.u32.u64.compose %v1267, %v1266
        %v1269 = vextract.low.u32 %v1268
        %v1270 = vextract.high.u32 %v1268
        %v1271 = vmul.u32.u64.compose %v1267, %v1262
        %v1272 = vextract.low.u32 %v1271
        %v1273 = vextract.high.u32 %v1271
        %v1274 = vmul.u32 %v1267, %v1258
        %v1275 = vadd.s32 %v1270, %v1272
        %vm1276 = vc.u32 %v1270, %v1272
        %v1277 = vadd.s32 %v1273, 1
        %v1278 = vsel %vm1276, %v1277, %v1273
        %v1279 = vadd.s32 %v1274, %v1278
        %v1280 = vadd.s32 %v1279, 536870912
        %v1281 = vshrl.u32 %v1280, 30
        %v1282 = vshll.u32 %v1281, 30
        %v1283 = vsub.s32 %v1279, %v1282
        %vm1284 = vcmp.lt.s32.totalorder %v1283, 0
        %v1285 = vsub.s32 0, %v1283
        %v1286 = vsel %vm1284, %v1285, %v1283
        %v1287 = vclz %v1286
        %v1288 = vsub.s32 %v1287, 2
        %vm1289 = vcmp.gt.s32.totalorder 0, %v1288
        %v1290 = vsel %vm1289, 0, %v1288
        %v1291 = vsub.s32 32, %v1290
        %v1292 = vshll.u32 %v1283, %v1290
        %v1293 = vshrl.u32 %v1275, %v1291
        %v1294 = vor.u32 %v1292, %v1293
        %v1295 = vsub.s32 4294967266, %v1290
        %v1296 = vadd.s32 %v1295, 127
        %v1297 = vshll.u32 %v1296, 23
        %v1298 = vor.u32 4788187, %v1297
        %v1299 = vand.u32 2147483647, %v1298
        %v1301 = vcvt.s32.f32 %v1294
        %v1302 = vmul.f32 %v1301, %v1299
        %v1303 = vxor.u32 %v1302, 2147483648
        %v1304 = vsel %vm1221, %v1303, %v1302
        %v1305 = vsub.s32 4, %v1281
        %v1306 = vsel %vm1221, %v1305, %v1281
        %v1307 = vsel %vm1220, %v1084, %v1304
        %v1308 = vsel %vm1220, 0, %v1306
        %v1309 = vcosq.f32.pop %v1307
        %v1310 = vsinq.f32.pop %v1307
        %vm1311 = vweird.f32 %v1084
        %v1312 = vadd.s32 %v1308, 3
        %v1313 = vand.u32 %v1312, 3
        %vm1314 = vcmp.lt.s32.totalorder %v1313, 2
        %vm1315 = vcmp.eq.s32.totalorder %v1313, 0
        %v1316 = vxor.u32 %v1310, 2147483648
        %v1317 = vsel %vm1315, %v1309, %v1316
        %vm1318 = vcmp.eq.s32.totalorder %v1313, 2
        %v1319 = vxor.u32 %v1309, 2147483648
        %v1320 = vsel %vm1318, %v1319, %v1310
        %v1321 = vsel %vm1314, %v1317, %v1320
        %v1322 = vsel %vm1311, nan, %v1321
        %v1323 = vand.u32 2147483647, %v1085
        %vm1324 = vcmp.le.f32.partialorder %v1323, 0.7853982
        %vm1325 = vcmp.lt.s32.totalorder %v1085, 0
        %v1326 = vand.u32 %v1085, 2139095040
        %v1327 = vshrl.u32 %v1326, 23
        %v1328 = vsub.s32 %v1327, 127
        %v1329 = vand.u32 2147483647, %v1085
        %v1330 = vand.u32 %v1329, 8388607
        %v1331 = vor.u32 %v1330, 8388608
        %v1332 = vsub.s32 0, %v1331
        %v1333 = vadd.s32 %v1328, 1
        %vm1334 = vcmp.gt.s32.totalorder %v1333, 0
        %v1335 = vsel %vm1334, %v1333, 0
        %v1336 = vshrl.u32 %v1335, 5
        %v1337 = vand.u32 %v1335, 31
        %v1338 = vsub.s32 32, %v1337
        %v1339 = vshrl.u32 683565275, %v1338
        %v1340 = vshll.u32 683565275, %v1337
        %v1341 = vshrl.u32 2475754826, %v1338
        %v1342 = vor.u32 %v1340, %v1341
        %v1343 = vshll.u32 2475754826, %v1337
        %v1344 = vshrl.u32 2131351028, %v1338
        %v1345 = vor.u32 %v1343, %v1344
        %v1346 = vshll.u32 2131351028, %v1337
        %v1347 = vshrl.u32 2102212464, %v1338
        %v1348 = vor.u32 %v1346, %v1347
        %v1349 = vshll.u32 2102212464, %v1337
        %v1350 = vshrl.u32 920167782, %v1338
        %v1351 = vor.u32 %v1349, %v1350
        %v1352 = vshll.u32 920167782, %v1337
        %v1353 = vshrl.u32 1326507024, %v1338
        %v1354 = vor.u32 %v1352, %v1353
        %vm1355 = vcmp.lt.s32.totalorder %v1336, 1
        %vm1356 = vcmp.lt.s32.totalorder %v1336, 2
        %vm1357 = vcmp.lt.s32.totalorder %v1336, 3
        %vm1358 = vcmp.lt.s32.totalorder %v1336, 4
        %v1359 = vsel %vm1355, %v1339, %v1342
        %v1360 = vsel %vm1358, %v1348, 2102212464
        %v1361 = vsel %vm1357, %v1345, %v1360
        %v1362 = vsel %vm1356, %v1359, %v1361
        %v1363 = vsel %vm1355, %v1342, %v1345
        %v1364 = vsel %vm1358, %v1351, 920167782
        %v1365 = vsel %vm1357, %v1348, %v1364
        %v1366 = vsel %vm1356, %v1363, %v1365
        %v1367 = vsel %vm1355, %v1345, %v1348
        %v1368 = vsel %vm1358, %v1354, 1326507024
        %v1369 = vsel %vm1357, %v1351, %v1368
        %v1370 = vsel %vm1356, %v1367, %v1369
        %v1371 = vshll.u32 %v1331, 8
        %v1372 = vmul.u32.u64.compose %v1371, %v1370
        %v1373 = vextract.low.u32 %v1372
        %v1374 = vextract.high.u32 %v1372
        %v1375 = vmul.u32.u64.compose %v1371, %v1366
        %v1376 = vextract.low.u32 %v1375
        %v1377 = vextract.high.u32 %v1375
        %v1378 = vmul.u32 %v1371, %v1362
        %v1379 = vadd.s32 %v1374, %v1376
        %vm1380 = vc.u32 %v1374, %v1376
        %v1381 = vadd.s32 %v1377, 1
        %v1382 = vsel %vm1380, %v1381, %v1377
        %v1383 = vadd.s32 %v1378, %v1382
        %v1384 = vadd.s32 %v1383, 536870912
        %v1385 = vshrl.u32 %v1384, 30
        %v1386 = vshll.u32 %v1385, 30
        %v1387 = vsub.s32 %v1383, %v1386
        %vm1388 = vcmp.lt.s32.totalorder %v1387, 0
        %v1389 = vsub.s32 0, %v1387
        %v1390 = vsel %vm1388, %v1389, %v1387
        %v1391 = vclz %v1390
        %v1392 = vsub.s32 %v1391, 2
        %vm1393 = vcmp.gt.s32.totalorder 0, %v1392
        %v1394 = vsel %vm1393, 0, %v1392
        %v1395 = vsub.s32 32, %v1394
        %v1396 = vshll.u32 %v1387, %v1394
        %v1397 = vshrl.u32 %v1379, %v1395
        %v1398 = vor.u32 %v1396, %v1397
        %v1399 = vsub.s32 4294967266, %v1394
        %v1400 = vadd.s32 %v1399, 127
        %v1401 = vshll.u32 %v1400, 23
        %v1402 = vor.u32 4788187, %v1401
        %v1403 = vand.u32 2147483647, %v1402
        %v1405 = vcvt.s32.f32 %v1398
        %v1406 = vmul.f32 %v1405, %v1403
        %v1407 = vxor.u32 %v1406, 2147483648
        %v1408 = vsel %vm1325, %v1407, %v1406
        %v1409 = vsub.s32 4, %v1385
        %v1410 = vsel %vm1325, %v1409, %v1385
        %v1411 = vsel %vm1324, %v1085, %v1408
        %v1412 = vsel %vm1324, 0, %v1410
        %v1413 = vcosq.f32.pop %v1411
        %v1414 = vsinq.f32.pop %v1411
        %vm1415 = vweird.f32 %v1085
        %v1416 = vadd.s32 %v1412, 3
        %v1417 = vand.u32 %v1416, 3
        %vm1418 = vcmp.lt.s32.totalorder %v1417, 2
        %vm1419 = vcmp.eq.s32.totalorder %v1417, 0
        %v1420 = vxor.u32 %v1414, 2147483648
        %v1421 = vsel %vm1419, %v1413, %v1420
        %vm1422 = vcmp.eq.s32.totalorder %v1417, 2
        %v1423 = vxor.u32 %v1413, 2147483648
        %v1424 = vsel %vm1422, %v1423, %v1414
        %v1425 = vsel %vm1418, %v1421, %v1424
        %v1426 = vsel %vm1415, nan, %v1425
        %v1427 = vand.u32 2147483647, %v1086
        %vm1428 = vcmp.le.f32.partialorder %v1427, 0.7853982
        %vm1429 = vcmp.lt.s32.totalorder %v1086, 0
        %v1430 = vand.u32 %v1086, 2139095040
        %v1431 = vshrl.u32 %v1430, 23
        %v1432 = vsub.s32 %v1431, 127
        %v1433 = vand.u32 2147483647, %v1086
        %v1434 = vand.u32 %v1433, 8388607
        %v1435 = vor.u32 %v1434, 8388608
        %v1436 = vsub.s32 0, %v1435
        %v1437 = vadd.s32 %v1432, 1
        %vm1438 = vcmp.gt.s32.totalorder %v1437, 0
        %v1439 = vsel %vm1438, %v1437, 0
        %v1440 = vshrl.u32 %v1439, 5
        %v1441 = vand.u32 %v1439, 31
        %v1442 = vsub.s32 32, %v1441
        %v1443 = vshrl.u32 683565275, %v1442
        %v1444 = vshll.u32 683565275, %v1441
        %v1445 = vshrl.u32 2475754826, %v1442
        %v1446 = vor.u32 %v1444, %v1445
        %v1447 = vshll.u32 2475754826, %v1441
        %v1448 = vshrl.u32 2131351028, %v1442
        %v1449 = vor.u32 %v1447, %v1448
        %v1450 = vshll.u32 2131351028, %v1441
        %v1451 = vshrl.u32 2102212464, %v1442
        %v1452 = vor.u32 %v1450, %v1451
        %v1453 = vshll.u32 2102212464, %v1441
        %v1454 = vshrl.u32 920167782, %v1442
        %v1455 = vor.u32 %v1453, %v1454
        %v1456 = vshll.u32 920167782, %v1441
        %v1457 = vshrl.u32 1326507024, %v1442
        %v1458 = vor.u32 %v1456, %v1457
        %vm1459 = vcmp.lt.s32.totalorder %v1440, 1
        %vm1460 = vcmp.lt.s32.totalorder %v1440, 2
        %vm1461 = vcmp.lt.s32.totalorder %v1440, 3
        %vm1462 = vcmp.lt.s32.totalorder %v1440, 4
        %v1463 = vsel %vm1459, %v1443, %v1446
        %v1464 = vsel %vm1462, %v1452, 2102212464
        %v1465 = vsel %vm1461, %v1449, %v1464
        %v1466 = vsel %vm1460, %v1463, %v1465
        %v1467 = vsel %vm1459, %v1446, %v1449
        %v1468 = vsel %vm1462, %v1455, 920167782
        %v1469 = vsel %vm1461, %v1452, %v1468
        %v1470 = vsel %vm1460, %v1467, %v1469
        %v1471 = vsel %vm1459, %v1449, %v1452
        %v1472 = vsel %vm1462, %v1458, 1326507024
        %v1473 = vsel %vm1461, %v1455, %v1472
        %v1474 = vsel %vm1460, %v1471, %v1473
        %v1475 = vshll.u32 %v1435, 8
        %v1476 = vmul.u32.u64.compose %v1475, %v1474
        %v1477 = vextract.low.u32 %v1476
        %v1478 = vextract.high.u32 %v1476
        %v1479 = vmul.u32.u64.compose %v1475, %v1470
        %v1480 = vextract.low.u32 %v1479
        %v1481 = vextract.high.u32 %v1479
        %v1482 = vmul.u32 %v1475, %v1466
        %v1483 = vadd.s32 %v1478, %v1480
        %vm1484 = vc.u32 %v1478, %v1480
        %v1485 = vadd.s32 %v1481, 1
        %v1486 = vsel %vm1484, %v1485, %v1481
        %v1487 = vadd.s32 %v1482, %v1486
        %v1488 = vadd.s32 %v1487, 536870912
        %v1489 = vshrl.u32 %v1488, 30
        %v1490 = vshll.u32 %v1489, 30
        %v1491 = vsub.s32 %v1487, %v1490
        %vm1492 = vcmp.lt.s32.totalorder %v1491, 0
        %v1493 = vsub.s32 0, %v1491
        %v1494 = vsel %vm1492, %v1493, %v1491
        %v1495 = vclz %v1494
        %v1496 = vsub.s32 %v1495, 2
        %vm1497 = vcmp.gt.s32.totalorder 0, %v1496
        %v1498 = vsel %vm1497, 0, %v1496
        %v1499 = vsub.s32 32, %v1498
        %v1500 = vshll.u32 %v1491, %v1498
        %v1501 = vshrl.u32 %v1483, %v1499
        %v1502 = vor.u32 %v1500, %v1501
        %v1503 = vsub.s32 4294967266, %v1498
        %v1504 = vadd.s32 %v1503, 127
        %v1505 = vshll.u32 %v1504, 23
        %v1506 = vor.u32 4788187, %v1505
        %v1507 = vand.u32 2147483647, %v1506
        %v1509 = vcvt.s32.f32 %v1502
        %v1510 = vmul.f32 %v1509, %v1507
        %v1511 = vxor.u32 %v1510, 2147483648
        %v1512 = vsel %vm1429, %v1511, %v1510
        %v1513 = vsub.s32 4, %v1489
        %v1514 = vsel %vm1429, %v1513, %v1489
        %v1515 = vsel %vm1428, %v1086, %v1512
        %v1516 = vsel %vm1428, 0, %v1514
        %v1517 = vcosq.f32.pop %v1515
        %v1518 = vsinq.f32.pop %v1515
        %vm1519 = vweird.f32 %v1086
        %v1520 = vadd.s32 %v1516, 3
        %v1521 = vand.u32 %v1520, 3
        %vm1522 = vcmp.lt.s32.totalorder %v1521, 2
        %vm1523 = vcmp.eq.s32.totalorder %v1521, 0
        %v1524 = vxor.u32 %v1518, 2147483648
        %v1525 = vsel %vm1523, %v1517, %v1524
        %vm1526 = vcmp.eq.s32.totalorder %v1521, 2
        %v1527 = vxor.u32 %v1517, 2147483648
        %v1528 = vsel %vm1526, %v1527, %v1518
        %v1529 = vsel %vm1522, %v1525, %v1528
        %v1530 = vsel %vm1519, nan, %v1529
        %v1531 = vand.u32 2147483647, %v1087
        %vm1532 = vcmp.le.f32.partialorder %v1531, 0.7853982
        %vm1533 = vcmp.lt.s32.totalorder %v1087, 0
        %v1534 = vand.u32 %v1087, 2139095040
        %v1535 = vshrl.u32 %v1534, 23
        %v1536 = vsub.s32 %v1535, 127
        %v1537 = vand.u32 2147483647, %v1087
        %v1538 = vand.u32 %v1537, 8388607
        %v1539 = vor.u32 %v1538, 8388608
        %v1540 = vsub.s32 0, %v1539
        %v1541 = vadd.s32 %v1536, 1
        %vm1542 = vcmp.gt.s32.totalorder %v1541, 0
        %v1543 = vsel %vm1542, %v1541, 0
        %v1544 = vshrl.u32 %v1543, 5
        %v1545 = vand.u32 %v1543, 31
        %v1546 = vsub.s32 32, %v1545
        %v1547 = vshrl.u32 683565275, %v1546
        %v1548 = vshll.u32 683565275, %v1545
        %v1549 = vshrl.u32 2475754826, %v1546
        %v1550 = vor.u32 %v1548, %v1549
        %v1551 = vshll.u32 2475754826, %v1545
        %v1552 = vshrl.u32 2131351028, %v1546
        %v1553 = vor.u32 %v1551, %v1552
        %v1554 = vshll.u32 2131351028, %v1545
        %v1555 = vshrl.u32 2102212464, %v1546
        %v1556 = vor.u32 %v1554, %v1555
        %v1557 = vshll.u32 2102212464, %v1545
        %v1558 = vshrl.u32 920167782, %v1546
        %v1559 = vor.u32 %v1557, %v1558
        %v1560 = vshll.u32 920167782, %v1545
        %v1561 = vshrl.u32 1326507024, %v1546
        %v1562 = vor.u32 %v1560, %v1561
        %vm1563 = vcmp.lt.s32.totalorder %v1544, 1
        %vm1564 = vcmp.lt.s32.totalorder %v1544, 2
        %vm1565 = vcmp.lt.s32.totalorder %v1544, 3
        %vm1566 = vcmp.lt.s32.totalorder %v1544, 4
        %v1567 = vsel %vm1563, %v1547, %v1550
        %v1568 = vsel %vm1566, %v1556, 2102212464
        %v1569 = vsel %vm1565, %v1553, %v1568
        %v1570 = vsel %vm1564, %v1567, %v1569
        %v1571 = vsel %vm1563, %v1550, %v1553
        %v1572 = vsel %vm1566, %v1559, 920167782
        %v1573 = vsel %vm1565, %v1556, %v1572
        %v1574 = vsel %vm1564, %v1571, %v1573
        %v1575 = vsel %vm1563, %v1553, %v1556
        %v1576 = vsel %vm1566, %v1562, 1326507024
        %v1577 = vsel %vm1565, %v1559, %v1576
        %v1578 = vsel %vm1564, %v1575, %v1577
        %v1579 = vshll.u32 %v1539, 8
        %v1580 = vmul.u32.u64.compose %v1579, %v1578
        %v1581 = vextract.low.u32 %v1580
        %v1582 = vextract.high.u32 %v1580
        %v1583 = vmul.u32.u64.compose %v1579, %v1574
        %v1584 = vextract.low.u32 %v1583
        %v1585 = vextract.high.u32 %v1583
        %v1586 = vmul.u32 %v1579, %v1570
        %v1587 = vadd.s32 %v1582, %v1584
        %vm1588 = vc.u32 %v1582, %v1584
        %v1589 = vadd.s32 %v1585, 1
        %v1590 = vsel %vm1588, %v1589, %v1585
        %v1591 = vadd.s32 %v1586, %v1590
        %v1592 = vadd.s32 %v1591, 536870912
        %v1593 = vshrl.u32 %v1592, 30
        %v1594 = vshll.u32 %v1593, 30
        %v1595 = vsub.s32 %v1591, %v1594
        %vm1596 = vcmp.lt.s32.totalorder %v1595, 0
        %v1597 = vsub.s32 0, %v1595
        %v1598 = vsel %vm1596, %v1597, %v1595
        %v1599 = vclz %v1598
        %v1600 = vsub.s32 %v1599, 2
        %vm1601 = vcmp.gt.s32.totalorder 0, %v1600
        %v1602 = vsel %vm1601, 0, %v1600
        %v1603 = vsub.s32 32, %v1602
        %v1604 = vshll.u32 %v1595, %v1602
        %v1605 = vshrl.u32 %v1587, %v1603
        %v1606 = vor.u32 %v1604, %v1605
        %v1607 = vsub.s32 4294967266, %v1602
        %v1608 = vadd.s32 %v1607, 127
        %v1609 = vshll.u32 %v1608, 23
        %v1610 = vor.u32 4788187, %v1609
        %v1611 = vand.u32 2147483647, %v1610
        %v1613 = vcvt.s32.f32 %v1606
        %v1614 = vmul.f32 %v1613, %v1611
        %v1615 = vxor.u32 %v1614, 2147483648
        %v1616 = vsel %vm1533, %v1615, %v1614
        %v1617 = vsub.s32 4, %v1593
        %v1618 = vsel %vm1533, %v1617, %v1593
        %v1619 = vsel %vm1532, %v1087, %v1616
        %v1620 = vsel %vm1532, 0, %v1618
        %v1621 = vcosq.f32.pop %v1619
        %v1622 = vsinq.f32.pop %v1619
        %vm1623 = vweird.f32 %v1087
        %v1624 = vadd.s32 %v1620, 3
        %v1625 = vand.u32 %v1624, 3
        %vm1626 = vcmp.lt.s32.totalorder %v1625, 2
        %vm1627 = vcmp.eq.s32.totalorder %v1625, 0
        %v1628 = vxor.u32 %v1622, 2147483648
        %v1629 = vsel %vm1627, %v1621, %v1628
        %vm1630 = vcmp.eq.s32.totalorder %v1625, 2
        %v1631 = vxor.u32 %v1621, 2147483648
        %v1632 = vsel %vm1630, %v1631, %v1622
        %v1633 = vsel %vm1626, %v1629, %v1632
        %v1634 = vsel %vm1623, nan, %v1633
        %v1635 = vand.u32 2147483647, %v1088
        %vm1636 = vcmp.le.f32.partialorder %v1635, 0.7853982
        %vm1637 = vcmp.lt.s32.totalorder %v1088, 0
        %v1638 = vand.u32 %v1088, 2139095040
        %v1639 = vshrl.u32 %v1638, 23
        %v1640 = vsub.s32 %v1639, 127
        %v1641 = vand.u32 2147483647, %v1088
        %v1642 = vand.u32 %v1641, 8388607
        %v1643 = vor.u32 %v1642, 8388608
        %v1644 = vsub.s32 0, %v1643
        %v1645 = vadd.s32 %v1640, 1
        %vm1646 = vcmp.gt.s32.totalorder %v1645, 0
        %v1647 = vsel %vm1646, %v1645, 0
        %v1648 = vshrl.u32 %v1647, 5
        %v1649 = vand.u32 %v1647, 31
        %v1650 = vsub.s32 32, %v1649
        %v1651 = vshrl.u32 683565275, %v1650
        %v1652 = vshll.u32 683565275, %v1649
        %v1653 = vshrl.u32 2475754826, %v1650
        %v1654 = vor.u32 %v1652, %v1653
        %v1655 = vshll.u32 2475754826, %v1649
        %v1656 = vshrl.u32 2131351028, %v1650
        %v1657 = vor.u32 %v1655, %v1656
        %v1658 = vshll.u32 2131351028, %v1649
        %v1659 = vshrl.u32 2102212464, %v1650
        %v1660 = vor.u32 %v1658, %v1659
        %v1661 = vshll.u32 2102212464, %v1649
        %v1662 = vshrl.u32 920167782, %v1650
        %v1663 = vor.u32 %v1661, %v1662
        %v1664 = vshll.u32 920167782, %v1649
        %v1665 = vshrl.u32 1326507024, %v1650
        %v1666 = vor.u32 %v1664, %v1665
        %vm1667 = vcmp.lt.s32.totalorder %v1648, 1
        %vm1668 = vcmp.lt.s32.totalorder %v1648, 2
        %vm1669 = vcmp.lt.s32.totalorder %v1648, 3
        %vm1670 = vcmp.lt.s32.totalorder %v1648, 4
        %v1671 = vsel %vm1667, %v1651, %v1654
        %v1672 = vsel %vm1670, %v1660, 2102212464
        %v1673 = vsel %vm1669, %v1657, %v1672
        %v1674 = vsel %vm1668, %v1671, %v1673
        %v1675 = vsel %vm1667, %v1654, %v1657
        %v1676 = vsel %vm1670, %v1663, 920167782
        %v1677 = vsel %vm1669, %v1660, %v1676
        %v1678 = vsel %vm1668, %v1675, %v1677
        %v1679 = vsel %vm1667, %v1657, %v1660
        %v1680 = vsel %vm1670, %v1666, 1326507024
        %v1681 = vsel %vm1669, %v1663, %v1680
        %v1682 = vsel %vm1668, %v1679, %v1681
        %v1683 = vshll.u32 %v1643, 8
        %v1684 = vmul.u32.u64.compose %v1683, %v1682
        %v1685 = vextract.low.u32 %v1684
        %v1686 = vextract.high.u32 %v1684
        %v1687 = vmul.u32.u64.compose %v1683, %v1678
        %v1688 = vextract.low.u32 %v1687
        %v1689 = vextract.high.u32 %v1687
        %v1690 = vmul.u32 %v1683, %v1674
        %v1691 = vadd.s32 %v1686, %v1688
        %vm1692 = vc.u32 %v1686, %v1688
        %v1693 = vadd.s32 %v1689, 1
        %v1694 = vsel %vm1692, %v1693, %v1689
        %v1695 = vadd.s32 %v1690, %v1694
        %v1696 = vadd.s32 %v1695, 536870912
        %v1697 = vshrl.u32 %v1696, 30
        %v1698 = vshll.u32 %v1697, 30
        %v1699 = vsub.s32 %v1695, %v1698
        %vm1700 = vcmp.lt.s32.totalorder %v1699, 0
        %v1701 = vsub.s32 0, %v1699
        %v1702 = vsel %vm1700, %v1701, %v1699
        %v1703 = vclz %v1702
        %v1704 = vsub.s32 %v1703, 2
        %vm1705 = vcmp.gt.s32.totalorder 0, %v1704
        %v1706 = vsel %vm1705, 0, %v1704
        %v1707 = vsub.s32 32, %v1706
        %v1708 = vshll.u32 %v1699, %v1706
        %v1709 = vshrl.u32 %v1691, %v1707
        %v1710 = vor.u32 %v1708, %v1709
        %v1711 = vsub.s32 4294967266, %v1706
        %v1712 = vadd.s32 %v1711, 127
        %v1713 = vshll.u32 %v1712, 23
        %v1714 = vor.u32 4788187, %v1713
        %v1715 = vand.u32 2147483647, %v1714
        %v1717 = vcvt.s32.f32 %v1710
        %v1718 = vmul.f32 %v1717, %v1715
        %v1719 = vxor.u32 %v1718, 2147483648
        %v1720 = vsel %vm1637, %v1719, %v1718
        %v1721 = vsub.s32 4, %v1697
        %v1722 = vsel %vm1637, %v1721, %v1697
        %v1723 = vsel %vm1636, %v1088, %v1720
        %v1724 = vsel %vm1636, 0, %v1722
        %v1725 = vcosq.f32.pop %v1723
        %v1726 = vsinq.f32.pop %v1723
        %vm1727 = vweird.f32 %v1088
        %v1728 = vadd.s32 %v1724, 3
        %v1729 = vand.u32 %v1728, 3
        %vm1730 = vcmp.lt.s32.totalorder %v1729, 2
        %vm1731 = vcmp.eq.s32.totalorder %v1729, 0
        %v1732 = vxor.u32 %v1726, 2147483648
        %v1733 = vsel %vm1731, %v1725, %v1732
        %vm1734 = vcmp.eq.s32.totalorder %v1729, 2
        %v1735 = vxor.u32 %v1725, 2147483648
        %v1736 = vsel %vm1734, %v1735, %v1726
        %v1737 = vsel %vm1730, %v1733, %v1736
        %v1738 = vsel %vm1727, nan, %v1737
        %v1739 = vand.u32 2147483647, %v1089
        %vm1740 = vcmp.le.f32.partialorder %v1739, 0.7853982
        %vm1741 = vcmp.lt.s32.totalorder %v1089, 0
        %v1742 = vand.u32 %v1089, 2139095040
        %v1743 = vshrl.u32 %v1742, 23
        %v1744 = vsub.s32 %v1743, 127
        %v1745 = vand.u32 2147483647, %v1089
        %v1746 = vand.u32 %v1745, 8388607
        %v1747 = vor.u32 %v1746, 8388608
        %v1748 = vsub.s32 0, %v1747
        %v1749 = vadd.s32 %v1744, 1
        %vm1750 = vcmp.gt.s32.totalorder %v1749, 0
        %v1751 = vsel %vm1750, %v1749, 0
        %v1752 = vshrl.u32 %v1751, 5
        %v1753 = vand.u32 %v1751, 31
        %v1754 = vsub.s32 32, %v1753
        %v1755 = vshrl.u32 683565275, %v1754
        %v1756 = vshll.u32 683565275, %v1753
        %v1757 = vshrl.u32 2475754826, %v1754
        %v1758 = vor.u32 %v1756, %v1757
        %v1759 = vshll.u32 2475754826, %v1753
        %v1760 = vshrl.u32 2131351028, %v1754
        %v1761 = vor.u32 %v1759, %v1760
        %v1762 = vshll.u32 2131351028, %v1753
        %v1763 = vshrl.u32 2102212464, %v1754
        %v1764 = vor.u32 %v1762, %v1763
        %v1765 = vshll.u32 2102212464, %v1753
        %v1766 = vshrl.u32 920167782, %v1754
        %v1767 = vor.u32 %v1765, %v1766
        %v1768 = vshll.u32 920167782, %v1753
        %v1769 = vshrl.u32 1326507024, %v1754
        %v1770 = vor.u32 %v1768, %v1769
        %vm1771 = vcmp.lt.s32.totalorder %v1752, 1
        %vm1772 = vcmp.lt.s32.totalorder %v1752, 2
        %vm1773 = vcmp.lt.s32.totalorder %v1752, 3
        %vm1774 = vcmp.lt.s32.totalorder %v1752, 4
        %v1775 = vsel %vm1771, %v1755, %v1758
        %v1776 = vsel %vm1774, %v1764, 2102212464
        %v1777 = vsel %vm1773, %v1761, %v1776
        %v1778 = vsel %vm1772, %v1775, %v1777
        %v1779 = vsel %vm1771, %v1758, %v1761
        %v1780 = vsel %vm1774, %v1767, 920167782
        %v1781 = vsel %vm1773, %v1764, %v1780
        %v1782 = vsel %vm1772, %v1779, %v1781
        %v1783 = vsel %vm1771, %v1761, %v1764
        %v1784 = vsel %vm1774, %v1770, 1326507024
        %v1785 = vsel %vm1773, %v1767, %v1784
        %v1786 = vsel %vm1772, %v1783, %v1785
        %v1787 = vshll.u32 %v1747, 8
        %v1788 = vmul.u32.u64.compose %v1787, %v1786
        %v1789 = vextract.low.u32 %v1788
        %v1790 = vextract.high.u32 %v1788
        %v1791 = vmul.u32.u64.compose %v1787, %v1782
        %v1792 = vextract.low.u32 %v1791
        %v1793 = vextract.high.u32 %v1791
        %v1794 = vmul.u32 %v1787, %v1778
        %v1795 = vadd.s32 %v1790, %v1792
        %vm1796 = vc.u32 %v1790, %v1792
        %v1797 = vadd.s32 %v1793, 1
        %v1798 = vsel %vm1796, %v1797, %v1793
        %v1799 = vadd.s32 %v1794, %v1798
        %v1800 = vadd.s32 %v1799, 536870912
        %v1801 = vshrl.u32 %v1800, 30
        %v1802 = vshll.u32 %v1801, 30
        %v1803 = vsub.s32 %v1799, %v1802
        %vm1804 = vcmp.lt.s32.totalorder %v1803, 0
        %v1805 = vsub.s32 0, %v1803
        %v1806 = vsel %vm1804, %v1805, %v1803
        %v1807 = vclz %v1806
        %v1808 = vsub.s32 %v1807, 2
        %vm1809 = vcmp.gt.s32.totalorder 0, %v1808
        %v1810 = vsel %vm1809, 0, %v1808
        %v1811 = vsub.s32 32, %v1810
        %v1812 = vshll.u32 %v1803, %v1810
        %v1813 = vshrl.u32 %v1795, %v1811
        %v1814 = vor.u32 %v1812, %v1813
        %v1815 = vsub.s32 4294967266, %v1810
        %v1816 = vadd.s32 %v1815, 127
        %v1817 = vshll.u32 %v1816, 23
        %v1818 = vor.u32 4788187, %v1817
        %v1819 = vand.u32 2147483647, %v1818
        %v1821 = vcvt.s32.f32 %v1814
        %v1822 = vmul.f32 %v1821, %v1819
        %v1823 = vxor.u32 %v1822, 2147483648
        %v1824 = vsel %vm1741, %v1823, %v1822
        %v1825 = vsub.s32 4, %v1801
        %v1826 = vsel %vm1741, %v1825, %v1801
        %v1827 = vsel %vm1740, %v1089, %v1824
        %v1828 = vsel %vm1740, 0, %v1826
        %v1829 = vcosq.f32.pop %v1827
        %v1830 = vsinq.f32.pop %v1827
        %vm1831 = vweird.f32 %v1089
        %v1832 = vadd.s32 %v1828, 3
        %v1833 = vand.u32 %v1832, 3
        %vm1834 = vcmp.lt.s32.totalorder %v1833, 2
        %vm1835 = vcmp.eq.s32.totalorder %v1833, 0
        %v1836 = vxor.u32 %v1830, 2147483648
        %v1837 = vsel %vm1835, %v1829, %v1836
        %vm1838 = vcmp.eq.s32.totalorder %v1833, 2
        %v1839 = vxor.u32 %v1829, 2147483648
        %v1840 = vsel %vm1838, %v1839, %v1830
        %v1841 = vsel %vm1834, %v1837, %v1840
        %v1842 = vsel %vm1831, nan, %v1841
        %v1843 = vand.u32 2147483647, %v1090
        %vm1844 = vcmp.le.f32.partialorder %v1843, 0.7853982
        %vm1845 = vcmp.lt.s32.totalorder %v1090, 0
        %v1846 = vand.u32 %v1090, 2139095040
        %v1847 = vshrl.u32 %v1846, 23
        %v1848 = vsub.s32 %v1847, 127
        %v1849 = vand.u32 2147483647, %v1090
        %v1850 = vand.u32 %v1849, 8388607
        %v1851 = vor.u32 %v1850, 8388608
        %v1852 = vsub.s32 0, %v1851
        %v1853 = vadd.s32 %v1848, 1
        %vm1854 = vcmp.gt.s32.totalorder %v1853, 0
        %v1855 = vsel %vm1854, %v1853, 0
        %v1856 = vshrl.u32 %v1855, 5
        %v1857 = vand.u32 %v1855, 31
        %v1858 = vsub.s32 32, %v1857
        %v1859 = vshrl.u32 683565275, %v1858
        %v1860 = vshll.u32 683565275, %v1857
        %v1861 = vshrl.u32 2475754826, %v1858
        %v1862 = vor.u32 %v1860, %v1861
        %v1863 = vshll.u32 2475754826, %v1857
        %v1864 = vshrl.u32 2131351028, %v1858
        %v1865 = vor.u32 %v1863, %v1864
        %v1866 = vshll.u32 2131351028, %v1857
        %v1867 = vshrl.u32 2102212464, %v1858
        %v1868 = vor.u32 %v1866, %v1867
        %v1869 = vshll.u32 2102212464, %v1857
        %v1870 = vshrl.u32 920167782, %v1858
        %v1871 = vor.u32 %v1869, %v1870
        %v1872 = vshll.u32 920167782, %v1857
        %v1873 = vshrl.u32 1326507024, %v1858
        %v1874 = vor.u32 %v1872, %v1873
        %vm1875 = vcmp.lt.s32.totalorder %v1856, 1
        %vm1876 = vcmp.lt.s32.totalorder %v1856, 2
        %vm1877 = vcmp.lt.s32.totalorder %v1856, 3
        %vm1878 = vcmp.lt.s32.totalorder %v1856, 4
        %v1879 = vsel %vm1875, %v1859, %v1862
        %v1880 = vsel %vm1878, %v1868, 2102212464
        %v1881 = vsel %vm1877, %v1865, %v1880
        %v1882 = vsel %vm1876, %v1879, %v1881
        %v1883 = vsel %vm1875, %v1862, %v1865
        %v1884 = vsel %vm1878, %v1871, 920167782
        %v1885 = vsel %vm1877, %v1868, %v1884
        %v1886 = vsel %vm1876, %v1883, %v1885
        %v1887 = vsel %vm1875, %v1865, %v1868
        %v1888 = vsel %vm1878, %v1874, 1326507024
        %v1889 = vsel %vm1877, %v1871, %v1888
        %v1890 = vsel %vm1876, %v1887, %v1889
        %v1891 = vshll.u32 %v1851, 8
        %v1892 = vmul.u32.u64.compose %v1891, %v1890
        %v1893 = vextract.low.u32 %v1892
        %v1894 = vextract.high.u32 %v1892
        %v1895 = vmul.u32.u64.compose %v1891, %v1886
        %v1896 = vextract.low.u32 %v1895
        %v1897 = vextract.high.u32 %v1895
        %v1898 = vmul.u32 %v1891, %v1882
        %v1899 = vadd.s32 %v1894, %v1896
        %vm1900 = vc.u32 %v1894, %v1896
        %v1901 = vadd.s32 %v1897, 1
        %v1902 = vsel %vm1900, %v1901, %v1897
        %v1903 = vadd.s32 %v1898, %v1902
        %v1904 = vadd.s32 %v1903, 536870912
        %v1905 = vshrl.u32 %v1904, 30
        %v1906 = vshll.u32 %v1905, 30
        %v1907 = vsub.s32 %v1903, %v1906
        %vm1908 = vcmp.lt.s32.totalorder %v1907, 0
        %v1909 = vsub.s32 0, %v1907
        %v1910 = vsel %vm1908, %v1909, %v1907
        %v1911 = vclz %v1910
        %v1912 = vsub.s32 %v1911, 2
        %vm1913 = vcmp.gt.s32.totalorder 0, %v1912
        %v1914 = vsel %vm1913, 0, %v1912
        %v1915 = vsub.s32 32, %v1914
        %v1916 = vshll.u32 %v1907, %v1914
        %v1917 = vshrl.u32 %v1899, %v1915
        %v1918 = vor.u32 %v1916, %v1917
        %v1919 = vsub.s32 4294967266, %v1914
        %v1920 = vadd.s32 %v1919, 127
        %v1921 = vshll.u32 %v1920, 23
        %v1922 = vor.u32 4788187, %v1921
        %v1923 = vand.u32 2147483647, %v1922
        %v1925 = vcvt.s32.f32 %v1918
        %v1926 = vmul.f32 %v1925, %v1923
        %v1927 = vxor.u32 %v1926, 2147483648
        %v1928 = vsel %vm1845, %v1927, %v1926
        %v1929 = vsub.s32 4, %v1905
        %v1930 = vsel %vm1845, %v1929, %v1905
        %v1931 = vsel %vm1844, %v1090, %v1928
        %v1932 = vsel %vm1844, 0, %v1930
        %v1933 = vcosq.f32.pop %v1931
        %v1934 = vsinq.f32.pop %v1931
        %vm1935 = vweird.f32 %v1090
        %v1936 = vadd.s32 %v1932, 3
        %v1937 = vand.u32 %v1936, 3
        %vm1938 = vcmp.lt.s32.totalorder %v1937, 2
        %vm1939 = vcmp.eq.s32.totalorder %v1937, 0
        %v1940 = vxor.u32 %v1934, 2147483648
        %v1941 = vsel %vm1939, %v1933, %v1940
        %vm1942 = vcmp.eq.s32.totalorder %v1937, 2
        %v1943 = vxor.u32 %v1933, 2147483648
        %v1944 = vsel %vm1942, %v1943, %v1934
        %v1945 = vsel %vm1938, %v1941, %v1944
        %v1946 = vsel %vm1935, nan, %v1945
        %v1947 = vand.u32 2147483647, %v1091
        %vm1948 = vcmp.le.f32.partialorder %v1947, 0.7853982
        %vm1949 = vcmp.lt.s32.totalorder %v1091, 0
        %v1950 = vand.u32 %v1091, 2139095040
        %v1951 = vshrl.u32 %v1950, 23
        %v1952 = vsub.s32 %v1951, 127
        %v1953 = vand.u32 2147483647, %v1091
        %v1954 = vand.u32 %v1953, 8388607
        %v1955 = vor.u32 %v1954, 8388608
        %v1956 = vsub.s32 0, %v1955
        %v1957 = vadd.s32 %v1952, 1
        %vm1958 = vcmp.gt.s32.totalorder %v1957, 0
        %v1959 = vsel %vm1958, %v1957, 0
        %v1960 = vshrl.u32 %v1959, 5
        %v1961 = vand.u32 %v1959, 31
        %v1962 = vsub.s32 32, %v1961
        %v1963 = vshrl.u32 683565275, %v1962
        %v1964 = vshll.u32 683565275, %v1961
        %v1965 = vshrl.u32 2475754826, %v1962
        %v1966 = vor.u32 %v1964, %v1965
        %v1967 = vshll.u32 2475754826, %v1961
        %v1968 = vshrl.u32 2131351028, %v1962
        %v1969 = vor.u32 %v1967, %v1968
        %v1970 = vshll.u32 2131351028, %v1961
        %v1971 = vshrl.u32 2102212464, %v1962
        %v1972 = vor.u32 %v1970, %v1971
        %v1973 = vshll.u32 2102212464, %v1961
        %v1974 = vshrl.u32 920167782, %v1962
        %v1975 = vor.u32 %v1973, %v1974
        %v1976 = vshll.u32 920167782, %v1961
        %v1977 = vshrl.u32 1326507024, %v1962
        %v1978 = vor.u32 %v1976, %v1977
        %vm1979 = vcmp.lt.s32.totalorder %v1960, 1
        %vm1980 = vcmp.lt.s32.totalorder %v1960, 2
        %vm1981 = vcmp.lt.s32.totalorder %v1960, 3
        %vm1982 = vcmp.lt.s32.totalorder %v1960, 4
        %v1983 = vsel %vm1979, %v1963, %v1966
        %v1984 = vsel %vm1982, %v1972, 2102212464
        %v1985 = vsel %vm1981, %v1969, %v1984
        %v1986 = vsel %vm1980, %v1983, %v1985
        %v1987 = vsel %vm1979, %v1966, %v1969
        %v1988 = vsel %vm1982, %v1975, 920167782
        %v1989 = vsel %vm1981, %v1972, %v1988
        %v1990 = vsel %vm1980, %v1987, %v1989
        %v1991 = vsel %vm1979, %v1969, %v1972
        %v1992 = vsel %vm1982, %v1978, 1326507024
        %v1993 = vsel %vm1981, %v1975, %v1992
        %v1994 = vsel %vm1980, %v1991, %v1993
        %v1995 = vshll.u32 %v1955, 8
        %v1996 = vmul.u32.u64.compose %v1995, %v1994
        %v1997 = vextract.low.u32 %v1996
        %v1998 = vextract.high.u32 %v1996
        %v1999 = vmul.u32.u64.compose %v1995, %v1990
        %v2000 = vextract.low.u32 %v1999
        %v2001 = vextract.high.u32 %v1999
        %v2002 = vmul.u32 %v1995, %v1986
        %v2003 = vadd.s32 %v1998, %v2000
        %vm2004 = vc.u32 %v1998, %v2000
        %v2005 = vadd.s32 %v2001, 1
        %v2006 = vsel %vm2004, %v2005, %v2001
        %v2007 = vadd.s32 %v2002, %v2006
        %v2008 = vadd.s32 %v2007, 536870912
        %v2009 = vshrl.u32 %v2008, 30
        %v2010 = vshll.u32 %v2009, 30
        %v2011 = vsub.s32 %v2007, %v2010
        %vm2012 = vcmp.lt.s32.totalorder %v2011, 0
        %v2013 = vsub.s32 0, %v2011
        %v2014 = vsel %vm2012, %v2013, %v2011
        %v2015 = vclz %v2014
        %v2016 = vsub.s32 %v2015, 2
        %vm2017 = vcmp.gt.s32.totalorder 0, %v2016
        %v2018 = vsel %vm2017, 0, %v2016
        %v2019 = vsub.s32 32, %v2018
        %v2020 = vshll.u32 %v2011, %v2018
        %v2021 = vshrl.u32 %v2003, %v2019
        %v2022 = vor.u32 %v2020, %v2021
        %v2023 = vsub.s32 4294967266, %v2018
        %v2024 = vadd.s32 %v2023, 127
        %v2025 = vshll.u32 %v2024, 23
        %v2026 = vor.u32 4788187, %v2025
        %v2027 = vand.u32 2147483647, %v2026
        %v2029 = vcvt.s32.f32 %v2022
        %v2030 = vmul.f32 %v2029, %v2027
        %v2031 = vxor.u32 %v2030, 2147483648
        %v2032 = vsel %vm1949, %v2031, %v2030
        %v2033 = vsub.s32 4, %v2009
        %v2034 = vsel %vm1949, %v2033, %v2009
        %v2035 = vsel %vm1948, %v1091, %v2032
        %v2036 = vsel %vm1948, 0, %v2034
        %v2037 = vcosq.f32.pop %v2035
        %v2038 = vsinq.f32.pop %v2035
        %vm2039 = vweird.f32 %v1091
        %v2040 = vadd.s32 %v2036, 3
        %v2041 = vand.u32 %v2040, 3
        %vm2042 = vcmp.lt.s32.totalorder %v2041, 2
        %vm2043 = vcmp.eq.s32.totalorder %v2041, 0
        %v2044 = vxor.u32 %v2038, 2147483648
        %v2045 = vsel %vm2043, %v2037, %v2044
        %vm2046 = vcmp.eq.s32.totalorder %v2041, 2
        %v2047 = vxor.u32 %v2037, 2147483648
        %v2048 = vsel %vm2046, %v2047, %v2038
        %v2049 = vsel %vm2042, %v2045, %v2048
        %v2050 = vsel %vm2039, nan, %v2049
        %v2051 = vand.u32 2147483647, %v1092
        %vm2052 = vcmp.le.f32.partialorder %v2051, 0.7853982
        %vm2053 = vcmp.lt.s32.totalorder %v1092, 0
        %v2054 = vand.u32 %v1092, 2139095040
        %v2055 = vshrl.u32 %v2054, 23
        %v2056 = vsub.s32 %v2055, 127
        %v2057 = vand.u32 2147483647, %v1092
        %v2058 = vand.u32 %v2057, 8388607
        %v2059 = vor.u32 %v2058, 8388608
        %v2060 = vsub.s32 0, %v2059
        %v2061 = vadd.s32 %v2056, 1
        %vm2062 = vcmp.gt.s32.totalorder %v2061, 0
        %v2063 = vsel %vm2062, %v2061, 0
        %v2064 = vshrl.u32 %v2063, 5
        %v2065 = vand.u32 %v2063, 31
        %v2066 = vsub.s32 32, %v2065
        %v2067 = vshrl.u32 683565275, %v2066
        %v2068 = vshll.u32 683565275, %v2065
        %v2069 = vshrl.u32 2475754826, %v2066
        %v2070 = vor.u32 %v2068, %v2069
        %v2071 = vshll.u32 2475754826, %v2065
        %v2072 = vshrl.u32 2131351028, %v2066
        %v2073 = vor.u32 %v2071, %v2072
        %v2074 = vshll.u32 2131351028, %v2065
        %v2075 = vshrl.u32 2102212464, %v2066
        %v2076 = vor.u32 %v2074, %v2075
        %v2077 = vshll.u32 2102212464, %v2065
        %v2078 = vshrl.u32 920167782, %v2066
        %v2079 = vor.u32 %v2077, %v2078
        %v2080 = vshll.u32 920167782, %v2065
        %v2081 = vshrl.u32 1326507024, %v2066
        %v2082 = vor.u32 %v2080, %v2081
        %vm2083 = vcmp.lt.s32.totalorder %v2064, 1
        %vm2084 = vcmp.lt.s32.totalorder %v2064, 2
        %vm2085 = vcmp.lt.s32.totalorder %v2064, 3
        %vm2086 = vcmp.lt.s32.totalorder %v2064, 4
        %v2087 = vsel %vm2083, %v2067, %v2070
        %v2088 = vsel %vm2086, %v2076, 2102212464
        %v2089 = vsel %vm2085, %v2073, %v2088
        %v2090 = vsel %vm2084, %v2087, %v2089
        %v2091 = vsel %vm2083, %v2070, %v2073
        %v2092 = vsel %vm2086, %v2079, 920167782
        %v2093 = vsel %vm2085, %v2076, %v2092
        %v2094 = vsel %vm2084, %v2091, %v2093
        %v2095 = vsel %vm2083, %v2073, %v2076
        %v2096 = vsel %vm2086, %v2082, 1326507024
        %v2097 = vsel %vm2085, %v2079, %v2096
        %v2098 = vsel %vm2084, %v2095, %v2097
        %v2099 = vshll.u32 %v2059, 8
        %v2100 = vmul.u32.u64.compose %v2099, %v2098
        %v2101 = vextract.low.u32 %v2100
        %v2102 = vextract.high.u32 %v2100
        %v2103 = vmul.u32.u64.compose %v2099, %v2094
        %v2104 = vextract.low.u32 %v2103
        %v2105 = vextract.high.u32 %v2103
        %v2106 = vmul.u32 %v2099, %v2090
        %v2107 = vadd.s32 %v2102, %v2104
        %vm2108 = vc.u32 %v2102, %v2104
        %v2109 = vadd.s32 %v2105, 1
        %v2110 = vsel %vm2108, %v2109, %v2105
        %v2111 = vadd.s32 %v2106, %v2110
        %v2112 = vadd.s32 %v2111, 536870912
        %v2113 = vshrl.u32 %v2112, 30
        %v2114 = vshll.u32 %v2113, 30
        %v2115 = vsub.s32 %v2111, %v2114
        %vm2116 = vcmp.lt.s32.totalorder %v2115, 0
        %v2117 = vsub.s32 0, %v2115
        %v2118 = vsel %vm2116, %v2117, %v2115
        %v2119 = vclz %v2118
        %v2120 = vsub.s32 %v2119, 2
        %vm2121 = vcmp.gt.s32.totalorder 0, %v2120
        %v2122 = vsel %vm2121, 0, %v2120
        %v2123 = vsub.s32 32, %v2122
        %v2124 = vshll.u32 %v2115, %v2122
        %v2125 = vshrl.u32 %v2107, %v2123
        %v2126 = vor.u32 %v2124, %v2125
        %v2127 = vsub.s32 4294967266, %v2122
        %v2128 = vadd.s32 %v2127, 127
        %v2129 = vshll.u32 %v2128, 23
        %v2130 = vor.u32 4788187, %v2129
        %v2131 = vand.u32 2147483647, %v2130
        %v2133 = vcvt.s32.f32 %v2126
        %v2134 = vmul.f32 %v2133, %v2131
        %v2135 = vxor.u32 %v2134, 2147483648
        %v2136 = vsel %vm2053, %v2135, %v2134
        %v2137 = vsub.s32 4, %v2113
        %v2138 = vsel %vm2053, %v2137, %v2113
        %v2139 = vsel %vm2052, %v1092, %v2136
        %v2140 = vsel %vm2052, 0, %v2138
        %v2141 = vcosq.f32.pop %v2139
        %v2142 = vsinq.f32.pop %v2139
        %vm2143 = vweird.f32 %v1092
        %v2144 = vadd.s32 %v2140, 3
        %v2145 = vand.u32 %v2144, 3
        %vm2146 = vcmp.lt.s32.totalorder %v2145, 2
        %vm2147 = vcmp.eq.s32.totalorder %v2145, 0
        %v2148 = vxor.u32 %v2142, 2147483648
        %v2149 = vsel %vm2147, %v2141, %v2148
        %vm2150 = vcmp.eq.s32.totalorder %v2145, 2
        %v2151 = vxor.u32 %v2141, 2147483648
        %v2152 = vsel %vm2150, %v2151, %v2142
        %v2153 = vsel %vm2146, %v2149, %v2152
        %v2154 = vsel %vm2143, nan, %v2153
        %v2155 = vand.u32 2147483647, %v1093
        %vm2156 = vcmp.le.f32.partialorder %v2155, 0.7853982
        %vm2157 = vcmp.lt.s32.totalorder %v1093, 0
        %v2158 = vand.u32 %v1093, 2139095040
        %v2159 = vshrl.u32 %v2158, 23
        %v2160 = vsub.s32 %v2159, 127
        %v2161 = vand.u32 2147483647, %v1093
        %v2162 = vand.u32 %v2161, 8388607
        %v2163 = vor.u32 %v2162, 8388608
        %v2164 = vsub.s32 0, %v2163
        %v2165 = vadd.s32 %v2160, 1
        %vm2166 = vcmp.gt.s32.totalorder %v2165, 0
        %v2167 = vsel %vm2166, %v2165, 0
        %v2168 = vshrl.u32 %v2167, 5
        %v2169 = vand.u32 %v2167, 31
        %v2170 = vsub.s32 32, %v2169
        %v2171 = vshrl.u32 683565275, %v2170
        %v2172 = vshll.u32 683565275, %v2169
        %v2173 = vshrl.u32 2475754826, %v2170
        %v2174 = vor.u32 %v2172, %v2173
        %v2175 = vshll.u32 2475754826, %v2169
        %v2176 = vshrl.u32 2131351028, %v2170
        %v2177 = vor.u32 %v2175, %v2176
        %v2178 = vshll.u32 2131351028, %v2169
        %v2179 = vshrl.u32 2102212464, %v2170
        %v2180 = vor.u32 %v2178, %v2179
        %v2181 = vshll.u32 2102212464, %v2169
        %v2182 = vshrl.u32 920167782, %v2170
        %v2183 = vor.u32 %v2181, %v2182
        %v2184 = vshll.u32 920167782, %v2169
        %v2185 = vshrl.u32 1326507024, %v2170
        %v2186 = vor.u32 %v2184, %v2185
        %vm2187 = vcmp.lt.s32.totalorder %v2168, 1
        %vm2188 = vcmp.lt.s32.totalorder %v2168, 2
        %vm2189 = vcmp.lt.s32.totalorder %v2168, 3
        %vm2190 = vcmp.lt.s32.totalorder %v2168, 4
        %v2191 = vsel %vm2187, %v2171, %v2174
        %v2192 = vsel %vm2190, %v2180, 2102212464
        %v2193 = vsel %vm2189, %v2177, %v2192
        %v2194 = vsel %vm2188, %v2191, %v2193
        %v2195 = vsel %vm2187, %v2174, %v2177
        %v2196 = vsel %vm2190, %v2183, 920167782
        %v2197 = vsel %vm2189, %v2180, %v2196
        %v2198 = vsel %vm2188, %v2195, %v2197
        %v2199 = vsel %vm2187, %v2177, %v2180
        %v2200 = vsel %vm2190, %v2186, 1326507024
        %v2201 = vsel %vm2189, %v2183, %v2200
        %v2202 = vsel %vm2188, %v2199, %v2201
        %v2203 = vshll.u32 %v2163, 8
        %v2204 = vmul.u32.u64.compose %v2203, %v2202
        %v2205 = vextract.low.u32 %v2204
        %v2206 = vextract.high.u32 %v2204
        %v2207 = vmul.u32.u64.compose %v2203, %v2198
        %v2208 = vextract.low.u32 %v2207
        %v2209 = vextract.high.u32 %v2207
        %v2210 = vmul.u32 %v2203, %v2194
        %v2211 = vadd.s32 %v2206, %v2208
        %vm2212 = vc.u32 %v2206, %v2208
        %v2213 = vadd.s32 %v2209, 1
        %v2214 = vsel %vm2212, %v2213, %v2209
        %v2215 = vadd.s32 %v2210, %v2214
        %v2216 = vadd.s32 %v2215, 536870912
        %v2217 = vshrl.u32 %v2216, 30
        %v2218 = vshll.u32 %v2217, 30
        %v2219 = vsub.s32 %v2215, %v2218
        %vm2220 = vcmp.lt.s32.totalorder %v2219, 0
        %v2221 = vsub.s32 0, %v2219
        %v2222 = vsel %vm2220, %v2221, %v2219
        %v2223 = vclz %v2222
        %v2224 = vsub.s32 %v2223, 2
        %vm2225 = vcmp.gt.s32.totalorder 0, %v2224
        %v2226 = vsel %vm2225, 0, %v2224
        %v2227 = vsub.s32 32, %v2226
        %v2228 = vshll.u32 %v2219, %v2226
        %v2229 = vshrl.u32 %v2211, %v2227
        %v2230 = vor.u32 %v2228, %v2229
        %v2231 = vsub.s32 4294967266, %v2226
        %v2232 = vadd.s32 %v2231, 127
        %v2233 = vshll.u32 %v2232, 23
        %v2234 = vor.u32 4788187, %v2233
        %v2235 = vand.u32 2147483647, %v2234
        %v2237 = vcvt.s32.f32 %v2230
        %v2238 = vmul.f32 %v2237, %v2235
        %v2239 = vxor.u32 %v2238, 2147483648
        %v2240 = vsel %vm2157, %v2239, %v2238
        %v2241 = vsub.s32 4, %v2217
        %v2242 = vsel %vm2157, %v2241, %v2217
        %v2243 = vsel %vm2156, %v1093, %v2240
        %v2244 = vsel %vm2156, 0, %v2242
        %v2245 = vcosq.f32.pop %v2243
        %v2246 = vsinq.f32.pop %v2243
        %vm2247 = vweird.f32 %v1093
        %v2248 = vadd.s32 %v2244, 3
        %v2249 = vand.u32 %v2248, 3
        %vm2250 = vcmp.lt.s32.totalorder %v2249, 2
        %vm2251 = vcmp.eq.s32.totalorder %v2249, 0
        %v2252 = vxor.u32 %v2246, 2147483648
        %v2253 = vsel %vm2251, %v2245, %v2252
        %vm2254 = vcmp.eq.s32.totalorder %v2249, 2
        %v2255 = vxor.u32 %v2245, 2147483648
        %v2256 = vsel %vm2254, %v2255, %v2246
        %v2257 = vsel %vm2250, %v2253, %v2256
        %v2258 = vsel %vm2247, nan, %v2257
        %v2259 = vand.u32 2147483647, %v1094
        %vm2260 = vcmp.le.f32.partialorder %v2259, 0.7853982
        %vm2261 = vcmp.lt.s32.totalorder %v1094, 0
        %v2262 = vand.u32 %v1094, 2139095040
        %v2263 = vshrl.u32 %v2262, 23
        %v2264 = vsub.s32 %v2263, 127
        %v2265 = vand.u32 2147483647, %v1094
        %v2266 = vand.u32 %v2265, 8388607
        %v2267 = vor.u32 %v2266, 8388608
        %v2268 = vsub.s32 0, %v2267
        %v2269 = vadd.s32 %v2264, 1
        %vm2270 = vcmp.gt.s32.totalorder %v2269, 0
        %v2271 = vsel %vm2270, %v2269, 0
        %v2272 = vshrl.u32 %v2271, 5
        %v2273 = vand.u32 %v2271, 31
        %v2274 = vsub.s32 32, %v2273
        %v2275 = vshrl.u32 683565275, %v2274
        %v2276 = vshll.u32 683565275, %v2273
        %v2277 = vshrl.u32 2475754826, %v2274
        %v2278 = vor.u32 %v2276, %v2277
        %v2279 = vshll.u32 2475754826, %v2273
        %v2280 = vshrl.u32 2131351028, %v2274
        %v2281 = vor.u32 %v2279, %v2280
        %v2282 = vshll.u32 2131351028, %v2273
        %v2283 = vshrl.u32 2102212464, %v2274
        %v2284 = vor.u32 %v2282, %v2283
        %v2285 = vshll.u32 2102212464, %v2273
        %v2286 = vshrl.u32 920167782, %v2274
        %v2287 = vor.u32 %v2285, %v2286
        %v2288 = vshll.u32 920167782, %v2273
        %v2289 = vshrl.u32 1326507024, %v2274
        %v2290 = vor.u32 %v2288, %v2289
        %vm2291 = vcmp.lt.s32.totalorder %v2272, 1
        %vm2292 = vcmp.lt.s32.totalorder %v2272, 2
        %vm2293 = vcmp.lt.s32.totalorder %v2272, 3
        %vm2294 = vcmp.lt.s32.totalorder %v2272, 4
        %v2295 = vsel %vm2291, %v2275, %v2278
        %v2296 = vsel %vm2294, %v2284, 2102212464
        %v2297 = vsel %vm2293, %v2281, %v2296
        %v2298 = vsel %vm2292, %v2295, %v2297
        %v2299 = vsel %vm2291, %v2278, %v2281
        %v2300 = vsel %vm2294, %v2287, 920167782
        %v2301 = vsel %vm2293, %v2284, %v2300
        %v2302 = vsel %vm2292, %v2299, %v2301
        %v2303 = vsel %vm2291, %v2281, %v2284
        %v2304 = vsel %vm2294, %v2290, 1326507024
        %v2305 = vsel %vm2293, %v2287, %v2304
        %v2306 = vsel %vm2292, %v2303, %v2305
        %v2307 = vshll.u32 %v2267, 8
        %v2308 = vmul.u32.u64.compose %v2307, %v2306
        %v2309 = vextract.low.u32 %v2308
        %v2310 = vextract.high.u32 %v2308
        %v2311 = vmul.u32.u64.compose %v2307, %v2302
        %v2312 = vextract.low.u32 %v2311
        %v2313 = vextract.high.u32 %v2311
        %v2314 = vmul.u32 %v2307, %v2298
        %v2315 = vadd.s32 %v2310, %v2312
        %vm2316 = vc.u32 %v2310, %v2312
        %v2317 = vadd.s32 %v2313, 1
        %v2318 = vsel %vm2316, %v2317, %v2313
        %v2319 = vadd.s32 %v2314, %v2318
        %v2320 = vadd.s32 %v2319, 536870912
        %v2321 = vshrl.u32 %v2320, 30
        %v2322 = vshll.u32 %v2321, 30
        %v2323 = vsub.s32 %v2319, %v2322
        %vm2324 = vcmp.lt.s32.totalorder %v2323, 0
        %v2325 = vsub.s32 0, %v2323
        %v2326 = vsel %vm2324, %v2325, %v2323
        %v2327 = vclz %v2326
        %v2328 = vsub.s32 %v2327, 2
        %vm2329 = vcmp.gt.s32.totalorder 0, %v2328
        %v2330 = vsel %vm2329, 0, %v2328
        %v2331 = vsub.s32 32, %v2330
        %v2332 = vshll.u32 %v2323, %v2330
        %v2333 = vshrl.u32 %v2315, %v2331
        %v2334 = vor.u32 %v2332, %v2333
        %v2335 = vsub.s32 4294967266, %v2330
        %v2336 = vadd.s32 %v2335, 127
        %v2337 = vshll.u32 %v2336, 23
        %v2338 = vor.u32 4788187, %v2337
        %v2339 = vand.u32 2147483647, %v2338
        %v2341 = vcvt.s32.f32 %v2334
        %v2342 = vmul.f32 %v2341, %v2339
        %v2343 = vxor.u32 %v2342, 2147483648
        %v2344 = vsel %vm2261, %v2343, %v2342
        %v2345 = vsub.s32 4, %v2321
        %v2346 = vsel %vm2261, %v2345, %v2321
        %v2347 = vsel %vm2260, %v1094, %v2344
        %v2348 = vsel %vm2260, 0, %v2346
        %v2349 = vcosq.f32.pop %v2347
        %v2350 = vsinq.f32.pop %v2347
        %vm2351 = vweird.f32 %v1094
        %v2352 = vadd.s32 %v2348, 3
        %v2353 = vand.u32 %v2352, 3
        %vm2354 = vcmp.lt.s32.totalorder %v2353, 2
        %vm2355 = vcmp.eq.s32.totalorder %v2353, 0
        %v2356 = vxor.u32 %v2350, 2147483648
        %v2357 = vsel %vm2355, %v2349, %v2356
        %vm2358 = vcmp.eq.s32.totalorder %v2353, 2
        %v2359 = vxor.u32 %v2349, 2147483648
        %v2360 = vsel %vm2358, %v2359, %v2350
        %v2361 = vsel %vm2354, %v2357, %v2360
        %v2362 = vsel %vm2351, nan, %v2361
        %v2363 = vand.u32 2147483647, %v1095
        %vm2364 = vcmp.le.f32.partialorder %v2363, 0.7853982
        %vm2365 = vcmp.lt.s32.totalorder %v1095, 0
        %v2366 = vand.u32 %v1095, 2139095040
        %v2367 = vshrl.u32 %v2366, 23
        %v2368 = vsub.s32 %v2367, 127
        %v2369 = vand.u32 2147483647, %v1095
        %v2370 = vand.u32 %v2369, 8388607
        %v2371 = vor.u32 %v2370, 8388608
        %v2372 = vsub.s32 0, %v2371
        %v2373 = vadd.s32 %v2368, 1
        %vm2374 = vcmp.gt.s32.totalorder %v2373, 0
        %v2375 = vsel %vm2374, %v2373, 0
        %v2376 = vshrl.u32 %v2375, 5
        %v2377 = vand.u32 %v2375, 31
        %v2378 = vsub.s32 32, %v2377
        %v2379 = vshrl.u32 683565275, %v2378
        %v2380 = vshll.u32 683565275, %v2377
        %v2381 = vshrl.u32 2475754826, %v2378
        %v2382 = vor.u32 %v2380, %v2381
        %v2383 = vshll.u32 2475754826, %v2377
        %v2384 = vshrl.u32 2131351028, %v2378
        %v2385 = vor.u32 %v2383, %v2384
        %v2386 = vshll.u32 2131351028, %v2377
        %v2387 = vshrl.u32 2102212464, %v2378
        %v2388 = vor.u32 %v2386, %v2387
        %v2389 = vshll.u32 2102212464, %v2377
        %v2390 = vshrl.u32 920167782, %v2378
        %v2391 = vor.u32 %v2389, %v2390
        %v2392 = vshll.u32 920167782, %v2377
        %v2393 = vshrl.u32 1326507024, %v2378
        %v2394 = vor.u32 %v2392, %v2393
        %vm2395 = vcmp.lt.s32.totalorder %v2376, 1
        %vm2396 = vcmp.lt.s32.totalorder %v2376, 2
        %vm2397 = vcmp.lt.s32.totalorder %v2376, 3
        %vm2398 = vcmp.lt.s32.totalorder %v2376, 4
        %v2399 = vsel %vm2395, %v2379, %v2382
        %v2400 = vsel %vm2398, %v2388, 2102212464
        %v2401 = vsel %vm2397, %v2385, %v2400
        %v2402 = vsel %vm2396, %v2399, %v2401
        %v2403 = vsel %vm2395, %v2382, %v2385
        %v2404 = vsel %vm2398, %v2391, 920167782
        %v2405 = vsel %vm2397, %v2388, %v2404
        %v2406 = vsel %vm2396, %v2403, %v2405
        %v2407 = vsel %vm2395, %v2385, %v2388
        %v2408 = vsel %vm2398, %v2394, 1326507024
        %v2409 = vsel %vm2397, %v2391, %v2408
        %v2410 = vsel %vm2396, %v2407, %v2409
        %v2411 = vshll.u32 %v2371, 8
        %v2412 = vmul.u32.u64.compose %v2411, %v2410
        %v2413 = vextract.low.u32 %v2412
        %v2414 = vextract.high.u32 %v2412
        %v2415 = vmul.u32.u64.compose %v2411, %v2406
        %v2416 = vextract.low.u32 %v2415
        %v2417 = vextract.high.u32 %v2415
        %v2418 = vmul.u32 %v2411, %v2402
        %v2419 = vadd.s32 %v2414, %v2416
        %vm2420 = vc.u32 %v2414, %v2416
        %v2421 = vadd.s32 %v2417, 1
        %v2422 = vsel %vm2420, %v2421, %v2417
        %v2423 = vadd.s32 %v2418, %v2422
        %v2424 = vadd.s32 %v2423, 536870912
        %v2425 = vshrl.u32 %v2424, 30
        %v2426 = vshll.u32 %v2425, 30
        %v2427 = vsub.s32 %v2423, %v2426
        %vm2428 = vcmp.lt.s32.totalorder %v2427, 0
        %v2429 = vsub.s32 0, %v2427
        %v2430 = vsel %vm2428, %v2429, %v2427
        %v2431 = vclz %v2430
        %v2432 = vsub.s32 %v2431, 2
        %vm2433 = vcmp.gt.s32.totalorder 0, %v2432
        %v2434 = vsel %vm2433, 0, %v2432
        %v2435 = vsub.s32 32, %v2434
        %v2436 = vshll.u32 %v2427, %v2434
        %v2437 = vshrl.u32 %v2419, %v2435
        %v2438 = vor.u32 %v2436, %v2437
        %v2439 = vsub.s32 4294967266, %v2434
        %v2440 = vadd.s32 %v2439, 127
        %v2441 = vshll.u32 %v2440, 23
        %v2442 = vor.u32 4788187, %v2441
        %v2443 = vand.u32 2147483647, %v2442
        %v2445 = vcvt.s32.f32 %v2438
        %v2446 = vmul.f32 %v2445, %v2443
        %v2447 = vxor.u32 %v2446, 2147483648
        %v2448 = vsel %vm2365, %v2447, %v2446
        %v2449 = vsub.s32 4, %v2425
        %v2450 = vsel %vm2365, %v2449, %v2425
        %v2451 = vsel %vm2364, %v1095, %v2448
        %v2452 = vsel %vm2364, 0, %v2450
        %v2453 = vcosq.f32.pop %v2451
        %v2454 = vsinq.f32.pop %v2451
        %vm2455 = vweird.f32 %v1095
        %v2456 = vadd.s32 %v2452, 3
        %v2457 = vand.u32 %v2456, 3
        %vm2458 = vcmp.lt.s32.totalorder %v2457, 2
        %vm2459 = vcmp.eq.s32.totalorder %v2457, 0
        %v2460 = vxor.u32 %v2454, 2147483648
        %v2461 = vsel %vm2459, %v2453, %v2460
        %vm2462 = vcmp.eq.s32.totalorder %v2457, 2
        %v2463 = vxor.u32 %v2453, 2147483648
        %v2464 = vsel %vm2462, %v2463, %v2454
        %v2465 = vsel %vm2458, %v2461, %v2464
        %v2466 = vsel %vm2455, nan, %v2465
        %v2467 = vand.u32 2147483647, %v1096
        %vm2468 = vcmp.le.f32.partialorder %v2467, 0.7853982
        %vm2469 = vcmp.lt.s32.totalorder %v1096, 0
        %v2470 = vand.u32 %v1096, 2139095040
        %v2471 = vshrl.u32 %v2470, 23
        %v2472 = vsub.s32 %v2471, 127
        %v2473 = vand.u32 2147483647, %v1096
        %v2474 = vand.u32 %v2473, 8388607
        %v2475 = vor.u32 %v2474, 8388608
        %v2476 = vsub.s32 0, %v2475
        %v2477 = vadd.s32 %v2472, 1
        %vm2478 = vcmp.gt.s32.totalorder %v2477, 0
        %v2479 = vsel %vm2478, %v2477, 0
        %v2480 = vshrl.u32 %v2479, 5
        %v2481 = vand.u32 %v2479, 31
        %v2482 = vsub.s32 32, %v2481
        %v2483 = vshrl.u32 683565275, %v2482
        %v2484 = vshll.u32 683565275, %v2481
        %v2485 = vshrl.u32 2475754826, %v2482
        %v2486 = vor.u32 %v2484, %v2485
        %v2487 = vshll.u32 2475754826, %v2481
        %v2488 = vshrl.u32 2131351028, %v2482
        %v2489 = vor.u32 %v2487, %v2488
        %v2490 = vshll.u32 2131351028, %v2481
        %v2491 = vshrl.u32 2102212464, %v2482
        %v2492 = vor.u32 %v2490, %v2491
        %v2493 = vshll.u32 2102212464, %v2481
        %v2494 = vshrl.u32 920167782, %v2482
        %v2495 = vor.u32 %v2493, %v2494
        %v2496 = vshll.u32 920167782, %v2481
        %v2497 = vshrl.u32 1326507024, %v2482
        %v2498 = vor.u32 %v2496, %v2497
        %vm2499 = vcmp.lt.s32.totalorder %v2480, 1
        %vm2500 = vcmp.lt.s32.totalorder %v2480, 2
        %vm2501 = vcmp.lt.s32.totalorder %v2480, 3
        %vm2502 = vcmp.lt.s32.totalorder %v2480, 4
        %v2503 = vsel %vm2499, %v2483, %v2486
        %v2504 = vsel %vm2502, %v2492, 2102212464
        %v2505 = vsel %vm2501, %v2489, %v2504
        %v2506 = vsel %vm2500, %v2503, %v2505
        %v2507 = vsel %vm2499, %v2486, %v2489
        %v2508 = vsel %vm2502, %v2495, 920167782
        %v2509 = vsel %vm2501, %v2492, %v2508
        %v2510 = vsel %vm2500, %v2507, %v2509
        %v2511 = vsel %vm2499, %v2489, %v2492
        %v2512 = vsel %vm2502, %v2498, 1326507024
        %v2513 = vsel %vm2501, %v2495, %v2512
        %v2514 = vsel %vm2500, %v2511, %v2513
        %v2515 = vshll.u32 %v2475, 8
        %v2516 = vmul.u32.u64.compose %v2515, %v2514
        %v2517 = vextract.low.u32 %v2516
        %v2518 = vextract.high.u32 %v2516
        %v2519 = vmul.u32.u64.compose %v2515, %v2510
        %v2520 = vextract.low.u32 %v2519
        %v2521 = vextract.high.u32 %v2519
        %v2522 = vmul.u32 %v2515, %v2506
        %v2523 = vadd.s32 %v2518, %v2520
        %vm2524 = vc.u32 %v2518, %v2520
        %v2525 = vadd.s32 %v2521, 1
        %v2526 = vsel %vm2524, %v2525, %v2521
        %v2527 = vadd.s32 %v2522, %v2526
        %v2528 = vadd.s32 %v2527, 536870912
        %v2529 = vshrl.u32 %v2528, 30
        %v2530 = vshll.u32 %v2529, 30
        %v2531 = vsub.s32 %v2527, %v2530
        %vm2532 = vcmp.lt.s32.totalorder %v2531, 0
        %v2533 = vsub.s32 0, %v2531
        %v2534 = vsel %vm2532, %v2533, %v2531
        %v2535 = vclz %v2534
        %v2536 = vsub.s32 %v2535, 2
        %vm2537 = vcmp.gt.s32.totalorder 0, %v2536
        %v2538 = vsel %vm2537, 0, %v2536
        %v2539 = vsub.s32 32, %v2538
        %v2540 = vshll.u32 %v2531, %v2538
        %v2541 = vshrl.u32 %v2523, %v2539
        %v2542 = vor.u32 %v2540, %v2541
        %v2543 = vsub.s32 4294967266, %v2538
        %v2544 = vadd.s32 %v2543, 127
        %v2545 = vshll.u32 %v2544, 23
        %v2546 = vor.u32 4788187, %v2545
        %v2547 = vand.u32 2147483647, %v2546
        %v2549 = vcvt.s32.f32 %v2542
        %v2550 = vmul.f32 %v2549, %v2547
        %v2551 = vxor.u32 %v2550, 2147483648
        %v2552 = vsel %vm2469, %v2551, %v2550
        %v2553 = vsub.s32 4, %v2529
        %v2554 = vsel %vm2469, %v2553, %v2529
        %v2555 = vsel %vm2468, %v1096, %v2552
        %v2556 = vsel %vm2468, 0, %v2554
        %v2557 = vcosq.f32.pop %v2555
        %v2558 = vsinq.f32.pop %v2555
        %vm2559 = vweird.f32 %v1096
        %v2560 = vadd.s32 %v2556, 3
        %v2561 = vand.u32 %v2560, 3
        %vm2562 = vcmp.lt.s32.totalorder %v2561, 2
        %vm2563 = vcmp.eq.s32.totalorder %v2561, 0
        %v2564 = vxor.u32 %v2558, 2147483648
        %v2565 = vsel %vm2563, %v2557, %v2564
        %vm2566 = vcmp.eq.s32.totalorder %v2561, 2
        %v2567 = vxor.u32 %v2557, 2147483648
        %v2568 = vsel %vm2566, %v2567, %v2558
        %v2569 = vsel %vm2562, %v2565, %v2568
        %v2570 = vsel %vm2559, nan, %v2569
        %v2571 = vand.u32 2147483647, %v1097
        %vm2572 = vcmp.le.f32.partialorder %v2571, 0.7853982
        %vm2573 = vcmp.lt.s32.totalorder %v1097, 0
        %v2574 = vand.u32 %v1097, 2139095040
        %v2575 = vshrl.u32 %v2574, 23
        %v2576 = vsub.s32 %v2575, 127
        %v2577 = vand.u32 2147483647, %v1097
        %v2578 = vand.u32 %v2577, 8388607
        %v2579 = vor.u32 %v2578, 8388608
        %v2580 = vsub.s32 0, %v2579
        %v2581 = vadd.s32 %v2576, 1
        %vm2582 = vcmp.gt.s32.totalorder %v2581, 0
        %v2583 = vsel %vm2582, %v2581, 0
        %v2584 = vshrl.u32 %v2583, 5
        %v2585 = vand.u32 %v2583, 31
        %v2586 = vsub.s32 32, %v2585
        %v2587 = vshrl.u32 683565275, %v2586
        %v2588 = vshll.u32 683565275, %v2585
        %v2589 = vshrl.u32 2475754826, %v2586
        %v2590 = vor.u32 %v2588, %v2589
        %v2591 = vshll.u32 2475754826, %v2585
        %v2592 = vshrl.u32 2131351028, %v2586
        %v2593 = vor.u32 %v2591, %v2592
        %v2594 = vshll.u32 2131351028, %v2585
        %v2595 = vshrl.u32 2102212464, %v2586
        %v2596 = vor.u32 %v2594, %v2595
        %v2597 = vshll.u32 2102212464, %v2585
        %v2598 = vshrl.u32 920167782, %v2586
        %v2599 = vor.u32 %v2597, %v2598
        %v2600 = vshll.u32 920167782, %v2585
        %v2601 = vshrl.u32 1326507024, %v2586
        %v2602 = vor.u32 %v2600, %v2601
        %vm2603 = vcmp.lt.s32.totalorder %v2584, 1
        %vm2604 = vcmp.lt.s32.totalorder %v2584, 2
        %vm2605 = vcmp.lt.s32.totalorder %v2584, 3
        %vm2606 = vcmp.lt.s32.totalorder %v2584, 4
        %v2607 = vsel %vm2603, %v2587, %v2590
        %v2608 = vsel %vm2606, %v2596, 2102212464
        %v2609 = vsel %vm2605, %v2593, %v2608
        %v2610 = vsel %vm2604, %v2607, %v2609
        %v2611 = vsel %vm2603, %v2590, %v2593
        %v2612 = vsel %vm2606, %v2599, 920167782
        %v2613 = vsel %vm2605, %v2596, %v2612
        %v2614 = vsel %vm2604, %v2611, %v2613
        %v2615 = vsel %vm2603, %v2593, %v2596
        %v2616 = vsel %vm2606, %v2602, 1326507024
        %v2617 = vsel %vm2605, %v2599, %v2616
        %v2618 = vsel %vm2604, %v2615, %v2617
        %v2619 = vshll.u32 %v2579, 8
        %v2620 = vmul.u32.u64.compose %v2619, %v2618
        %v2621 = vextract.low.u32 %v2620
        %v2622 = vextract.high.u32 %v2620
        %v2623 = vmul.u32.u64.compose %v2619, %v2614
        %v2624 = vextract.low.u32 %v2623
        %v2625 = vextract.high.u32 %v2623
        %v2626 = vmul.u32 %v2619, %v2610
        %v2627 = vadd.s32 %v2622, %v2624
        %vm2628 = vc.u32 %v2622, %v2624
        %v2629 = vadd.s32 %v2625, 1
        %v2630 = vsel %vm2628, %v2629, %v2625
        %v2631 = vadd.s32 %v2626, %v2630
        %v2632 = vadd.s32 %v2631, 536870912
        %v2633 = vshrl.u32 %v2632, 30
        %v2634 = vshll.u32 %v2633, 30
        %v2635 = vsub.s32 %v2631, %v2634
        %vm2636 = vcmp.lt.s32.totalorder %v2635, 0
        %v2637 = vsub.s32 0, %v2635
        %v2638 = vsel %vm2636, %v2637, %v2635
        %v2639 = vclz %v2638
        %v2640 = vsub.s32 %v2639, 2
        %vm2641 = vcmp.gt.s32.totalorder 0, %v2640
        %v2642 = vsel %vm2641, 0, %v2640
        %v2643 = vsub.s32 32, %v2642
        %v2644 = vshll.u32 %v2635, %v2642
        %v2645 = vshrl.u32 %v2627, %v2643
        %v2646 = vor.u32 %v2644, %v2645
        %v2647 = vsub.s32 4294967266, %v2642
        %v2648 = vadd.s32 %v2647, 127
        %v2649 = vshll.u32 %v2648, 23
        %v2650 = vor.u32 4788187, %v2649
        %v2651 = vand.u32 2147483647, %v2650
        %v2653 = vcvt.s32.f32 %v2646
        %v2654 = vmul.f32 %v2653, %v2651
        %v2655 = vxor.u32 %v2654, 2147483648
        %v2656 = vsel %vm2573, %v2655, %v2654
        %v2657 = vsub.s32 4, %v2633
        %v2658 = vsel %vm2573, %v2657, %v2633
        %v2659 = vsel %vm2572, %v1097, %v2656
        %v2660 = vsel %vm2572, 0, %v2658
        %v2661 = vcosq.f32.pop %v2659
        %v2662 = vsinq.f32.pop %v2659
        %vm2663 = vweird.f32 %v1097
        %v2664 = vadd.s32 %v2660, 3
        %v2665 = vand.u32 %v2664, 3
        %vm2666 = vcmp.lt.s32.totalorder %v2665, 2
        %vm2667 = vcmp.eq.s32.totalorder %v2665, 0
        %v2668 = vxor.u32 %v2662, 2147483648
        %v2669 = vsel %vm2667, %v2661, %v2668
        %vm2670 = vcmp.eq.s32.totalorder %v2665, 2
        %v2671 = vxor.u32 %v2661, 2147483648
        %v2672 = vsel %vm2670, %v2671, %v2662
        %v2673 = vsel %vm2666, %v2669, %v2672
        %v2674 = vsel %vm2663, nan, %v2673
        %v2675 = vand.u32 2147483647, %v1098
        %vm2676 = vcmp.le.f32.partialorder %v2675, 0.7853982
        %vm2677 = vcmp.lt.s32.totalorder %v1098, 0
        %v2678 = vand.u32 %v1098, 2139095040
        %v2679 = vshrl.u32 %v2678, 23
        %v2680 = vsub.s32 %v2679, 127
        %v2681 = vand.u32 2147483647, %v1098
        %v2682 = vand.u32 %v2681, 8388607
        %v2683 = vor.u32 %v2682, 8388608
        %v2684 = vsub.s32 0, %v2683
        %v2685 = vadd.s32 %v2680, 1
        %vm2686 = vcmp.gt.s32.totalorder %v2685, 0
        %v2687 = vsel %vm2686, %v2685, 0
        %v2688 = vshrl.u32 %v2687, 5
        %v2689 = vand.u32 %v2687, 31
        %v2690 = vsub.s32 32, %v2689
        %v2691 = vshrl.u32 683565275, %v2690
        %v2692 = vshll.u32 683565275, %v2689
        %v2693 = vshrl.u32 2475754826, %v2690
        %v2694 = vor.u32 %v2692, %v2693
        %v2695 = vshll.u32 2475754826, %v2689
        %v2696 = vshrl.u32 2131351028, %v2690
        %v2697 = vor.u32 %v2695, %v2696
        %v2698 = vshll.u32 2131351028, %v2689
        %v2699 = vshrl.u32 2102212464, %v2690
        %v2700 = vor.u32 %v2698, %v2699
        %v2701 = vshll.u32 2102212464, %v2689
        %v2702 = vshrl.u32 920167782, %v2690
        %v2703 = vor.u32 %v2701, %v2702
        %v2704 = vshll.u32 920167782, %v2689
        %v2705 = vshrl.u32 1326507024, %v2690
        %v2706 = vor.u32 %v2704, %v2705
        %vm2707 = vcmp.lt.s32.totalorder %v2688, 1
        %vm2708 = vcmp.lt.s32.totalorder %v2688, 2
        %vm2709 = vcmp.lt.s32.totalorder %v2688, 3
        %vm2710 = vcmp.lt.s32.totalorder %v2688, 4
        %v2711 = vsel %vm2707, %v2691, %v2694
        %v2712 = vsel %vm2710, %v2700, 2102212464
        %v2713 = vsel %vm2709, %v2697, %v2712
        %v2714 = vsel %vm2708, %v2711, %v2713
        %v2715 = vsel %vm2707, %v2694, %v2697
        %v2716 = vsel %vm2710, %v2703, 920167782
        %v2717 = vsel %vm2709, %v2700, %v2716
        %v2718 = vsel %vm2708, %v2715, %v2717
        %v2719 = vsel %vm2707, %v2697, %v2700
        %v2720 = vsel %vm2710, %v2706, 1326507024
        %v2721 = vsel %vm2709, %v2703, %v2720
        %v2722 = vsel %vm2708, %v2719, %v2721
        %v2723 = vshll.u32 %v2683, 8
        %v2724 = vmul.u32.u64.compose %v2723, %v2722
        %v2725 = vextract.low.u32 %v2724
        %v2726 = vextract.high.u32 %v2724
        %v2727 = vmul.u32.u64.compose %v2723, %v2718
        %v2728 = vextract.low.u32 %v2727
        %v2729 = vextract.high.u32 %v2727
        %v2730 = vmul.u32 %v2723, %v2714
        %v2731 = vadd.s32 %v2726, %v2728
        %vm2732 = vc.u32 %v2726, %v2728
        %v2733 = vadd.s32 %v2729, 1
        %v2734 = vsel %vm2732, %v2733, %v2729
        %v2735 = vadd.s32 %v2730, %v2734
        %v2736 = vadd.s32 %v2735, 536870912
        %v2737 = vshrl.u32 %v2736, 30
        %v2738 = vshll.u32 %v2737, 30
        %v2739 = vsub.s32 %v2735, %v2738
        %vm2740 = vcmp.lt.s32.totalorder %v2739, 0
        %v2741 = vsub.s32 0, %v2739
        %v2742 = vsel %vm2740, %v2741, %v2739
        %v2743 = vclz %v2742
        %v2744 = vsub.s32 %v2743, 2
        %vm2745 = vcmp.gt.s32.totalorder 0, %v2744
        %v2746 = vsel %vm2745, 0, %v2744
        %v2747 = vsub.s32 32, %v2746
        %v2748 = vshll.u32 %v2739, %v2746
        %v2749 = vshrl.u32 %v2731, %v2747
        %v2750 = vor.u32 %v2748, %v2749
        %v2751 = vsub.s32 4294967266, %v2746
        %v2752 = vadd.s32 %v2751, 127
        %v2753 = vshll.u32 %v2752, 23
        %v2754 = vor.u32 4788187, %v2753
        %v2755 = vand.u32 2147483647, %v2754
        %v2757 = vcvt.s32.f32 %v2750
        %v2758 = vmul.f32 %v2757, %v2755
        %v2759 = vxor.u32 %v2758, 2147483648
        %v2760 = vsel %vm2677, %v2759, %v2758
        %v2761 = vsub.s32 4, %v2737
        %v2762 = vsel %vm2677, %v2761, %v2737
        %v2763 = vsel %vm2676, %v1098, %v2760
        %v2764 = vsel %vm2676, 0, %v2762
        %v2765 = vcosq.f32.pop %v2763
        %v2766 = vsinq.f32.pop %v2763
        %vm2767 = vweird.f32 %v1098
        %v2768 = vadd.s32 %v2764, 3
        %v2769 = vand.u32 %v2768, 3
        %vm2770 = vcmp.lt.s32.totalorder %v2769, 2
        %vm2771 = vcmp.eq.s32.totalorder %v2769, 0
        %v2772 = vxor.u32 %v2766, 2147483648
        %v2773 = vsel %vm2771, %v2765, %v2772
        %vm2774 = vcmp.eq.s32.totalorder %v2769, 2
        %v2775 = vxor.u32 %v2765, 2147483648
        %v2776 = vsel %vm2774, %v2775, %v2766
        %v2777 = vsel %vm2770, %v2773, %v2776
        %v2778 = vsel %vm2767, nan, %v2777
        %v2779 = vand.u32 2147483647, %v1099
        %vm2780 = vcmp.le.f32.partialorder %v2779, 0.7853982
        %vm2781 = vcmp.lt.s32.totalorder %v1099, 0
        %v2782 = vand.u32 %v1099, 2139095040
        %v2783 = vshrl.u32 %v2782, 23
        %v2784 = vsub.s32 %v2783, 127
        %v2785 = vand.u32 2147483647, %v1099
        %v2786 = vand.u32 %v2785, 8388607
        %v2787 = vor.u32 %v2786, 8388608
        %v2788 = vsub.s32 0, %v2787
        %v2789 = vadd.s32 %v2784, 1
        %vm2790 = vcmp.gt.s32.totalorder %v2789, 0
        %v2791 = vsel %vm2790, %v2789, 0
        %v2792 = vshrl.u32 %v2791, 5
        %v2793 = vand.u32 %v2791, 31
        %v2794 = vsub.s32 32, %v2793
        %v2795 = vshrl.u32 683565275, %v2794
        %v2796 = vshll.u32 683565275, %v2793
        %v2797 = vshrl.u32 2475754826, %v2794
        %v2798 = vor.u32 %v2796, %v2797
        %v2799 = vshll.u32 2475754826, %v2793
        %v2800 = vshrl.u32 2131351028, %v2794
        %v2801 = vor.u32 %v2799, %v2800
        %v2802 = vshll.u32 2131351028, %v2793
        %v2803 = vshrl.u32 2102212464, %v2794
        %v2804 = vor.u32 %v2802, %v2803
        %v2805 = vshll.u32 2102212464, %v2793
        %v2806 = vshrl.u32 920167782, %v2794
        %v2807 = vor.u32 %v2805, %v2806
        %v2808 = vshll.u32 920167782, %v2793
        %v2809 = vshrl.u32 1326507024, %v2794
        %v2810 = vor.u32 %v2808, %v2809
        %vm2811 = vcmp.lt.s32.totalorder %v2792, 1
        %vm2812 = vcmp.lt.s32.totalorder %v2792, 2
        %vm2813 = vcmp.lt.s32.totalorder %v2792, 3
        %vm2814 = vcmp.lt.s32.totalorder %v2792, 4
        %v2815 = vsel %vm2811, %v2795, %v2798
        %v2816 = vsel %vm2814, %v2804, 2102212464
        %v2817 = vsel %vm2813, %v2801, %v2816
        %v2818 = vsel %vm2812, %v2815, %v2817
        %v2819 = vsel %vm2811, %v2798, %v2801
        %v2820 = vsel %vm2814, %v2807, 920167782
        %v2821 = vsel %vm2813, %v2804, %v2820
        %v2822 = vsel %vm2812, %v2819, %v2821
        %v2823 = vsel %vm2811, %v2801, %v2804
        %v2824 = vsel %vm2814, %v2810, 1326507024
        %v2825 = vsel %vm2813, %v2807, %v2824
        %v2826 = vsel %vm2812, %v2823, %v2825
        %v2827 = vshll.u32 %v2787, 8
        %v2828 = vmul.u32.u64.compose %v2827, %v2826
        %v2829 = vextract.low.u32 %v2828
        %v2830 = vextract.high.u32 %v2828
        %v2831 = vmul.u32.u64.compose %v2827, %v2822
        %v2832 = vextract.low.u32 %v2831
        %v2833 = vextract.high.u32 %v2831
        %v2834 = vmul.u32 %v2827, %v2818
        %v2835 = vadd.s32 %v2830, %v2832
        %vm2836 = vc.u32 %v2830, %v2832
        %v2837 = vadd.s32 %v2833, 1
        %v2838 = vsel %vm2836, %v2837, %v2833
        %v2839 = vadd.s32 %v2834, %v2838
        %v2840 = vadd.s32 %v2839, 536870912
        %v2841 = vshrl.u32 %v2840, 30
        %v2842 = vshll.u32 %v2841, 30
        %v2843 = vsub.s32 %v2839, %v2842
        %vm2844 = vcmp.lt.s32.totalorder %v2843, 0
        %v2845 = vsub.s32 0, %v2843
        %v2846 = vsel %vm2844, %v2845, %v2843
        %v2847 = vclz %v2846
        %v2848 = vsub.s32 %v2847, 2
        %vm2849 = vcmp.gt.s32.totalorder 0, %v2848
        %v2850 = vsel %vm2849, 0, %v2848
        %v2851 = vsub.s32 32, %v2850
        %v2852 = vshll.u32 %v2843, %v2850
        %v2853 = vshrl.u32 %v2835, %v2851
        %v2854 = vor.u32 %v2852, %v2853
        %v2855 = vsub.s32 4294967266, %v2850
        %v2856 = vadd.s32 %v2855, 127
        %v2857 = vshll.u32 %v2856, 23
        %v2858 = vor.u32 4788187, %v2857
        %v2859 = vand.u32 2147483647, %v2858
        %v2861 = vcvt.s32.f32 %v2854
        %v2862 = vmul.f32 %v2861, %v2859
        %v2863 = vxor.u32 %v2862, 2147483648
        %v2864 = vsel %vm2781, %v2863, %v2862
        %v2865 = vsub.s32 4, %v2841
        %v2866 = vsel %vm2781, %v2865, %v2841
        %v2867 = vsel %vm2780, %v1099, %v2864
        %v2868 = vsel %vm2780, 0, %v2866
        %v2869 = vcosq.f32.pop %v2867
        %v2870 = vsinq.f32.pop %v2867
        %vm2871 = vweird.f32 %v1099
        %v2872 = vadd.s32 %v2868, 3
        %v2873 = vand.u32 %v2872, 3
        %vm2874 = vcmp.lt.s32.totalorder %v2873, 2
        %vm2875 = vcmp.eq.s32.totalorder %v2873, 0
        %v2876 = vxor.u32 %v2870, 2147483648
        %v2877 = vsel %vm2875, %v2869, %v2876
        %vm2878 = vcmp.eq.s32.totalorder %v2873, 2
        %v2879 = vxor.u32 %v2869, 2147483648
        %v2880 = vsel %vm2878, %v2879, %v2870
        %v2881 = vsel %vm2874, %v2877, %v2880
        %v2882 = vsel %vm2871, nan, %v2881
        %v2883 = vand.u32 2147483647, %v1100
        %vm2884 = vcmp.le.f32.partialorder %v2883, 0.7853982
        %vm2885 = vcmp.lt.s32.totalorder %v1100, 0
        %v2886 = vand.u32 %v1100, 2139095040
        %v2887 = vshrl.u32 %v2886, 23
        %v2888 = vsub.s32 %v2887, 127
        %v2889 = vand.u32 2147483647, %v1100
        %v2890 = vand.u32 %v2889, 8388607
        %v2891 = vor.u32 %v2890, 8388608
        %v2892 = vsub.s32 0, %v2891
        %v2893 = vadd.s32 %v2888, 1
        %vm2894 = vcmp.gt.s32.totalorder %v2893, 0
        %v2895 = vsel %vm2894, %v2893, 0
        %v2896 = vshrl.u32 %v2895, 5
        %v2897 = vand.u32 %v2895, 31
        %v2898 = vsub.s32 32, %v2897
        %v2899 = vshrl.u32 683565275, %v2898
        %v2900 = vshll.u32 683565275, %v2897
        %v2901 = vshrl.u32 2475754826, %v2898
        %v2902 = vor.u32 %v2900, %v2901
        %v2903 = vshll.u32 2475754826, %v2897
        %v2904 = vshrl.u32 2131351028, %v2898
        %v2905 = vor.u32 %v2903, %v2904
        %v2906 = vshll.u32 2131351028, %v2897
        %v2907 = vshrl.u32 2102212464, %v2898
        %v2908 = vor.u32 %v2906, %v2907
        %v2909 = vshll.u32 2102212464, %v2897
        %v2910 = vshrl.u32 920167782, %v2898
        %v2911 = vor.u32 %v2909, %v2910
        %v2912 = vshll.u32 920167782, %v2897
        %v2913 = vshrl.u32 1326507024, %v2898
        %v2914 = vor.u32 %v2912, %v2913
        %vm2915 = vcmp.lt.s32.totalorder %v2896, 1
        %vm2916 = vcmp.lt.s32.totalorder %v2896, 2
        %vm2917 = vcmp.lt.s32.totalorder %v2896, 3
        %vm2918 = vcmp.lt.s32.totalorder %v2896, 4
        %v2919 = vsel %vm2915, %v2899, %v2902
        %v2920 = vsel %vm2918, %v2908, 2102212464
        %v2921 = vsel %vm2917, %v2905, %v2920
        %v2922 = vsel %vm2916, %v2919, %v2921
        %v2923 = vsel %vm2915, %v2902, %v2905
        %v2924 = vsel %vm2918, %v2911, 920167782
        %v2925 = vsel %vm2917, %v2908, %v2924
        %v2926 = vsel %vm2916, %v2923, %v2925
        %v2927 = vsel %vm2915, %v2905, %v2908
        %v2928 = vsel %vm2918, %v2914, 1326507024
        %v2929 = vsel %vm2917, %v2911, %v2928
        %v2930 = vsel %vm2916, %v2927, %v2929
        %v2931 = vshll.u32 %v2891, 8
        %v2932 = vmul.u32.u64.compose %v2931, %v2930
        %v2933 = vextract.low.u32 %v2932
        %v2934 = vextract.high.u32 %v2932
        %v2935 = vmul.u32.u64.compose %v2931, %v2926
        %v2936 = vextract.low.u32 %v2935
        %v2937 = vextract.high.u32 %v2935
        %v2938 = vmul.u32 %v2931, %v2922
        %v2939 = vadd.s32 %v2934, %v2936
        %vm2940 = vc.u32 %v2934, %v2936
        %v2941 = vadd.s32 %v2937, 1
        %v2942 = vsel %vm2940, %v2941, %v2937
        %v2943 = vadd.s32 %v2938, %v2942
        %v2944 = vadd.s32 %v2943, 536870912
        %v2945 = vshrl.u32 %v2944, 30
        %v2946 = vshll.u32 %v2945, 30
        %v2947 = vsub.s32 %v2943, %v2946
        %vm2948 = vcmp.lt.s32.totalorder %v2947, 0
        %v2949 = vsub.s32 0, %v2947
        %v2950 = vsel %vm2948, %v2949, %v2947
        %v2951 = vclz %v2950
        %v2952 = vsub.s32 %v2951, 2
        %vm2953 = vcmp.gt.s32.totalorder 0, %v2952
        %v2954 = vsel %vm2953, 0, %v2952
        %v2955 = vsub.s32 32, %v2954
        %v2956 = vshll.u32 %v2947, %v2954
        %v2957 = vshrl.u32 %v2939, %v2955
        %v2958 = vor.u32 %v2956, %v2957
        %v2959 = vsub.s32 4294967266, %v2954
        %v2960 = vadd.s32 %v2959, 127
        %v2961 = vshll.u32 %v2960, 23
        %v2962 = vor.u32 4788187, %v2961
        %v2963 = vand.u32 2147483647, %v2962
        %v2965 = vcvt.s32.f32 %v2958
        %v2966 = vmul.f32 %v2965, %v2963
        %v2967 = vxor.u32 %v2966, 2147483648
        %v2968 = vsel %vm2885, %v2967, %v2966
        %v2969 = vsub.s32 4, %v2945
        %v2970 = vsel %vm2885, %v2969, %v2945
        %v2971 = vsel %vm2884, %v1100, %v2968
        %v2972 = vsel %vm2884, 0, %v2970
        %v2973 = vcosq.f32.pop %v2971
        %v2974 = vsinq.f32.pop %v2971
        %vm2975 = vweird.f32 %v1100
        %v2976 = vadd.s32 %v2972, 3
        %v2977 = vand.u32 %v2976, 3
        %vm2978 = vcmp.lt.s32.totalorder %v2977, 2
        %vm2979 = vcmp.eq.s32.totalorder %v2977, 0
        %v2980 = vxor.u32 %v2974, 2147483648
        %v2981 = vsel %vm2979, %v2973, %v2980
        %vm2982 = vcmp.eq.s32.totalorder %v2977, 2
        %v2983 = vxor.u32 %v2973, 2147483648
        %v2984 = vsel %vm2982, %v2983, %v2974
        %v2985 = vsel %vm2978, %v2981, %v2984
        %v2986 = vsel %vm2975, nan, %v2985
        %v2987 = vand.u32 2147483647, %v1101
        %vm2988 = vcmp.le.f32.partialorder %v2987, 0.7853982
        %vm2989 = vcmp.lt.s32.totalorder %v1101, 0
        %v2990 = vand.u32 %v1101, 2139095040
        %v2991 = vshrl.u32 %v2990, 23
        %v2992 = vsub.s32 %v2991, 127
        %v2993 = vand.u32 2147483647, %v1101
        %v2994 = vand.u32 %v2993, 8388607
        %v2995 = vor.u32 %v2994, 8388608
        %v2996 = vsub.s32 0, %v2995
        %v2997 = vadd.s32 %v2992, 1
        %vm2998 = vcmp.gt.s32.totalorder %v2997, 0
        %v2999 = vsel %vm2998, %v2997, 0
        %v3000 = vshrl.u32 %v2999, 5
        %v3001 = vand.u32 %v2999, 31
        %v3002 = vsub.s32 32, %v3001
        %v3003 = vshrl.u32 683565275, %v3002
        %v3004 = vshll.u32 683565275, %v3001
        %v3005 = vshrl.u32 2475754826, %v3002
        %v3006 = vor.u32 %v3004, %v3005
        %v3007 = vshll.u32 2475754826, %v3001
        %v3008 = vshrl.u32 2131351028, %v3002
        %v3009 = vor.u32 %v3007, %v3008
        %v3010 = vshll.u32 2131351028, %v3001
        %v3011 = vshrl.u32 2102212464, %v3002
        %v3012 = vor.u32 %v3010, %v3011
        %v3013 = vshll.u32 2102212464, %v3001
        %v3014 = vshrl.u32 920167782, %v3002
        %v3015 = vor.u32 %v3013, %v3014
        %v3016 = vshll.u32 920167782, %v3001
        %v3017 = vshrl.u32 1326507024, %v3002
        %v3018 = vor.u32 %v3016, %v3017
        %vm3019 = vcmp.lt.s32.totalorder %v3000, 1
        %vm3020 = vcmp.lt.s32.totalorder %v3000, 2
        %vm3021 = vcmp.lt.s32.totalorder %v3000, 3
        %vm3022 = vcmp.lt.s32.totalorder %v3000, 4
        %v3023 = vsel %vm3019, %v3003, %v3006
        %v3024 = vsel %vm3022, %v3012, 2102212464
        %v3025 = vsel %vm3021, %v3009, %v3024
        %v3026 = vsel %vm3020, %v3023, %v3025
        %v3027 = vsel %vm3019, %v3006, %v3009
        %v3028 = vsel %vm3022, %v3015, 920167782
        %v3029 = vsel %vm3021, %v3012, %v3028
        %v3030 = vsel %vm3020, %v3027, %v3029
        %v3031 = vsel %vm3019, %v3009, %v3012
        %v3032 = vsel %vm3022, %v3018, 1326507024
        %v3033 = vsel %vm3021, %v3015, %v3032
        %v3034 = vsel %vm3020, %v3031, %v3033
        %v3035 = vshll.u32 %v2995, 8
        %v3036 = vmul.u32.u64.compose %v3035, %v3034
        %v3037 = vextract.low.u32 %v3036
        %v3038 = vextract.high.u32 %v3036
        %v3039 = vmul.u32.u64.compose %v3035, %v3030
        %v3040 = vextract.low.u32 %v3039
        %v3041 = vextract.high.u32 %v3039
        %v3042 = vmul.u32 %v3035, %v3026
        %v3043 = vadd.s32 %v3038, %v3040
        %vm3044 = vc.u32 %v3038, %v3040
        %v3045 = vadd.s32 %v3041, 1
        %v3046 = vsel %vm3044, %v3045, %v3041
        %v3047 = vadd.s32 %v3042, %v3046
        %v3048 = vadd.s32 %v3047, 536870912
        %v3049 = vshrl.u32 %v3048, 30
        %v3050 = vshll.u32 %v3049, 30
        %v3051 = vsub.s32 %v3047, %v3050
        %vm3052 = vcmp.lt.s32.totalorder %v3051, 0
        %v3053 = vsub.s32 0, %v3051
        %v3054 = vsel %vm3052, %v3053, %v3051
        %v3055 = vclz %v3054
        %v3056 = vsub.s32 %v3055, 2
        %vm3057 = vcmp.gt.s32.totalorder 0, %v3056
        %v3058 = vsel %vm3057, 0, %v3056
        %v3059 = vsub.s32 32, %v3058
        %v3060 = vshll.u32 %v3051, %v3058
        %v3061 = vshrl.u32 %v3043, %v3059
        %v3062 = vor.u32 %v3060, %v3061
        %v3063 = vsub.s32 4294967266, %v3058
        %v3064 = vadd.s32 %v3063, 127
        %v3065 = vshll.u32 %v3064, 23
        %v3066 = vor.u32 4788187, %v3065
        %v3067 = vand.u32 2147483647, %v3066
        %v3069 = vcvt.s32.f32 %v3062
        %v3070 = vmul.f32 %v3069, %v3067
        %v3071 = vxor.u32 %v3070, 2147483648
        %v3072 = vsel %vm2989, %v3071, %v3070
        %v3073 = vsub.s32 4, %v3049
        %v3074 = vsel %vm2989, %v3073, %v3049
        %v3075 = vsel %vm2988, %v1101, %v3072
        %v3076 = vsel %vm2988, 0, %v3074
        %v3077 = vcosq.f32.pop %v3075
        %v3078 = vsinq.f32.pop %v3075
        %vm3079 = vweird.f32 %v1101
        %v3080 = vadd.s32 %v3076, 3
        %v3081 = vand.u32 %v3080, 3
        %vm3082 = vcmp.lt.s32.totalorder %v3081, 2
        %vm3083 = vcmp.eq.s32.totalorder %v3081, 0
        %v3084 = vxor.u32 %v3078, 2147483648
        %v3085 = vsel %vm3083, %v3077, %v3084
        %vm3086 = vcmp.eq.s32.totalorder %v3081, 2
        %v3087 = vxor.u32 %v3077, 2147483648
        %v3088 = vsel %vm3086, %v3087, %v3078
        %v3089 = vsel %vm3082, %v3085, %v3088
        %v3090 = vsel %vm3079, nan, %v3089
        %v3091 = vand.u32 2147483647, %v1102
        %vm3092 = vcmp.le.f32.partialorder %v3091, 0.7853982
        %vm3093 = vcmp.lt.s32.totalorder %v1102, 0
        %v3094 = vand.u32 %v1102, 2139095040
        %v3095 = vshrl.u32 %v3094, 23
        %v3096 = vsub.s32 %v3095, 127
        %v3097 = vand.u32 2147483647, %v1102
        %v3098 = vand.u32 %v3097, 8388607
        %v3099 = vor.u32 %v3098, 8388608
        %v3100 = vsub.s32 0, %v3099
        %v3101 = vadd.s32 %v3096, 1
        %vm3102 = vcmp.gt.s32.totalorder %v3101, 0
        %v3103 = vsel %vm3102, %v3101, 0
        %v3104 = vshrl.u32 %v3103, 5
        %v3105 = vand.u32 %v3103, 31
        %v3106 = vsub.s32 32, %v3105
        %v3107 = vshrl.u32 683565275, %v3106
        %v3108 = vshll.u32 683565275, %v3105
        %v3109 = vshrl.u32 2475754826, %v3106
        %v3110 = vor.u32 %v3108, %v3109
        %v3111 = vshll.u32 2475754826, %v3105
        %v3112 = vshrl.u32 2131351028, %v3106
        %v3113 = vor.u32 %v3111, %v3112
        %v3114 = vshll.u32 2131351028, %v3105
        %v3115 = vshrl.u32 2102212464, %v3106
        %v3116 = vor.u32 %v3114, %v3115
        %v3117 = vshll.u32 2102212464, %v3105
        %v3118 = vshrl.u32 920167782, %v3106
        %v3119 = vor.u32 %v3117, %v3118
        %v3120 = vshll.u32 920167782, %v3105
        %v3121 = vshrl.u32 1326507024, %v3106
        %v3122 = vor.u32 %v3120, %v3121
        %vm3123 = vcmp.lt.s32.totalorder %v3104, 1
        %vm3124 = vcmp.lt.s32.totalorder %v3104, 2
        %vm3125 = vcmp.lt.s32.totalorder %v3104, 3
        %vm3126 = vcmp.lt.s32.totalorder %v3104, 4
        %v3127 = vsel %vm3123, %v3107, %v3110
        %v3128 = vsel %vm3126, %v3116, 2102212464
        %v3129 = vsel %vm3125, %v3113, %v3128
        %v3130 = vsel %vm3124, %v3127, %v3129
        %v3131 = vsel %vm3123, %v3110, %v3113
        %v3132 = vsel %vm3126, %v3119, 920167782
        %v3133 = vsel %vm3125, %v3116, %v3132
        %v3134 = vsel %vm3124, %v3131, %v3133
        %v3135 = vsel %vm3123, %v3113, %v3116
        %v3136 = vsel %vm3126, %v3122, 1326507024
        %v3137 = vsel %vm3125, %v3119, %v3136
        %v3138 = vsel %vm3124, %v3135, %v3137
        %v3139 = vshll.u32 %v3099, 8
        %v3140 = vmul.u32.u64.compose %v3139, %v3138
        %v3141 = vextract.low.u32 %v3140
        %v3142 = vextract.high.u32 %v3140
        %v3143 = vmul.u32.u64.compose %v3139, %v3134
        %v3144 = vextract.low.u32 %v3143
        %v3145 = vextract.high.u32 %v3143
        %v3146 = vmul.u32 %v3139, %v3130
        %v3147 = vadd.s32 %v3142, %v3144
        %vm3148 = vc.u32 %v3142, %v3144
        %v3149 = vadd.s32 %v3145, 1
        %v3150 = vsel %vm3148, %v3149, %v3145
        %v3151 = vadd.s32 %v3146, %v3150
        %v3152 = vadd.s32 %v3151, 536870912
        %v3153 = vshrl.u32 %v3152, 30
        %v3154 = vshll.u32 %v3153, 30
        %v3155 = vsub.s32 %v3151, %v3154
        %vm3156 = vcmp.lt.s32.totalorder %v3155, 0
        %v3157 = vsub.s32 0, %v3155
        %v3158 = vsel %vm3156, %v3157, %v3155
        %v3159 = vclz %v3158
        %v3160 = vsub.s32 %v3159, 2
        %vm3161 = vcmp.gt.s32.totalorder 0, %v3160
        %v3162 = vsel %vm3161, 0, %v3160
        %v3163 = vsub.s32 32, %v3162
        %v3164 = vshll.u32 %v3155, %v3162
        %v3165 = vshrl.u32 %v3147, %v3163
        %v3166 = vor.u32 %v3164, %v3165
        %v3167 = vsub.s32 4294967266, %v3162
        %v3168 = vadd.s32 %v3167, 127
        %v3169 = vshll.u32 %v3168, 23
        %v3170 = vor.u32 4788187, %v3169
        %v3171 = vand.u32 2147483647, %v3170
        %v3173 = vcvt.s32.f32 %v3166
        %v3174 = vmul.f32 %v3173, %v3171
        %v3175 = vxor.u32 %v3174, 2147483648
        %v3176 = vsel %vm3093, %v3175, %v3174
        %v3177 = vsub.s32 4, %v3153
        %v3178 = vsel %vm3093, %v3177, %v3153
        %v3179 = vsel %vm3092, %v1102, %v3176
        %v3180 = vsel %vm3092, 0, %v3178
        %v3181 = vcosq.f32.pop %v3179
        %v3182 = vsinq.f32.pop %v3179
        %vm3183 = vweird.f32 %v1102
        %v3184 = vadd.s32 %v3180, 3
        %v3185 = vand.u32 %v3184, 3
        %vm3186 = vcmp.lt.s32.totalorder %v3185, 2
        %vm3187 = vcmp.eq.s32.totalorder %v3185, 0
        %v3188 = vxor.u32 %v3182, 2147483648
        %v3189 = vsel %vm3187, %v3181, %v3188
        %vm3190 = vcmp.eq.s32.totalorder %v3185, 2
        %v3191 = vxor.u32 %v3181, 2147483648
        %v3192 = vsel %vm3190, %v3191, %v3182
        %v3193 = vsel %vm3186, %v3189, %v3192
        %v3194 = vsel %vm3183, nan, %v3193
        %v3195 = vand.u32 2147483647, %v1103
        %vm3196 = vcmp.le.f32.partialorder %v3195, 0.7853982
        %vm3197 = vcmp.lt.s32.totalorder %v1103, 0
        %v3198 = vand.u32 %v1103, 2139095040
        %v3199 = vshrl.u32 %v3198, 23
        %v3200 = vsub.s32 %v3199, 127
        %v3201 = vand.u32 2147483647, %v1103
        %v3202 = vand.u32 %v3201, 8388607
        %v3203 = vor.u32 %v3202, 8388608
        %v3204 = vsub.s32 0, %v3203
        %v3205 = vadd.s32 %v3200, 1
        %vm3206 = vcmp.gt.s32.totalorder %v3205, 0
        %v3207 = vsel %vm3206, %v3205, 0
        %v3208 = vshrl.u32 %v3207, 5
        %v3209 = vand.u32 %v3207, 31
        %v3210 = vsub.s32 32, %v3209
        %v3211 = vshrl.u32 683565275, %v3210
        %v3212 = vshll.u32 683565275, %v3209
        %v3213 = vshrl.u32 2475754826, %v3210
        %v3214 = vor.u32 %v3212, %v3213
        %v3215 = vshll.u32 2475754826, %v3209
        %v3216 = vshrl.u32 2131351028, %v3210
        %v3217 = vor.u32 %v3215, %v3216
        %v3218 = vshll.u32 2131351028, %v3209
        %v3219 = vshrl.u32 2102212464, %v3210
        %v3220 = vor.u32 %v3218, %v3219
        %v3221 = vshll.u32 2102212464, %v3209
        %v3222 = vshrl.u32 920167782, %v3210
        %v3223 = vor.u32 %v3221, %v3222
        %v3224 = vshll.u32 920167782, %v3209
        %v3225 = vshrl.u32 1326507024, %v3210
        %v3226 = vor.u32 %v3224, %v3225
        %vm3227 = vcmp.lt.s32.totalorder %v3208, 1
        %vm3228 = vcmp.lt.s32.totalorder %v3208, 2
        %vm3229 = vcmp.lt.s32.totalorder %v3208, 3
        %vm3230 = vcmp.lt.s32.totalorder %v3208, 4
        %v3231 = vsel %vm3227, %v3211, %v3214
        %v3232 = vsel %vm3230, %v3220, 2102212464
        %v3233 = vsel %vm3229, %v3217, %v3232
        %v3234 = vsel %vm3228, %v3231, %v3233
        %v3235 = vsel %vm3227, %v3214, %v3217
        %v3236 = vsel %vm3230, %v3223, 920167782
        %v3237 = vsel %vm3229, %v3220, %v3236
        %v3238 = vsel %vm3228, %v3235, %v3237
        %v3239 = vsel %vm3227, %v3217, %v3220
        %v3240 = vsel %vm3230, %v3226, 1326507024
        %v3241 = vsel %vm3229, %v3223, %v3240
        %v3242 = vsel %vm3228, %v3239, %v3241
        %v3243 = vshll.u32 %v3203, 8
        %v3244 = vmul.u32.u64.compose %v3243, %v3242
        %v3245 = vextract.low.u32 %v3244
        %v3246 = vextract.high.u32 %v3244
        %v3247 = vmul.u32.u64.compose %v3243, %v3238
        %v3248 = vextract.low.u32 %v3247
        %v3249 = vextract.high.u32 %v3247
        %v3250 = vmul.u32 %v3243, %v3234
        %v3251 = vadd.s32 %v3246, %v3248
        %vm3252 = vc.u32 %v3246, %v3248
        %v3253 = vadd.s32 %v3249, 1
        %v3254 = vsel %vm3252, %v3253, %v3249
        %v3255 = vadd.s32 %v3250, %v3254
        %v3256 = vadd.s32 %v3255, 536870912
        %v3257 = vshrl.u32 %v3256, 30
        %v3258 = vshll.u32 %v3257, 30
        %v3259 = vsub.s32 %v3255, %v3258
        %vm3260 = vcmp.lt.s32.totalorder %v3259, 0
        %v3261 = vsub.s32 0, %v3259
        %v3262 = vsel %vm3260, %v3261, %v3259
        %v3263 = vclz %v3262
        %v3264 = vsub.s32 %v3263, 2
        %vm3265 = vcmp.gt.s32.totalorder 0, %v3264
        %v3266 = vsel %vm3265, 0, %v3264
        %v3267 = vsub.s32 32, %v3266
        %v3268 = vshll.u32 %v3259, %v3266
        %v3269 = vshrl.u32 %v3251, %v3267
        %v3270 = vor.u32 %v3268, %v3269
        %v3271 = vsub.s32 4294967266, %v3266
        %v3272 = vadd.s32 %v3271, 127
        %v3273 = vshll.u32 %v3272, 23
        %v3274 = vor.u32 4788187, %v3273
        %v3275 = vand.u32 2147483647, %v3274
        %v3277 = vcvt.s32.f32 %v3270
        %v3278 = vmul.f32 %v3277, %v3275
        %v3279 = vxor.u32 %v3278, 2147483648
        %v3280 = vsel %vm3197, %v3279, %v3278
        %v3281 = vsub.s32 4, %v3257
        %v3282 = vsel %vm3197, %v3281, %v3257
        %v3283 = vsel %vm3196, %v1103, %v3280
        %v3284 = vsel %vm3196, 0, %v3282
        %v3285 = vcosq.f32.pop %v3283
        %v3286 = vsinq.f32.pop %v3283
        %vm3287 = vweird.f32 %v1103
        %v3288 = vadd.s32 %v3284, 3
        %v3289 = vand.u32 %v3288, 3
        %vm3290 = vcmp.lt.s32.totalorder %v3289, 2
        %vm3291 = vcmp.eq.s32.totalorder %v3289, 0
        %v3292 = vxor.u32 %v3286, 2147483648
        %v3293 = vsel %vm3291, %v3285, %v3292
        %vm3294 = vcmp.eq.s32.totalorder %v3289, 2
        %v3295 = vxor.u32 %v3285, 2147483648
        %v3296 = vsel %vm3294, %v3295, %v3286
        %v3297 = vsel %vm3290, %v3293, %v3296
        %v3298 = vsel %vm3287, nan, %v3297
        %v3299 = vand.u32 2147483647, %v1104
        %vm3300 = vcmp.le.f32.partialorder %v3299, 0.7853982
        %vm3301 = vcmp.lt.s32.totalorder %v1104, 0
        %v3302 = vand.u32 %v1104, 2139095040
        %v3303 = vshrl.u32 %v3302, 23
        %v3304 = vsub.s32 %v3303, 127
        %v3305 = vand.u32 2147483647, %v1104
        %v3306 = vand.u32 %v3305, 8388607
        %v3307 = vor.u32 %v3306, 8388608
        %v3308 = vsub.s32 0, %v3307
        %v3309 = vadd.s32 %v3304, 1
        %vm3310 = vcmp.gt.s32.totalorder %v3309, 0
        %v3311 = vsel %vm3310, %v3309, 0
        %v3312 = vshrl.u32 %v3311, 5
        %v3313 = vand.u32 %v3311, 31
        %v3314 = vsub.s32 32, %v3313
        %v3315 = vshrl.u32 683565275, %v3314
        %v3316 = vshll.u32 683565275, %v3313
        %v3317 = vshrl.u32 2475754826, %v3314
        %v3318 = vor.u32 %v3316, %v3317
        %v3319 = vshll.u32 2475754826, %v3313
        %v3320 = vshrl.u32 2131351028, %v3314
        %v3321 = vor.u32 %v3319, %v3320
        %v3322 = vshll.u32 2131351028, %v3313
        %v3323 = vshrl.u32 2102212464, %v3314
        %v3324 = vor.u32 %v3322, %v3323
        %v3325 = vshll.u32 2102212464, %v3313
        %v3326 = vshrl.u32 920167782, %v3314
        %v3327 = vor.u32 %v3325, %v3326
        %v3328 = vshll.u32 920167782, %v3313
        %v3329 = vshrl.u32 1326507024, %v3314
        %v3330 = vor.u32 %v3328, %v3329
        %vm3331 = vcmp.lt.s32.totalorder %v3312, 1
        %vm3332 = vcmp.lt.s32.totalorder %v3312, 2
        %vm3333 = vcmp.lt.s32.totalorder %v3312, 3
        %vm3334 = vcmp.lt.s32.totalorder %v3312, 4
        %v3335 = vsel %vm3331, %v3315, %v3318
        %v3336 = vsel %vm3334, %v3324, 2102212464
        %v3337 = vsel %vm3333, %v3321, %v3336
        %v3338 = vsel %vm3332, %v3335, %v3337
        %v3339 = vsel %vm3331, %v3318, %v3321
        %v3340 = vsel %vm3334, %v3327, 920167782
        %v3341 = vsel %vm3333, %v3324, %v3340
        %v3342 = vsel %vm3332, %v3339, %v3341
        %v3343 = vsel %vm3331, %v3321, %v3324
        %v3344 = vsel %vm3334, %v3330, 1326507024
        %v3345 = vsel %vm3333, %v3327, %v3344
        %v3346 = vsel %vm3332, %v3343, %v3345
        %v3347 = vshll.u32 %v3307, 8
        %v3348 = vmul.u32.u64.compose %v3347, %v3346
        %v3349 = vextract.low.u32 %v3348
        %v3350 = vextract.high.u32 %v3348
        %v3351 = vmul.u32.u64.compose %v3347, %v3342
        %v3352 = vextract.low.u32 %v3351
        %v3353 = vextract.high.u32 %v3351
        %v3354 = vmul.u32 %v3347, %v3338
        %v3355 = vadd.s32 %v3350, %v3352
        %vm3356 = vc.u32 %v3350, %v3352
        %v3357 = vadd.s32 %v3353, 1
        %v3358 = vsel %vm3356, %v3357, %v3353
        %v3359 = vadd.s32 %v3354, %v3358
        %v3360 = vadd.s32 %v3359, 536870912
        %v3361 = vshrl.u32 %v3360, 30
        %v3362 = vshll.u32 %v3361, 30
        %v3363 = vsub.s32 %v3359, %v3362
        %vm3364 = vcmp.lt.s32.totalorder %v3363, 0
        %v3365 = vsub.s32 0, %v3363
        %v3366 = vsel %vm3364, %v3365, %v3363
        %v3367 = vclz %v3366
        %v3368 = vsub.s32 %v3367, 2
        %vm3369 = vcmp.gt.s32.totalorder 0, %v3368
        %v3370 = vsel %vm3369, 0, %v3368
        %v3371 = vsub.s32 32, %v3370
        %v3372 = vshll.u32 %v3363, %v3370
        %v3373 = vshrl.u32 %v3355, %v3371
        %v3374 = vor.u32 %v3372, %v3373
        %v3375 = vsub.s32 4294967266, %v3370
        %v3376 = vadd.s32 %v3375, 127
        %v3377 = vshll.u32 %v3376, 23
        %v3378 = vor.u32 4788187, %v3377
        %v3379 = vand.u32 2147483647, %v3378
        %v3381 = vcvt.s32.f32 %v3374
        %v3382 = vmul.f32 %v3381, %v3379
        %v3383 = vxor.u32 %v3382, 2147483648
        %v3384 = vsel %vm3301, %v3383, %v3382
        %v3385 = vsub.s32 4, %v3361
        %v3386 = vsel %vm3301, %v3385, %v3361
        %v3387 = vsel %vm3300, %v1104, %v3384
        %v3388 = vsel %vm3300, 0, %v3386
        %v3389 = vcosq.f32.pop %v3387
        %v3390 = vsinq.f32.pop %v3387
        %vm3391 = vweird.f32 %v1104
        %v3392 = vadd.s32 %v3388, 3
        %v3393 = vand.u32 %v3392, 3
        %vm3394 = vcmp.lt.s32.totalorder %v3393, 2
        %vm3395 = vcmp.eq.s32.totalorder %v3393, 0
        %v3396 = vxor.u32 %v3390, 2147483648
        %v3397 = vsel %vm3395, %v3389, %v3396
        %vm3398 = vcmp.eq.s32.totalorder %v3393, 2
        %v3399 = vxor.u32 %v3389, 2147483648
        %v3400 = vsel %vm3398, %v3399, %v3390
        %v3401 = vsel %vm3394, %v3397, %v3400
        %v3402 = vsel %vm3391, nan, %v3401
        %v3403 = vand.u32 2147483647, %v1105
        %vm3404 = vcmp.le.f32.partialorder %v3403, 0.7853982
        %vm3405 = vcmp.lt.s32.totalorder %v1105, 0
        %v3406 = vand.u32 %v1105, 2139095040
        %v3407 = vshrl.u32 %v3406, 23
        %v3408 = vsub.s32 %v3407, 127
        %v3409 = vand.u32 2147483647, %v1105
        %v3410 = vand.u32 %v3409, 8388607
        %v3411 = vor.u32 %v3410, 8388608
        %v3412 = vsub.s32 0, %v3411
        %v3413 = vadd.s32 %v3408, 1
        %vm3414 = vcmp.gt.s32.totalorder %v3413, 0
        %v3415 = vsel %vm3414, %v3413, 0
        %v3416 = vshrl.u32 %v3415, 5
        %v3417 = vand.u32 %v3415, 31
        %v3418 = vsub.s32 32, %v3417
        %v3419 = vshrl.u32 683565275, %v3418
        %v3420 = vshll.u32 683565275, %v3417
        %v3421 = vshrl.u32 2475754826, %v3418
        %v3422 = vor.u32 %v3420, %v3421
        %v3423 = vshll.u32 2475754826, %v3417
        %v3424 = vshrl.u32 2131351028, %v3418
        %v3425 = vor.u32 %v3423, %v3424
        %v3426 = vshll.u32 2131351028, %v3417
        %v3427 = vshrl.u32 2102212464, %v3418
        %v3428 = vor.u32 %v3426, %v3427
        %v3429 = vshll.u32 2102212464, %v3417
        %v3430 = vshrl.u32 920167782, %v3418
        %v3431 = vor.u32 %v3429, %v3430
        %v3432 = vshll.u32 920167782, %v3417
        %v3433 = vshrl.u32 1326507024, %v3418
        %v3434 = vor.u32 %v3432, %v3433
        %vm3435 = vcmp.lt.s32.totalorder %v3416, 1
        %vm3436 = vcmp.lt.s32.totalorder %v3416, 2
        %vm3437 = vcmp.lt.s32.totalorder %v3416, 3
        %vm3438 = vcmp.lt.s32.totalorder %v3416, 4
        %v3439 = vsel %vm3435, %v3419, %v3422
        %v3440 = vsel %vm3438, %v3428, 2102212464
        %v3441 = vsel %vm3437, %v3425, %v3440
        %v3442 = vsel %vm3436, %v3439, %v3441
        %v3443 = vsel %vm3435, %v3422, %v3425
        %v3444 = vsel %vm3438, %v3431, 920167782
        %v3445 = vsel %vm3437, %v3428, %v3444
        %v3446 = vsel %vm3436, %v3443, %v3445
        %v3447 = vsel %vm3435, %v3425, %v3428
        %v3448 = vsel %vm3438, %v3434, 1326507024
        %v3449 = vsel %vm3437, %v3431, %v3448
        %v3450 = vsel %vm3436, %v3447, %v3449
        %v3451 = vshll.u32 %v3411, 8
        %v3452 = vmul.u32.u64.compose %v3451, %v3450
        %v3453 = vextract.low.u32 %v3452
        %v3454 = vextract.high.u32 %v3452
        %v3455 = vmul.u32.u64.compose %v3451, %v3446
        %v3456 = vextract.low.u32 %v3455
        %v3457 = vextract.high.u32 %v3455
        %v3458 = vmul.u32 %v3451, %v3442
        %v3459 = vadd.s32 %v3454, %v3456
        %vm3460 = vc.u32 %v3454, %v3456
        %v3461 = vadd.s32 %v3457, 1
        %v3462 = vsel %vm3460, %v3461, %v3457
        %v3463 = vadd.s32 %v3458, %v3462
        %v3464 = vadd.s32 %v3463, 536870912
        %v3465 = vshrl.u32 %v3464, 30
        %v3466 = vshll.u32 %v3465, 30
        %v3467 = vsub.s32 %v3463, %v3466
        %vm3468 = vcmp.lt.s32.totalorder %v3467, 0
        %v3469 = vsub.s32 0, %v3467
        %v3470 = vsel %vm3468, %v3469, %v3467
        %v3471 = vclz %v3470
        %v3472 = vsub.s32 %v3471, 2
        %vm3473 = vcmp.gt.s32.totalorder 0, %v3472
        %v3474 = vsel %vm3473, 0, %v3472
        %v3475 = vsub.s32 32, %v3474
        %v3476 = vshll.u32 %v3467, %v3474
        %v3477 = vshrl.u32 %v3459, %v3475
        %v3478 = vor.u32 %v3476, %v3477
        %v3479 = vsub.s32 4294967266, %v3474
        %v3480 = vadd.s32 %v3479, 127
        %v3481 = vshll.u32 %v3480, 23
        %v3482 = vor.u32 4788187, %v3481
        %v3483 = vand.u32 2147483647, %v3482
        %v3485 = vcvt.s32.f32 %v3478
        %v3486 = vmul.f32 %v3485, %v3483
        %v3487 = vxor.u32 %v3486, 2147483648
        %v3488 = vsel %vm3405, %v3487, %v3486
        %v3489 = vsub.s32 4, %v3465
        %v3490 = vsel %vm3405, %v3489, %v3465
        %v3491 = vsel %vm3404, %v1105, %v3488
        %v3492 = vsel %vm3404, 0, %v3490
        %v3493 = vcosq.f32.pop %v3491
        %v3494 = vsinq.f32.pop %v3491
        %vm3495 = vweird.f32 %v1105
        %v3496 = vadd.s32 %v3492, 3
        %v3497 = vand.u32 %v3496, 3
        %vm3498 = vcmp.lt.s32.totalorder %v3497, 2
        %vm3499 = vcmp.eq.s32.totalorder %v3497, 0
        %v3500 = vxor.u32 %v3494, 2147483648
        %v3501 = vsel %vm3499, %v3493, %v3500
        %vm3502 = vcmp.eq.s32.totalorder %v3497, 2
        %v3503 = vxor.u32 %v3493, 2147483648
        %v3504 = vsel %vm3502, %v3503, %v3494
        %v3505 = vsel %vm3498, %v3501, %v3504
        %v3506 = vsel %vm3495, nan, %v3505
        %v3507 = vand.u32 2147483647, %v1106
        %vm3508 = vcmp.le.f32.partialorder %v3507, 0.7853982
        %vm3509 = vcmp.lt.s32.totalorder %v1106, 0
        %v3510 = vand.u32 %v1106, 2139095040
        %v3511 = vshrl.u32 %v3510, 23
        %v3512 = vsub.s32 %v3511, 127
        %v3513 = vand.u32 2147483647, %v1106
        %v3514 = vand.u32 %v3513, 8388607
        %v3515 = vor.u32 %v3514, 8388608
        %v3516 = vsub.s32 0, %v3515
        %v3517 = vadd.s32 %v3512, 1
        %vm3518 = vcmp.gt.s32.totalorder %v3517, 0
        %v3519 = vsel %vm3518, %v3517, 0
        %v3520 = vshrl.u32 %v3519, 5
        %v3521 = vand.u32 %v3519, 31
        %v3522 = vsub.s32 32, %v3521
        %v3523 = vshrl.u32 683565275, %v3522
        %v3524 = vshll.u32 683565275, %v3521
        %v3525 = vshrl.u32 2475754826, %v3522
        %v3526 = vor.u32 %v3524, %v3525
        %v3527 = vshll.u32 2475754826, %v3521
        %v3528 = vshrl.u32 2131351028, %v3522
        %v3529 = vor.u32 %v3527, %v3528
        %v3530 = vshll.u32 2131351028, %v3521
        %v3531 = vshrl.u32 2102212464, %v3522
        %v3532 = vor.u32 %v3530, %v3531
        %v3533 = vshll.u32 2102212464, %v3521
        %v3534 = vshrl.u32 920167782, %v3522
        %v3535 = vor.u32 %v3533, %v3534
        %v3536 = vshll.u32 920167782, %v3521
        %v3537 = vshrl.u32 1326507024, %v3522
        %v3538 = vor.u32 %v3536, %v3537
        %vm3539 = vcmp.lt.s32.totalorder %v3520, 1
        %vm3540 = vcmp.lt.s32.totalorder %v3520, 2
        %vm3541 = vcmp.lt.s32.totalorder %v3520, 3
        %vm3542 = vcmp.lt.s32.totalorder %v3520, 4
        %v3543 = vsel %vm3539, %v3523, %v3526
        %v3544 = vsel %vm3542, %v3532, 2102212464
        %v3545 = vsel %vm3541, %v3529, %v3544
        %v3546 = vsel %vm3540, %v3543, %v3545
        %v3547 = vsel %vm3539, %v3526, %v3529
        %v3548 = vsel %vm3542, %v3535, 920167782
        %v3549 = vsel %vm3541, %v3532, %v3548
        %v3550 = vsel %vm3540, %v3547, %v3549
        %v3551 = vsel %vm3539, %v3529, %v3532
        %v3552 = vsel %vm3542, %v3538, 1326507024
        %v3553 = vsel %vm3541, %v3535, %v3552
        %v3554 = vsel %vm3540, %v3551, %v3553
        %v3555 = vshll.u32 %v3515, 8
        %v3556 = vmul.u32.u64.compose %v3555, %v3554
        %v3557 = vextract.low.u32 %v3556
        %v3558 = vextract.high.u32 %v3556
        %v3559 = vmul.u32.u64.compose %v3555, %v3550
        %v3560 = vextract.low.u32 %v3559
        %v3561 = vextract.high.u32 %v3559
        %v3562 = vmul.u32 %v3555, %v3546
        %v3563 = vadd.s32 %v3558, %v3560
        %vm3564 = vc.u32 %v3558, %v3560
        %v3565 = vadd.s32 %v3561, 1
        %v3566 = vsel %vm3564, %v3565, %v3561
        %v3567 = vadd.s32 %v3562, %v3566
        %v3568 = vadd.s32 %v3567, 536870912
        %v3569 = vshrl.u32 %v3568, 30
        %v3570 = vshll.u32 %v3569, 30
        %v3571 = vsub.s32 %v3567, %v3570
        %vm3572 = vcmp.lt.s32.totalorder %v3571, 0
        %v3573 = vsub.s32 0, %v3571
        %v3574 = vsel %vm3572, %v3573, %v3571
        %v3575 = vclz %v3574
        %v3576 = vsub.s32 %v3575, 2
        %vm3577 = vcmp.gt.s32.totalorder 0, %v3576
        %v3578 = vsel %vm3577, 0, %v3576
        %v3579 = vsub.s32 32, %v3578
        %v3580 = vshll.u32 %v3571, %v3578
        %v3581 = vshrl.u32 %v3563, %v3579
        %v3582 = vor.u32 %v3580, %v3581
        %v3583 = vsub.s32 4294967266, %v3578
        %v3584 = vadd.s32 %v3583, 127
        %v3585 = vshll.u32 %v3584, 23
        %v3586 = vor.u32 4788187, %v3585
        %v3587 = vand.u32 2147483647, %v3586
        %v3589 = vcvt.s32.f32 %v3582
        %v3590 = vmul.f32 %v3589, %v3587
        %v3591 = vxor.u32 %v3590, 2147483648
        %v3592 = vsel %vm3509, %v3591, %v3590
        %v3593 = vsub.s32 4, %v3569
        %v3594 = vsel %vm3509, %v3593, %v3569
        %v3595 = vsel %vm3508, %v1106, %v3592
        %v3596 = vsel %vm3508, 0, %v3594
        %v3597 = vcosq.f32.pop %v3595
        %v3598 = vsinq.f32.pop %v3595
        %vm3599 = vweird.f32 %v1106
        %v3600 = vadd.s32 %v3596, 3
        %v3601 = vand.u32 %v3600, 3
        %vm3602 = vcmp.lt.s32.totalorder %v3601, 2
        %vm3603 = vcmp.eq.s32.totalorder %v3601, 0
        %v3604 = vxor.u32 %v3598, 2147483648
        %v3605 = vsel %vm3603, %v3597, %v3604
        %vm3606 = vcmp.eq.s32.totalorder %v3601, 2
        %v3607 = vxor.u32 %v3597, 2147483648
        %v3608 = vsel %vm3606, %v3607, %v3598
        %v3609 = vsel %vm3602, %v3605, %v3608
        %v3610 = vsel %vm3599, nan, %v3609
        %v3611 = vand.u32 2147483647, %v1107
        %vm3612 = vcmp.le.f32.partialorder %v3611, 0.7853982
        %vm3613 = vcmp.lt.s32.totalorder %v1107, 0
        %v3614 = vand.u32 %v1107, 2139095040
        %v3615 = vshrl.u32 %v3614, 23
        %v3616 = vsub.s32 %v3615, 127
        %v3617 = vand.u32 2147483647, %v1107
        %v3618 = vand.u32 %v3617, 8388607
        %v3619 = vor.u32 %v3618, 8388608
        %v3620 = vsub.s32 0, %v3619
        %v3621 = vadd.s32 %v3616, 1
        %vm3622 = vcmp.gt.s32.totalorder %v3621, 0
        %v3623 = vsel %vm3622, %v3621, 0
        %v3624 = vshrl.u32 %v3623, 5
        %v3625 = vand.u32 %v3623, 31
        %v3626 = vsub.s32 32, %v3625
        %v3627 = vshrl.u32 683565275, %v3626
        %v3628 = vshll.u32 683565275, %v3625
        %v3629 = vshrl.u32 2475754826, %v3626
        %v3630 = vor.u32 %v3628, %v3629
        %v3631 = vshll.u32 2475754826, %v3625
        %v3632 = vshrl.u32 2131351028, %v3626
        %v3633 = vor.u32 %v3631, %v3632
        %v3634 = vshll.u32 2131351028, %v3625
        %v3635 = vshrl.u32 2102212464, %v3626
        %v3636 = vor.u32 %v3634, %v3635
        %v3637 = vshll.u32 2102212464, %v3625
        %v3638 = vshrl.u32 920167782, %v3626
        %v3639 = vor.u32 %v3637, %v3638
        %v3640 = vshll.u32 920167782, %v3625
        %v3641 = vshrl.u32 1326507024, %v3626
        %v3642 = vor.u32 %v3640, %v3641
        %vm3643 = vcmp.lt.s32.totalorder %v3624, 1
        %vm3644 = vcmp.lt.s32.totalorder %v3624, 2
        %vm3645 = vcmp.lt.s32.totalorder %v3624, 3
        %vm3646 = vcmp.lt.s32.totalorder %v3624, 4
        %v3647 = vsel %vm3643, %v3627, %v3630
        %v3648 = vsel %vm3646, %v3636, 2102212464
        %v3649 = vsel %vm3645, %v3633, %v3648
        %v3650 = vsel %vm3644, %v3647, %v3649
        %v3651 = vsel %vm3643, %v3630, %v3633
        %v3652 = vsel %vm3646, %v3639, 920167782
        %v3653 = vsel %vm3645, %v3636, %v3652
        %v3654 = vsel %vm3644, %v3651, %v3653
        %v3655 = vsel %vm3643, %v3633, %v3636
        %v3656 = vsel %vm3646, %v3642, 1326507024
        %v3657 = vsel %vm3645, %v3639, %v3656
        %v3658 = vsel %vm3644, %v3655, %v3657
        %v3659 = vshll.u32 %v3619, 8
        %v3660 = vmul.u32.u64.compose %v3659, %v3658
        %v3661 = vextract.low.u32 %v3660
        %v3662 = vextract.high.u32 %v3660
        %v3663 = vmul.u32.u64.compose %v3659, %v3654
        %v3664 = vextract.low.u32 %v3663
        %v3665 = vextract.high.u32 %v3663
        %v3666 = vmul.u32 %v3659, %v3650
        %v3667 = vadd.s32 %v3662, %v3664
        %vm3668 = vc.u32 %v3662, %v3664
        %v3669 = vadd.s32 %v3665, 1
        %v3670 = vsel %vm3668, %v3669, %v3665
        %v3671 = vadd.s32 %v3666, %v3670
        %v3672 = vadd.s32 %v3671, 536870912
        %v3673 = vshrl.u32 %v3672, 30
        %v3674 = vshll.u32 %v3673, 30
        %v3675 = vsub.s32 %v3671, %v3674
        %vm3676 = vcmp.lt.s32.totalorder %v3675, 0
        %v3677 = vsub.s32 0, %v3675
        %v3678 = vsel %vm3676, %v3677, %v3675
        %v3679 = vclz %v3678
        %v3680 = vsub.s32 %v3679, 2
        %vm3681 = vcmp.gt.s32.totalorder 0, %v3680
        %v3682 = vsel %vm3681, 0, %v3680
        %v3683 = vsub.s32 32, %v3682
        %v3684 = vshll.u32 %v3675, %v3682
        %v3685 = vshrl.u32 %v3667, %v3683
        %v3686 = vor.u32 %v3684, %v3685
        %v3687 = vsub.s32 4294967266, %v3682
        %v3688 = vadd.s32 %v3687, 127
        %v3689 = vshll.u32 %v3688, 23
        %v3690 = vor.u32 4788187, %v3689
        %v3691 = vand.u32 2147483647, %v3690
        %v3693 = vcvt.s32.f32 %v3686
        %v3694 = vmul.f32 %v3693, %v3691
        %v3695 = vxor.u32 %v3694, 2147483648
        %v3696 = vsel %vm3613, %v3695, %v3694
        %v3697 = vsub.s32 4, %v3673
        %v3698 = vsel %vm3613, %v3697, %v3673
        %v3699 = vsel %vm3612, %v1107, %v3696
        %v3700 = vsel %vm3612, 0, %v3698
        %v3701 = vcosq.f32.pop %v3699
        %v3702 = vsinq.f32.pop %v3699
        %vm3703 = vweird.f32 %v1107
        %v3704 = vadd.s32 %v3700, 3
        %v3705 = vand.u32 %v3704, 3
        %vm3706 = vcmp.lt.s32.totalorder %v3705, 2
        %vm3707 = vcmp.eq.s32.totalorder %v3705, 0
        %v3708 = vxor.u32 %v3702, 2147483648
        %v3709 = vsel %vm3707, %v3701, %v3708
        %vm3710 = vcmp.eq.s32.totalorder %v3705, 2
        %v3711 = vxor.u32 %v3701, 2147483648
        %v3712 = vsel %vm3710, %v3711, %v3702
        %v3713 = vsel %vm3706, %v3709, %v3712
        %v3714 = vsel %vm3703, nan, %v3713
        %v3715 = vand.u32 2147483647, %v1108
        %vm3716 = vcmp.le.f32.partialorder %v3715, 0.7853982
        %vm3717 = vcmp.lt.s32.totalorder %v1108, 0
        %v3718 = vand.u32 %v1108, 2139095040
        %v3719 = vshrl.u32 %v3718, 23
        %v3720 = vsub.s32 %v3719, 127
        %v3721 = vand.u32 2147483647, %v1108
        %v3722 = vand.u32 %v3721, 8388607
        %v3723 = vor.u32 %v3722, 8388608
        %v3724 = vsub.s32 0, %v3723
        %v3725 = vadd.s32 %v3720, 1
        %vm3726 = vcmp.gt.s32.totalorder %v3725, 0
        %v3727 = vsel %vm3726, %v3725, 0
        %v3728 = vshrl.u32 %v3727, 5
        %v3729 = vand.u32 %v3727, 31
        %v3730 = vsub.s32 32, %v3729
        %v3731 = vshrl.u32 683565275, %v3730
        %v3732 = vshll.u32 683565275, %v3729
        %v3733 = vshrl.u32 2475754826, %v3730
        %v3734 = vor.u32 %v3732, %v3733
        %v3735 = vshll.u32 2475754826, %v3729
        %v3736 = vshrl.u32 2131351028, %v3730
        %v3737 = vor.u32 %v3735, %v3736
        %v3738 = vshll.u32 2131351028, %v3729
        %v3739 = vshrl.u32 2102212464, %v3730
        %v3740 = vor.u32 %v3738, %v3739
        %v3741 = vshll.u32 2102212464, %v3729
        %v3742 = vshrl.u32 920167782, %v3730
        %v3743 = vor.u32 %v3741, %v3742
        %v3744 = vshll.u32 920167782, %v3729
        %v3745 = vshrl.u32 1326507024, %v3730
        %v3746 = vor.u32 %v3744, %v3745
        %vm3747 = vcmp.lt.s32.totalorder %v3728, 1
        %vm3748 = vcmp.lt.s32.totalorder %v3728, 2
        %vm3749 = vcmp.lt.s32.totalorder %v3728, 3
        %vm3750 = vcmp.lt.s32.totalorder %v3728, 4
        %v3751 = vsel %vm3747, %v3731, %v3734
        %v3752 = vsel %vm3750, %v3740, 2102212464
        %v3753 = vsel %vm3749, %v3737, %v3752
        %v3754 = vsel %vm3748, %v3751, %v3753
        %v3755 = vsel %vm3747, %v3734, %v3737
        %v3756 = vsel %vm3750, %v3743, 920167782
        %v3757 = vsel %vm3749, %v3740, %v3756
        %v3758 = vsel %vm3748, %v3755, %v3757
        %v3759 = vsel %vm3747, %v3737, %v3740
        %v3760 = vsel %vm3750, %v3746, 1326507024
        %v3761 = vsel %vm3749, %v3743, %v3760
        %v3762 = vsel %vm3748, %v3759, %v3761
        %v3763 = vshll.u32 %v3723, 8
        %v3764 = vmul.u32.u64.compose %v3763, %v3762
        %v3765 = vextract.low.u32 %v3764
        %v3766 = vextract.high.u32 %v3764
        %v3767 = vmul.u32.u64.compose %v3763, %v3758
        %v3768 = vextract.low.u32 %v3767
        %v3769 = vextract.high.u32 %v3767
        %v3770 = vmul.u32 %v3763, %v3754
        %v3771 = vadd.s32 %v3766, %v3768
        %vm3772 = vc.u32 %v3766, %v3768
        %v3773 = vadd.s32 %v3769, 1
        %v3774 = vsel %vm3772, %v3773, %v3769
        %v3775 = vadd.s32 %v3770, %v3774
        %v3776 = vadd.s32 %v3775, 536870912
        %v3777 = vshrl.u32 %v3776, 30
        %v3778 = vshll.u32 %v3777, 30
        %v3779 = vsub.s32 %v3775, %v3778
        %vm3780 = vcmp.lt.s32.totalorder %v3779, 0
        %v3781 = vsub.s32 0, %v3779
        %v3782 = vsel %vm3780, %v3781, %v3779
        %v3783 = vclz %v3782
        %v3784 = vsub.s32 %v3783, 2
        %vm3785 = vcmp.gt.s32.totalorder 0, %v3784
        %v3786 = vsel %vm3785, 0, %v3784
        %v3787 = vsub.s32 32, %v3786
        %v3788 = vshll.u32 %v3779, %v3786
        %v3789 = vshrl.u32 %v3771, %v3787
        %v3790 = vor.u32 %v3788, %v3789
        %v3791 = vsub.s32 4294967266, %v3786
        %v3792 = vadd.s32 %v3791, 127
        %v3793 = vshll.u32 %v3792, 23
        %v3794 = vor.u32 4788187, %v3793
        %v3795 = vand.u32 2147483647, %v3794
        %v3797 = vcvt.s32.f32 %v3790
        %v3798 = vmul.f32 %v3797, %v3795
        %v3799 = vxor.u32 %v3798, 2147483648
        %v3800 = vsel %vm3717, %v3799, %v3798
        %v3801 = vsub.s32 4, %v3777
        %v3802 = vsel %vm3717, %v3801, %v3777
        %v3803 = vsel %vm3716, %v1108, %v3800
        %v3804 = vsel %vm3716, 0, %v3802
        %v3805 = vcosq.f32.pop %v3803
        %v3806 = vsinq.f32.pop %v3803
        %vm3807 = vweird.f32 %v1108
        %v3808 = vadd.s32 %v3804, 3
        %v3809 = vand.u32 %v3808, 3
        %vm3810 = vcmp.lt.s32.totalorder %v3809, 2
        %vm3811 = vcmp.eq.s32.totalorder %v3809, 0
        %v3812 = vxor.u32 %v3806, 2147483648
        %v3813 = vsel %vm3811, %v3805, %v3812
        %vm3814 = vcmp.eq.s32.totalorder %v3809, 2
        %v3815 = vxor.u32 %v3805, 2147483648
        %v3816 = vsel %vm3814, %v3815, %v3806
        %v3817 = vsel %vm3810, %v3813, %v3816
        %v3818 = vsel %vm3807, nan, %v3817
        %v3819 = vand.u32 2147483647, %v1109
        %vm3820 = vcmp.le.f32.partialorder %v3819, 0.7853982
        %vm3821 = vcmp.lt.s32.totalorder %v1109, 0
        %v3822 = vand.u32 %v1109, 2139095040
        %v3823 = vshrl.u32 %v3822, 23
        %v3824 = vsub.s32 %v3823, 127
        %v3825 = vand.u32 2147483647, %v1109
        %v3826 = vand.u32 %v3825, 8388607
        %v3827 = vor.u32 %v3826, 8388608
        %v3828 = vsub.s32 0, %v3827
        %v3829 = vadd.s32 %v3824, 1
        %vm3830 = vcmp.gt.s32.totalorder %v3829, 0
        %v3831 = vsel %vm3830, %v3829, 0
        %v3832 = vshrl.u32 %v3831, 5
        %v3833 = vand.u32 %v3831, 31
        %v3834 = vsub.s32 32, %v3833
        %v3835 = vshrl.u32 683565275, %v3834
        %v3836 = vshll.u32 683565275, %v3833
        %v3837 = vshrl.u32 2475754826, %v3834
        %v3838 = vor.u32 %v3836, %v3837
        %v3839 = vshll.u32 2475754826, %v3833
        %v3840 = vshrl.u32 2131351028, %v3834
        %v3841 = vor.u32 %v3839, %v3840
        %v3842 = vshll.u32 2131351028, %v3833
        %v3843 = vshrl.u32 2102212464, %v3834
        %v3844 = vor.u32 %v3842, %v3843
        %v3845 = vshll.u32 2102212464, %v3833
        %v3846 = vshrl.u32 920167782, %v3834
        %v3847 = vor.u32 %v3845, %v3846
        %v3848 = vshll.u32 920167782, %v3833
        %v3849 = vshrl.u32 1326507024, %v3834
        %v3850 = vor.u32 %v3848, %v3849
        %vm3851 = vcmp.lt.s32.totalorder %v3832, 1
        %vm3852 = vcmp.lt.s32.totalorder %v3832, 2
        %vm3853 = vcmp.lt.s32.totalorder %v3832, 3
        %vm3854 = vcmp.lt.s32.totalorder %v3832, 4
        %v3855 = vsel %vm3851, %v3835, %v3838
        %v3856 = vsel %vm3854, %v3844, 2102212464
        %v3857 = vsel %vm3853, %v3841, %v3856
        %v3858 = vsel %vm3852, %v3855, %v3857
        %v3859 = vsel %vm3851, %v3838, %v3841
        %v3860 = vsel %vm3854, %v3847, 920167782
        %v3861 = vsel %vm3853, %v3844, %v3860
        %v3862 = vsel %vm3852, %v3859, %v3861
        %v3863 = vsel %vm3851, %v3841, %v3844
        %v3864 = vsel %vm3854, %v3850, 1326507024
        %v3865 = vsel %vm3853, %v3847, %v3864
        %v3866 = vsel %vm3852, %v3863, %v3865
        %v3867 = vshll.u32 %v3827, 8
        %v3868 = vmul.u32.u64.compose %v3867, %v3866
        %v3869 = vextract.low.u32 %v3868
        %v3870 = vextract.high.u32 %v3868
        %v3871 = vmul.u32.u64.compose %v3867, %v3862
        %v3872 = vextract.low.u32 %v3871
        %v3873 = vextract.high.u32 %v3871
        %v3874 = vmul.u32 %v3867, %v3858
        %v3875 = vadd.s32 %v3870, %v3872
        %vm3876 = vc.u32 %v3870, %v3872
        %v3877 = vadd.s32 %v3873, 1
        %v3878 = vsel %vm3876, %v3877, %v3873
        %v3879 = vadd.s32 %v3874, %v3878
        %v3880 = vadd.s32 %v3879, 536870912
        %v3881 = vshrl.u32 %v3880, 30
        %v3882 = vshll.u32 %v3881, 30
        %v3883 = vsub.s32 %v3879, %v3882
        %vm3884 = vcmp.lt.s32.totalorder %v3883, 0
        %v3885 = vsub.s32 0, %v3883
        %v3886 = vsel %vm3884, %v3885, %v3883
        %v3887 = vclz %v3886
        %v3888 = vsub.s32 %v3887, 2
        %vm3889 = vcmp.gt.s32.totalorder 0, %v3888
        %v3890 = vsel %vm3889, 0, %v3888
        %v3891 = vsub.s32 32, %v3890
        %v3892 = vshll.u32 %v3883, %v3890
        %v3893 = vshrl.u32 %v3875, %v3891
        %v3894 = vor.u32 %v3892, %v3893
        %v3895 = vsub.s32 4294967266, %v3890
        %v3896 = vadd.s32 %v3895, 127
        %v3897 = vshll.u32 %v3896, 23
        %v3898 = vor.u32 4788187, %v3897
        %v3899 = vand.u32 2147483647, %v3898
        %v3901 = vcvt.s32.f32 %v3894
        %v3902 = vmul.f32 %v3901, %v3899
        %v3903 = vxor.u32 %v3902, 2147483648
        %v3904 = vsel %vm3821, %v3903, %v3902
        %v3905 = vsub.s32 4, %v3881
        %v3906 = vsel %vm3821, %v3905, %v3881
        %v3907 = vsel %vm3820, %v1109, %v3904
        %v3908 = vsel %vm3820, 0, %v3906
        %v3909 = vcosq.f32.pop %v3907
        %v3910 = vsinq.f32.pop %v3907
        %vm3911 = vweird.f32 %v1109
        %v3912 = vadd.s32 %v3908, 3
        %v3913 = vand.u32 %v3912, 3
        %vm3914 = vcmp.lt.s32.totalorder %v3913, 2
        %vm3915 = vcmp.eq.s32.totalorder %v3913, 0
        %v3916 = vxor.u32 %v3910, 2147483648
        %v3917 = vsel %vm3915, %v3909, %v3916
        %vm3918 = vcmp.eq.s32.totalorder %v3913, 2
        %v3919 = vxor.u32 %v3909, 2147483648
        %v3920 = vsel %vm3918, %v3919, %v3910
        %v3921 = vsel %vm3914, %v3917, %v3920
        %v3922 = vsel %vm3911, nan, %v3921
        %v3923 = vand.u32 2147483647, %v1110
        %vm3924 = vcmp.le.f32.partialorder %v3923, 0.7853982
        %vm3925 = vcmp.lt.s32.totalorder %v1110, 0
        %v3926 = vand.u32 %v1110, 2139095040
        %v3927 = vshrl.u32 %v3926, 23
        %v3928 = vsub.s32 %v3927, 127
        %v3929 = vand.u32 2147483647, %v1110
        %v3930 = vand.u32 %v3929, 8388607
        %v3931 = vor.u32 %v3930, 8388608
        %v3932 = vsub.s32 0, %v3931
        %v3933 = vadd.s32 %v3928, 1
        %vm3934 = vcmp.gt.s32.totalorder %v3933, 0
        %v3935 = vsel %vm3934, %v3933, 0
        %v3936 = vshrl.u32 %v3935, 5
        %v3937 = vand.u32 %v3935, 31
        %v3938 = vsub.s32 32, %v3937
        %v3939 = vshrl.u32 683565275, %v3938
        %v3940 = vshll.u32 683565275, %v3937
        %v3941 = vshrl.u32 2475754826, %v3938
        %v3942 = vor.u32 %v3940, %v3941
        %v3943 = vshll.u32 2475754826, %v3937
        %v3944 = vshrl.u32 2131351028, %v3938
        %v3945 = vor.u32 %v3943, %v3944
        %v3946 = vshll.u32 2131351028, %v3937
        %v3947 = vshrl.u32 2102212464, %v3938
        %v3948 = vor.u32 %v3946, %v3947
        %v3949 = vshll.u32 2102212464, %v3937
        %v3950 = vshrl.u32 920167782, %v3938
        %v3951 = vor.u32 %v3949, %v3950
        %v3952 = vshll.u32 920167782, %v3937
        %v3953 = vshrl.u32 1326507024, %v3938
        %v3954 = vor.u32 %v3952, %v3953
        %vm3955 = vcmp.lt.s32.totalorder %v3936, 1
        %vm3956 = vcmp.lt.s32.totalorder %v3936, 2
        %vm3957 = vcmp.lt.s32.totalorder %v3936, 3
        %vm3958 = vcmp.lt.s32.totalorder %v3936, 4
        %v3959 = vsel %vm3955, %v3939, %v3942
        %v3960 = vsel %vm3958, %v3948, 2102212464
        %v3961 = vsel %vm3957, %v3945, %v3960
        %v3962 = vsel %vm3956, %v3959, %v3961
        %v3963 = vsel %vm3955, %v3942, %v3945
        %v3964 = vsel %vm3958, %v3951, 920167782
        %v3965 = vsel %vm3957, %v3948, %v3964
        %v3966 = vsel %vm3956, %v3963, %v3965
        %v3967 = vsel %vm3955, %v3945, %v3948
        %v3968 = vsel %vm3958, %v3954, 1326507024
        %v3969 = vsel %vm3957, %v3951, %v3968
        %v3970 = vsel %vm3956, %v3967, %v3969
        %v3971 = vshll.u32 %v3931, 8
        %v3972 = vmul.u32.u64.compose %v3971, %v3970
        %v3973 = vextract.low.u32 %v3972
        %v3974 = vextract.high.u32 %v3972
        %v3975 = vmul.u32.u64.compose %v3971, %v3966
        %v3976 = vextract.low.u32 %v3975
        %v3977 = vextract.high.u32 %v3975
        %v3978 = vmul.u32 %v3971, %v3962
        %v3979 = vadd.s32 %v3974, %v3976
        %vm3980 = vc.u32 %v3974, %v3976
        %v3981 = vadd.s32 %v3977, 1
        %v3982 = vsel %vm3980, %v3981, %v3977
        %v3983 = vadd.s32 %v3978, %v3982
        %v3984 = vadd.s32 %v3983, 536870912
        %v3985 = vshrl.u32 %v3984, 30
        %v3986 = vshll.u32 %v3985, 30
        %v3987 = vsub.s32 %v3983, %v3986
        %vm3988 = vcmp.lt.s32.totalorder %v3987, 0
        %v3989 = vsub.s32 0, %v3987
        %v3990 = vsel %vm3988, %v3989, %v3987
        %v3991 = vclz %v3990
        %v3992 = vsub.s32 %v3991, 2
        %vm3993 = vcmp.gt.s32.totalorder 0, %v3992
        %v3994 = vsel %vm3993, 0, %v3992
        %v3995 = vsub.s32 32, %v3994
        %v3996 = vshll.u32 %v3987, %v3994
        %v3997 = vshrl.u32 %v3979, %v3995
        %v3998 = vor.u32 %v3996, %v3997
        %v3999 = vsub.s32 4294967266, %v3994
        %v4000 = vadd.s32 %v3999, 127
        %v4001 = vshll.u32 %v4000, 23
        %v4002 = vor.u32 4788187, %v4001
        %v4003 = vand.u32 2147483647, %v4002
        %v4005 = vcvt.s32.f32 %v3998
        %v4006 = vmul.f32 %v4005, %v4003
        %v4007 = vxor.u32 %v4006, 2147483648
        %v4008 = vsel %vm3925, %v4007, %v4006
        %v4009 = vsub.s32 4, %v3985
        %v4010 = vsel %vm3925, %v4009, %v3985
        %v4011 = vsel %vm3924, %v1110, %v4008
        %v4012 = vsel %vm3924, 0, %v4010
        %v4013 = vcosq.f32.pop %v4011
        %v4014 = vsinq.f32.pop %v4011
        %vm4015 = vweird.f32 %v1110
        %v4016 = vadd.s32 %v4012, 3
        %v4017 = vand.u32 %v4016, 3
        %vm4018 = vcmp.lt.s32.totalorder %v4017, 2
        %vm4019 = vcmp.eq.s32.totalorder %v4017, 0
        %v4020 = vxor.u32 %v4014, 2147483648
        %v4021 = vsel %vm4019, %v4013, %v4020
        %vm4022 = vcmp.eq.s32.totalorder %v4017, 2
        %v4023 = vxor.u32 %v4013, 2147483648
        %v4024 = vsel %vm4022, %v4023, %v4014
        %v4025 = vsel %vm4018, %v4021, %v4024
        %v4026 = vsel %vm4015, nan, %v4025
        %v4027 = vand.u32 2147483647, %v1111
        %vm4028 = vcmp.le.f32.partialorder %v4027, 0.7853982
        %vm4029 = vcmp.lt.s32.totalorder %v1111, 0
        %v4030 = vand.u32 %v1111, 2139095040
        %v4031 = vshrl.u32 %v4030, 23
        %v4032 = vsub.s32 %v4031, 127
        %v4033 = vand.u32 2147483647, %v1111
        %v4034 = vand.u32 %v4033, 8388607
        %v4035 = vor.u32 %v4034, 8388608
        %v4036 = vsub.s32 0, %v4035
        %v4037 = vadd.s32 %v4032, 1
        %vm4038 = vcmp.gt.s32.totalorder %v4037, 0
        %v4039 = vsel %vm4038, %v4037, 0
        %v4040 = vshrl.u32 %v4039, 5
        %v4041 = vand.u32 %v4039, 31
        %v4042 = vsub.s32 32, %v4041
        %v4043 = vshrl.u32 683565275, %v4042
        %v4044 = vshll.u32 683565275, %v4041
        %v4045 = vshrl.u32 2475754826, %v4042
        %v4046 = vor.u32 %v4044, %v4045
        %v4047 = vshll.u32 2475754826, %v4041
        %v4048 = vshrl.u32 2131351028, %v4042
        %v4049 = vor.u32 %v4047, %v4048
        %v4050 = vshll.u32 2131351028, %v4041
        %v4051 = vshrl.u32 2102212464, %v4042
        %v4052 = vor.u32 %v4050, %v4051
        %v4053 = vshll.u32 2102212464, %v4041
        %v4054 = vshrl.u32 920167782, %v4042
        %v4055 = vor.u32 %v4053, %v4054
        %v4056 = vshll.u32 920167782, %v4041
        %v4057 = vshrl.u32 1326507024, %v4042
        %v4058 = vor.u32 %v4056, %v4057
        %vm4059 = vcmp.lt.s32.totalorder %v4040, 1
        %vm4060 = vcmp.lt.s32.totalorder %v4040, 2
        %vm4061 = vcmp.lt.s32.totalorder %v4040, 3
        %vm4062 = vcmp.lt.s32.totalorder %v4040, 4
        %v4063 = vsel %vm4059, %v4043, %v4046
        %v4064 = vsel %vm4062, %v4052, 2102212464
        %v4065 = vsel %vm4061, %v4049, %v4064
        %v4066 = vsel %vm4060, %v4063, %v4065
        %v4067 = vsel %vm4059, %v4046, %v4049
        %v4068 = vsel %vm4062, %v4055, 920167782
        %v4069 = vsel %vm4061, %v4052, %v4068
        %v4070 = vsel %vm4060, %v4067, %v4069
        %v4071 = vsel %vm4059, %v4049, %v4052
        %v4072 = vsel %vm4062, %v4058, 1326507024
        %v4073 = vsel %vm4061, %v4055, %v4072
        %v4074 = vsel %vm4060, %v4071, %v4073
        %v4075 = vshll.u32 %v4035, 8
        %v4076 = vmul.u32.u64.compose %v4075, %v4074
        %v4077 = vextract.low.u32 %v4076
        %v4078 = vextract.high.u32 %v4076
        %v4079 = vmul.u32.u64.compose %v4075, %v4070
        %v4080 = vextract.low.u32 %v4079
        %v4081 = vextract.high.u32 %v4079
        %v4082 = vmul.u32 %v4075, %v4066
        %v4083 = vadd.s32 %v4078, %v4080
        %vm4084 = vc.u32 %v4078, %v4080
        %v4085 = vadd.s32 %v4081, 1
        %v4086 = vsel %vm4084, %v4085, %v4081
        %v4087 = vadd.s32 %v4082, %v4086
        %v4088 = vadd.s32 %v4087, 536870912
        %v4089 = vshrl.u32 %v4088, 30
        %v4090 = vshll.u32 %v4089, 30
        %v4091 = vsub.s32 %v4087, %v4090
        %vm4092 = vcmp.lt.s32.totalorder %v4091, 0
        %v4093 = vsub.s32 0, %v4091
        %v4094 = vsel %vm4092, %v4093, %v4091
        %v4095 = vclz %v4094
        %v4096 = vsub.s32 %v4095, 2
        %vm4097 = vcmp.gt.s32.totalorder 0, %v4096
        %v4098 = vsel %vm4097, 0, %v4096
        %v4099 = vsub.s32 32, %v4098
        %v4100 = vshll.u32 %v4091, %v4098
        %v4101 = vshrl.u32 %v4083, %v4099
        %v4102 = vor.u32 %v4100, %v4101
        %v4103 = vsub.s32 4294967266, %v4098
        %v4104 = vadd.s32 %v4103, 127
        %v4105 = vshll.u32 %v4104, 23
        %v4106 = vor.u32 4788187, %v4105
        %v4107 = vand.u32 2147483647, %v4106
        %v4109 = vcvt.s32.f32 %v4102
        %v4110 = vmul.f32 %v4109, %v4107
        %v4111 = vxor.u32 %v4110, 2147483648
        %v4112 = vsel %vm4029, %v4111, %v4110
        %v4113 = vsub.s32 4, %v4089
        %v4114 = vsel %vm4029, %v4113, %v4089
        %v4115 = vsel %vm4028, %v1111, %v4112
        %v4116 = vsel %vm4028, 0, %v4114
        %v4117 = vcosq.f32.pop %v4115
        %v4118 = vsinq.f32.pop %v4115
        %vm4119 = vweird.f32 %v1111
        %v4120 = vadd.s32 %v4116, 3
        %v4121 = vand.u32 %v4120, 3
        %vm4122 = vcmp.lt.s32.totalorder %v4121, 2
        %vm4123 = vcmp.eq.s32.totalorder %v4121, 0
        %v4124 = vxor.u32 %v4118, 2147483648
        %v4125 = vsel %vm4123, %v4117, %v4124
        %vm4126 = vcmp.eq.s32.totalorder %v4121, 2
        %v4127 = vxor.u32 %v4117, 2147483648
        %v4128 = vsel %vm4126, %v4127, %v4118
        %v4129 = vsel %vm4122, %v4125, %v4128
        %v4130 = vsel %vm4119, nan, %v4129
        %v4131 = vand.u32 2147483647, %v1112
        %vm4132 = vcmp.le.f32.partialorder %v4131, 0.7853982
        %vm4133 = vcmp.lt.s32.totalorder %v1112, 0
        %v4134 = vand.u32 %v1112, 2139095040
        %v4135 = vshrl.u32 %v4134, 23
        %v4136 = vsub.s32 %v4135, 127
        %v4137 = vand.u32 2147483647, %v1112
        %v4138 = vand.u32 %v4137, 8388607
        %v4139 = vor.u32 %v4138, 8388608
        %v4140 = vsub.s32 0, %v4139
        %v4141 = vadd.s32 %v4136, 1
        %vm4142 = vcmp.gt.s32.totalorder %v4141, 0
        %v4143 = vsel %vm4142, %v4141, 0
        %v4144 = vshrl.u32 %v4143, 5
        %v4145 = vand.u32 %v4143, 31
        %v4146 = vsub.s32 32, %v4145
        %v4147 = vshrl.u32 683565275, %v4146
        %v4148 = vshll.u32 683565275, %v4145
        %v4149 = vshrl.u32 2475754826, %v4146
        %v4150 = vor.u32 %v4148, %v4149
        %v4151 = vshll.u32 2475754826, %v4145
        %v4152 = vshrl.u32 2131351028, %v4146
        %v4153 = vor.u32 %v4151, %v4152
        %v4154 = vshll.u32 2131351028, %v4145
        %v4155 = vshrl.u32 2102212464, %v4146
        %v4156 = vor.u32 %v4154, %v4155
        %v4157 = vshll.u32 2102212464, %v4145
        %v4158 = vshrl.u32 920167782, %v4146
        %v4159 = vor.u32 %v4157, %v4158
        %v4160 = vshll.u32 920167782, %v4145
        %v4161 = vshrl.u32 1326507024, %v4146
        %v4162 = vor.u32 %v4160, %v4161
        %vm4163 = vcmp.lt.s32.totalorder %v4144, 1
        %vm4164 = vcmp.lt.s32.totalorder %v4144, 2
        %vm4165 = vcmp.lt.s32.totalorder %v4144, 3
        %vm4166 = vcmp.lt.s32.totalorder %v4144, 4
        %v4167 = vsel %vm4163, %v4147, %v4150
        %v4168 = vsel %vm4166, %v4156, 2102212464
        %v4169 = vsel %vm4165, %v4153, %v4168
        %v4170 = vsel %vm4164, %v4167, %v4169
        %v4171 = vsel %vm4163, %v4150, %v4153
        %v4172 = vsel %vm4166, %v4159, 920167782
        %v4173 = vsel %vm4165, %v4156, %v4172
        %v4174 = vsel %vm4164, %v4171, %v4173
        %v4175 = vsel %vm4163, %v4153, %v4156
        %v4176 = vsel %vm4166, %v4162, 1326507024
        %v4177 = vsel %vm4165, %v4159, %v4176
        %v4178 = vsel %vm4164, %v4175, %v4177
        %v4179 = vshll.u32 %v4139, 8
        %v4180 = vmul.u32.u64.compose %v4179, %v4178
        %v4181 = vextract.low.u32 %v4180
        %v4182 = vextract.high.u32 %v4180
        %v4183 = vmul.u32.u64.compose %v4179, %v4174
        %v4184 = vextract.low.u32 %v4183
        %v4185 = vextract.high.u32 %v4183
        %v4186 = vmul.u32 %v4179, %v4170
        %v4187 = vadd.s32 %v4182, %v4184
        %vm4188 = vc.u32 %v4182, %v4184
        %v4189 = vadd.s32 %v4185, 1
        %v4190 = vsel %vm4188, %v4189, %v4185
        %v4191 = vadd.s32 %v4186, %v4190
        %v4192 = vadd.s32 %v4191, 536870912
        %v4193 = vshrl.u32 %v4192, 30
        %v4194 = vshll.u32 %v4193, 30
        %v4195 = vsub.s32 %v4191, %v4194
        %vm4196 = vcmp.lt.s32.totalorder %v4195, 0
        %v4197 = vsub.s32 0, %v4195
        %v4198 = vsel %vm4196, %v4197, %v4195
        %v4199 = vclz %v4198
        %v4200 = vsub.s32 %v4199, 2
        %vm4201 = vcmp.gt.s32.totalorder 0, %v4200
        %v4202 = vsel %vm4201, 0, %v4200
        %v4203 = vsub.s32 32, %v4202
        %v4204 = vshll.u32 %v4195, %v4202
        %v4205 = vshrl.u32 %v4187, %v4203
        %v4206 = vor.u32 %v4204, %v4205
        %v4207 = vsub.s32 4294967266, %v4202
        %v4208 = vadd.s32 %v4207, 127
        %v4209 = vshll.u32 %v4208, 23
        %v4210 = vor.u32 4788187, %v4209
        %v4211 = vand.u32 2147483647, %v4210
        %v4213 = vcvt.s32.f32 %v4206
        %v4214 = vmul.f32 %v4213, %v4211
        %v4215 = vxor.u32 %v4214, 2147483648
        %v4216 = vsel %vm4133, %v4215, %v4214
        %v4217 = vsub.s32 4, %v4193
        %v4218 = vsel %vm4133, %v4217, %v4193
        %v4219 = vsel %vm4132, %v1112, %v4216
        %v4220 = vsel %vm4132, 0, %v4218
        %v4221 = vcosq.f32.pop %v4219
        %v4222 = vsinq.f32.pop %v4219
        %vm4223 = vweird.f32 %v1112
        %v4224 = vadd.s32 %v4220, 3
        %v4225 = vand.u32 %v4224, 3
        %vm4226 = vcmp.lt.s32.totalorder %v4225, 2
        %vm4227 = vcmp.eq.s32.totalorder %v4225, 0
        %v4228 = vxor.u32 %v4222, 2147483648
        %v4229 = vsel %vm4227, %v4221, %v4228
        %vm4230 = vcmp.eq.s32.totalorder %v4225, 2
        %v4231 = vxor.u32 %v4221, 2147483648
        %v4232 = vsel %vm4230, %v4231, %v4222
        %v4233 = vsel %vm4226, %v4229, %v4232
        %v4234 = vsel %vm4223, nan, %v4233
        %v4235 = vand.u32 2147483647, %v1113
        %vm4236 = vcmp.le.f32.partialorder %v4235, 0.7853982
        %vm4237 = vcmp.lt.s32.totalorder %v1113, 0
        %v4238 = vand.u32 %v1113, 2139095040
        %v4239 = vshrl.u32 %v4238, 23
        %v4240 = vsub.s32 %v4239, 127
        %v4241 = vand.u32 2147483647, %v1113
        %v4242 = vand.u32 %v4241, 8388607
        %v4243 = vor.u32 %v4242, 8388608
        %v4244 = vsub.s32 0, %v4243
        %v4245 = vadd.s32 %v4240, 1
        %vm4246 = vcmp.gt.s32.totalorder %v4245, 0
        %v4247 = vsel %vm4246, %v4245, 0
        %v4248 = vshrl.u32 %v4247, 5
        %v4249 = vand.u32 %v4247, 31
        %v4250 = vsub.s32 32, %v4249
        %v4251 = vshrl.u32 683565275, %v4250
        %v4252 = vshll.u32 683565275, %v4249
        %v4253 = vshrl.u32 2475754826, %v4250
        %v4254 = vor.u32 %v4252, %v4253
        %v4255 = vshll.u32 2475754826, %v4249
        %v4256 = vshrl.u32 2131351028, %v4250
        %v4257 = vor.u32 %v4255, %v4256
        %v4258 = vshll.u32 2131351028, %v4249
        %v4259 = vshrl.u32 2102212464, %v4250
        %v4260 = vor.u32 %v4258, %v4259
        %v4261 = vshll.u32 2102212464, %v4249
        %v4262 = vshrl.u32 920167782, %v4250
        %v4263 = vor.u32 %v4261, %v4262
        %v4264 = vshll.u32 920167782, %v4249
        %v4265 = vshrl.u32 1326507024, %v4250
        %v4266 = vor.u32 %v4264, %v4265
        %vm4267 = vcmp.lt.s32.totalorder %v4248, 1
        %vm4268 = vcmp.lt.s32.totalorder %v4248, 2
        %vm4269 = vcmp.lt.s32.totalorder %v4248, 3
        %vm4270 = vcmp.lt.s32.totalorder %v4248, 4
        %v4271 = vsel %vm4267, %v4251, %v4254
        %v4272 = vsel %vm4270, %v4260, 2102212464
        %v4273 = vsel %vm4269, %v4257, %v4272
        %v4274 = vsel %vm4268, %v4271, %v4273
        %v4275 = vsel %vm4267, %v4254, %v4257
        %v4276 = vsel %vm4270, %v4263, 920167782
        %v4277 = vsel %vm4269, %v4260, %v4276
        %v4278 = vsel %vm4268, %v4275, %v4277
        %v4279 = vsel %vm4267, %v4257, %v4260
        %v4280 = vsel %vm4270, %v4266, 1326507024
        %v4281 = vsel %vm4269, %v4263, %v4280
        %v4282 = vsel %vm4268, %v4279, %v4281
        %v4283 = vshll.u32 %v4243, 8
        %v4284 = vmul.u32.u64.compose %v4283, %v4282
        %v4285 = vextract.low.u32 %v4284
        %v4286 = vextract.high.u32 %v4284
        %v4287 = vmul.u32.u64.compose %v4283, %v4278
        %v4288 = vextract.low.u32 %v4287
        %v4289 = vextract.high.u32 %v4287
        %v4290 = vmul.u32 %v4283, %v4274
        %v4291 = vadd.s32 %v4286, %v4288
        %vm4292 = vc.u32 %v4286, %v4288
        %v4293 = vadd.s32 %v4289, 1
        %v4294 = vsel %vm4292, %v4293, %v4289
        %v4295 = vadd.s32 %v4290, %v4294
        %v4296 = vadd.s32 %v4295, 536870912
        %v4297 = vshrl.u32 %v4296, 30
        %v4298 = vshll.u32 %v4297, 30
        %v4299 = vsub.s32 %v4295, %v4298
        %vm4300 = vcmp.lt.s32.totalorder %v4299, 0
        %v4301 = vsub.s32 0, %v4299
        %v4302 = vsel %vm4300, %v4301, %v4299
        %v4303 = vclz %v4302
        %v4304 = vsub.s32 %v4303, 2
        %vm4305 = vcmp.gt.s32.totalorder 0, %v4304
        %v4306 = vsel %vm4305, 0, %v4304
        %v4307 = vsub.s32 32, %v4306
        %v4308 = vshll.u32 %v4299, %v4306
        %v4309 = vshrl.u32 %v4291, %v4307
        %v4310 = vor.u32 %v4308, %v4309
        %v4311 = vsub.s32 4294967266, %v4306
        %v4312 = vadd.s32 %v4311, 127
        %v4313 = vshll.u32 %v4312, 23
        %v4314 = vor.u32 4788187, %v4313
        %v4315 = vand.u32 2147483647, %v4314
        %v4317 = vcvt.s32.f32 %v4310
        %v4318 = vmul.f32 %v4317, %v4315
        %v4319 = vxor.u32 %v4318, 2147483648
        %v4320 = vsel %vm4237, %v4319, %v4318
        %v4321 = vsub.s32 4, %v4297
        %v4322 = vsel %vm4237, %v4321, %v4297
        %v4323 = vsel %vm4236, %v1113, %v4320
        %v4324 = vsel %vm4236, 0, %v4322
        %v4325 = vcosq.f32.pop %v4323
        %v4326 = vsinq.f32.pop %v4323
        %vm4327 = vweird.f32 %v1113
        %v4328 = vadd.s32 %v4324, 3
        %v4329 = vand.u32 %v4328, 3
        %vm4330 = vcmp.lt.s32.totalorder %v4329, 2
        %vm4331 = vcmp.eq.s32.totalorder %v4329, 0
        %v4332 = vxor.u32 %v4326, 2147483648
        %v4333 = vsel %vm4331, %v4325, %v4332
        %vm4334 = vcmp.eq.s32.totalorder %v4329, 2
        %v4335 = vxor.u32 %v4325, 2147483648
        %v4336 = vsel %vm4334, %v4335, %v4326
        %v4337 = vsel %vm4330, %v4333, %v4336
        %v4338 = vsel %vm4327, nan, %v4337
        %v4339 = vand.u32 2147483647, %v1114
        %vm4340 = vcmp.le.f32.partialorder %v4339, 0.7853982
        %vm4341 = vcmp.lt.s32.totalorder %v1114, 0
        %v4342 = vand.u32 %v1114, 2139095040
        %v4343 = vshrl.u32 %v4342, 23
        %v4344 = vsub.s32 %v4343, 127
        %v4345 = vand.u32 2147483647, %v1114
        %v4346 = vand.u32 %v4345, 8388607
        %v4347 = vor.u32 %v4346, 8388608
        %v4348 = vsub.s32 0, %v4347
        %v4349 = vadd.s32 %v4344, 1
        %vm4350 = vcmp.gt.s32.totalorder %v4349, 0
        %v4351 = vsel %vm4350, %v4349, 0
        %v4352 = vshrl.u32 %v4351, 5
        %v4353 = vand.u32 %v4351, 31
        %v4354 = vsub.s32 32, %v4353
        %v4355 = vshrl.u32 683565275, %v4354
        %v4356 = vshll.u32 683565275, %v4353
        %v4357 = vshrl.u32 2475754826, %v4354
        %v4358 = vor.u32 %v4356, %v4357
        %v4359 = vshll.u32 2475754826, %v4353
        %v4360 = vshrl.u32 2131351028, %v4354
        %v4361 = vor.u32 %v4359, %v4360
        %v4362 = vshll.u32 2131351028, %v4353
        %v4363 = vshrl.u32 2102212464, %v4354
        %v4364 = vor.u32 %v4362, %v4363
        %v4365 = vshll.u32 2102212464, %v4353
        %v4366 = vshrl.u32 920167782, %v4354
        %v4367 = vor.u32 %v4365, %v4366
        %v4368 = vshll.u32 920167782, %v4353
        %v4369 = vshrl.u32 1326507024, %v4354
        %v4370 = vor.u32 %v4368, %v4369
        %vm4371 = vcmp.lt.s32.totalorder %v4352, 1
        %vm4372 = vcmp.lt.s32.totalorder %v4352, 2
        %vm4373 = vcmp.lt.s32.totalorder %v4352, 3
        %vm4374 = vcmp.lt.s32.totalorder %v4352, 4
        %v4375 = vsel %vm4371, %v4355, %v4358
        %v4376 = vsel %vm4374, %v4364, 2102212464
        %v4377 = vsel %vm4373, %v4361, %v4376
        %v4378 = vsel %vm4372, %v4375, %v4377
        %v4379 = vsel %vm4371, %v4358, %v4361
        %v4380 = vsel %vm4374, %v4367, 920167782
        %v4381 = vsel %vm4373, %v4364, %v4380
        %v4382 = vsel %vm4372, %v4379, %v4381
        %v4383 = vsel %vm4371, %v4361, %v4364
        %v4384 = vsel %vm4374, %v4370, 1326507024
        %v4385 = vsel %vm4373, %v4367, %v4384
        %v4386 = vsel %vm4372, %v4383, %v4385
        %v4387 = vshll.u32 %v4347, 8
        %v4388 = vmul.u32.u64.compose %v4387, %v4386
        %v4389 = vextract.low.u32 %v4388
        %v4390 = vextract.high.u32 %v4388
        %v4391 = vmul.u32.u64.compose %v4387, %v4382
        %v4392 = vextract.low.u32 %v4391
        %v4393 = vextract.high.u32 %v4391
        %v4394 = vmul.u32 %v4387, %v4378
        %v4395 = vadd.s32 %v4390, %v4392
        %vm4396 = vc.u32 %v4390, %v4392
        %v4397 = vadd.s32 %v4393, 1
        %v4398 = vsel %vm4396, %v4397, %v4393
        %v4399 = vadd.s32 %v4394, %v4398
        %v4400 = vadd.s32 %v4399, 536870912
        %v4401 = vshrl.u32 %v4400, 30
        %v4402 = vshll.u32 %v4401, 30
        %v4403 = vsub.s32 %v4399, %v4402
        %vm4404 = vcmp.lt.s32.totalorder %v4403, 0
        %v4405 = vsub.s32 0, %v4403
        %v4406 = vsel %vm4404, %v4405, %v4403
        %v4407 = vclz %v4406
        %v4408 = vsub.s32 %v4407, 2
        %vm4409 = vcmp.gt.s32.totalorder 0, %v4408
        %v4410 = vsel %vm4409, 0, %v4408
        %v4411 = vsub.s32 32, %v4410
        %v4412 = vshll.u32 %v4403, %v4410
        %v4413 = vshrl.u32 %v4395, %v4411
        %v4414 = vor.u32 %v4412, %v4413
        %v4415 = vsub.s32 4294967266, %v4410
        %v4416 = vadd.s32 %v4415, 127
        %v4417 = vshll.u32 %v4416, 23
        %v4418 = vor.u32 4788187, %v4417
        %v4419 = vand.u32 2147483647, %v4418
        %v4421 = vcvt.s32.f32 %v4414
        %v4422 = vmul.f32 %v4421, %v4419
        %v4423 = vxor.u32 %v4422, 2147483648
        %v4424 = vsel %vm4341, %v4423, %v4422
        %v4425 = vsub.s32 4, %v4401
        %v4426 = vsel %vm4341, %v4425, %v4401
        %v4427 = vsel %vm4340, %v1114, %v4424
        %v4428 = vsel %vm4340, 0, %v4426
        %v4429 = vcosq.f32.pop %v4427
        %v4430 = vsinq.f32.pop %v4427
        %vm4431 = vweird.f32 %v1114
        %v4432 = vadd.s32 %v4428, 3
        %v4433 = vand.u32 %v4432, 3
        %vm4434 = vcmp.lt.s32.totalorder %v4433, 2
        %vm4435 = vcmp.eq.s32.totalorder %v4433, 0
        %v4436 = vxor.u32 %v4430, 2147483648
        %v4437 = vsel %vm4435, %v4429, %v4436
        %vm4438 = vcmp.eq.s32.totalorder %v4433, 2
        %v4439 = vxor.u32 %v4429, 2147483648
        %v4440 = vsel %vm4438, %v4439, %v4430
        %v4441 = vsel %vm4434, %v4437, %v4440
        %v4442 = vsel %vm4431, nan, %v4441
        %4443 = vst [vmem:[%s391] sm:$0xff] %v1218
        %4444 = vst [vmem:[%s391 + $0x8] sm:$0xff] %v1322
        %4445 = vst [vmem:[%s391 + $0x10] sm:$0xff] %v1426
        %4446 = vst [vmem:[%s391 + $0x18] sm:$0xff] %v1530
        %4447 = vst [vmem:[%s391 + $0x20] sm:$0xff] %v1634
        %4448 = vst [vmem:[%s391 + $0x28] sm:$0xff] %v1738
        %4449 = vst [vmem:[%s391 + $0x30] sm:$0xff] %v1842
        %4450 = vst [vmem:[%s391 + $0x38] sm:$0xff] %v1946
        %4451 = vst [vmem:[%s391 + $0x40] sm:$0xff] %v2050
        %4452 = vst [vmem:[%s391 + $0x48] sm:$0xff] %v2154
        %4453 = vst [vmem:[%s391 + $0x50] sm:$0xff] %v2258
        %4454 = vst [vmem:[%s391 + $0x58] sm:$0xff] %v2362
        %4455 = vst [vmem:[%s391 + $0x60] sm:$0xff] %v2466
        %4456 = vst [vmem:[%s391 + $0x68] sm:$0xff] %v2570
        %4457 = vst [vmem:[%s391 + $0x70] sm:$0xff] %v2674
        %4458 = vst [vmem:[%s391 + $0x78] sm:$0xff] %v2778
        %4459 = vst [vmem:[%s391 + $0x80] sm:$0xff] %v2882
        %4460 = vst [vmem:[%s391 + $0x88] sm:$0xff] %v2986
        %4461 = vst [vmem:[%s391 + $0x90] sm:$0xff] %v3090
        %4462 = vst [vmem:[%s391 + $0x98] sm:$0xff] %v3194
        %4463 = vst [vmem:[%s391 + $0xa0] sm:$0xff] %v3298
        %4464 = vst [vmem:[%s391 + $0xa8] sm:$0xff] %v3402
        %4465 = vst [vmem:[%s391 + $0xb0] sm:$0xff] %v3506
        %4466 = vst [vmem:[%s391 + $0xb8] sm:$0xff] %v3610
        %4467 = vst [vmem:[%s391 + $0xc0] sm:$0xff] %v3714
        %4468 = vst [vmem:[%s391 + $0xc8] sm:$0xff] %v3818
        %4469 = vst [vmem:[%s391 + $0xd0] sm:$0xff] %v3922
        %4470 = vst [vmem:[%s391 + $0xd8] sm:$0xff] %v4026
        %4471 = vst [vmem:[%s391 + $0xe0] sm:$0xff] %v4130
        %4472 = vst [vmem:[%s391 + $0xe8] sm:$0xff] %v4234
        %4473 = vst [vmem:[%s391 + $0xf0] sm:$0xff] %v4338
        %4474 = vst [vmem:[%s391 + $0xf8] sm:$0xff] %v4442
        %s4475 = sand.u32 %s214, 1
        %s4476 = scalar_lea.sflag [#allocation4], %s4475
        %s4477 = sand.u32 %s214, 1
        %s4478 = smul.addr %s4477, 256
        %s4479 = scalar_lea.vmem [#allocation10], %s4478
        // Predicated region
        $region65: #{tpu_custom_call.1} parent=47 // pred_check
          %p4480 = pneg %p224
        $region66: #{tpu_custom_call.1} parent=47 // pred_check_branch
          %4482 = sbr.rel (%p4480) target = $region68
        $region67: #{tpu_custom_call.1} parent=47 // pred_region
          %s4483 = smul.u32 16, %s33
          %s4485 = ssub.s32 4096, 4096
          %4486 = vsyncadd %s4476, %s4485
          %s4487 = smul.addr %s4483, 2
          %s4488 = smul.addr %s32, 32
          %s4489 = sadd.s32 %s4487, %s4488
          %s4490 = smul.addr %s4489, 128
          %s4491 = scalar_lea.hbm %s7, %s4490
          %s4492 = sshll.u32 %s4479, 4
          %s4493 = int_to_ptr.vmem [resolvable:$true] %s4492
          %4498 = dma.vmem_to_hbm [thread:$0]  %s4493, 4096, %s4491, %s4476, 128, 128, 8
        $region68: #{tpu_custom_call.1} parent=47 // pred_fallthru
          _
      $region48: #{tpu_custom_call.1} parent=5 // pred_fallthru
        _
      %p4499 = scmp.le.s32.totalorder 2, %s23
      // Predicated region
      $region69: #{tpu_custom_call.1} parent=5 // pred_check
        %p4500 = pneg %p4499
      $region70: #{tpu_custom_call.1} parent=5 // pred_check_branch
        %4502 = sbr.rel (%p4500) target = $region72
      $region71: #{tpu_custom_call.1} parent=5 // pred_region
        %s4503 = ssub.s32 %s23, 2
        // Predicated region
        $region73: #{tpu_custom_call.1} parent=71 // pred_check
          %p4504 = pneg %p230
        $region74: #{tpu_custom_call.1} parent=71 // pred_check_branch
          %4506 = sbr.rel (%p4504) target = $region76
        $region75: #{tpu_custom_call.1} parent=71 // pred_region
          %s4507 = sand.u32 %s215, 1
          %s4508 = scalar_lea.sflag [#allocation4], %s4507
          %s4509 = sand.u32 %s215, 1
          %s4510 = smul.addr %s4509, 256
          %s4511 = scalar_lea.vmem [#allocation10], %s4510
          %4512 = dma.done %s4508, 4096
        $region76: #{tpu_custom_call.1} parent=71 // pred_fallthru
          _
      $region72: #{tpu_custom_call.1} parent=5 // pred_fallthru
        _
    $region6: #{tpu_custom_call.1} parent=1 // loop_footer
      %s27 = sadd.s32 1, %s23
    $region7: #{tpu_custom_call.1} parent=1 // loop_footer_branch
      %22 = sbr.rel target = $region3
    $region8: #{tpu_custom_call.1} parent=1 // loop_exit
      _
    %4513 = vsyncpa [#allocation3], 1
    %s4514 = scalar_lea.sflag [#allocation3], 1
    %4515 = vsyncpa %s4514, 1
    %4516 = vsyncpa [#allocation6], 1
    %s4517 = scalar_lea.sflag [#allocation6], 1
    %4518 = vsyncpa %s4517, 1
    %4519 = vsyncpa [#allocation9], 1
    %4520 = vsyncpa [#allocation4], 1
    %s4521 = scalar_lea.sflag [#allocation4], 1
    %4522 = vsyncpa %s4521, 1

</llo_original>
